<compile_context>
chip_gen: v7x
topology: tpu7x:2x2x1
jax: 0.10.0
libtpu: 0.0.40
codegen_flags: <defaults>
</compile_context>

<pallas_src>
import functools
import math

import jax
import jax.numpy as jnp
import numpy as np
from jax import lax
from jax.experimental import pallas as pl
from jax.experimental.pallas import tpu as pltpu


def _pick_tile(total, target, align):
    """Largest divisor of `total` that is <= target and a multiple of `align`,
    else `total` (a full-extent block is always legal)."""
    cands = [t for t in range(align, min(target, total) + 1, align)
             if total % t == 0]
    return max(cands) if cands else total


def _vmem_limit_bytes():
    cap = 128 * 1024 * 1024
    try:
        cap = int(getattr(pltpu.get_tpu_info(), "vmem_capacity_bytes", cap))
    except Exception:
        pass
    # ~half of physical VMEM: 64 MiB on v5e/v6e (128 MiB), 32 MiB on v7x (64).
    return max(32 * 1024 * 1024, min(96 * 1024 * 1024, cap // 2))


def _cparams(semantics):
    return pltpu.CompilerParams(dimension_semantics=semantics,
                                vmem_limit_bytes=_vmem_limit_bytes())


# ---------------------------------------------------------------------------
# 1) Cross-token norm statistics: fully-parallel per-row-tile partial
#    (sum, sumsq) outputs; the D-length finalize is plain jnp (exact math).
# ---------------------------------------------------------------------------
def _norm_partial_kernel(x_ref, stats_ref):
    x = x_ref[...]                                           # (TILE_N, D) f32
    s = jnp.sum(x, axis=0, keepdims=True)                    # (1, D)
    q = jnp.sum(x * x, axis=0, keepdims=True)                # (1, D)
    row = lax.broadcasted_iota(jnp.int32, stats_ref.shape[1:], 0)   # (8, D)
    stats_ref[...] = jnp.where(row == 0, s, jnp.where(row == 1, q, 0.0))[None]


def _norm_partial_stats(x_flat, *, block_n):
    n, d = x_flat.shape
    n_tiles = n // block_n
    return pl.pallas_call(
        _norm_partial_kernel,
        out_shape=jax.ShapeDtypeStruct((n_tiles, 8, d), jnp.float32),
        grid_spec=pltpu.PrefetchScalarGridSpec(
            num_scalar_prefetch=0,
            grid=(n_tiles,),
            in_specs=[pl.BlockSpec((block_n, d), lambda i: (i, 0))],
            out_specs=pl.BlockSpec((1, 8, d), lambda i: (i, 0, 0))),
        compiler_params=_cparams(("parallel",)),
    )(x_flat)


def _finalize_norm(stats, n_total, alpha, bias, eps=1e-6):
    """stats: (T, 8, D); row 0 = partial sum, row 1 = partial sum of squares.
    Returns (scale, shift) with norm(x) == x * scale + shift."""
    ssum = jnp.sum(stats[:, 0, :], axis=0, keepdims=True)
    ssq = jnp.sum(stats[:, 1, :], axis=0, keepdims=True)
    mean = ssum / n_total
    var = jnp.maximum(ssq - n_total * mean * mean, 0.0) / (n_total - 1)
    std = jnp.sqrt(var)                       # unbiased, matches torch.std
    scale = alpha / (std + eps)               # exact divide (multiplies every activation)
    shift = bias - mean * scale
    return scale, shift


# ---------------------------------------------------------------------------
# 2) Norm-1 apply + fused QKV projection (one wide bf16 matmul), row-tiled.
#    The 1/sqrt(D) attention scale is pre-folded into the Q weights/bias.
# ---------------------------------------------------------------------------
def _qkv_kernel(x_ref, scale_ref, shift_ref, wqkv_ref, bqkv_ref,
                q_ref, k_ref, v_ref, *, d_model):
    xn = x_ref[...] * scale_ref[...] + shift_ref[...]            # f32
    qkv = jnp.dot(xn.astype(jnp.bfloat16), wqkv_ref[...],
                  preferred_element_type=jnp.float32) + bqkv_ref[...]
    q_ref[...] = qkv[:, :d_model].astype(jnp.bfloat16)
    k_ref[...] = qkv[:, d_model:2 * d_model].astype(jnp.bfloat16)
    v_ref[...] = qkv[:, 2 * d_model:].astype(jnp.bfloat16)


def _qkv_proj(x_flat, scale, shift, wqkv, bqkv, *, block_n):
    n, d = x_flat.shape
    kern = functools.partial(_qkv_kernel, d_model=d)
    row = pl.BlockSpec((block_n, d), lambda i: (i, 0))
    const = lambda i: (0, 0)
    return pl.pallas_call(
        kern,
        out_shape=(jax.ShapeDtypeStruct((n, d), jnp.bfloat16),
                   jax.ShapeDtypeStruct((n, d), jnp.bfloat16),
                   jax.ShapeDtypeStruct((n, d), jnp.bfloat16)),
        grid_spec=pltpu.PrefetchScalarGridSpec(
            num_scalar_prefetch=0,
            grid=(n // block_n,),
            in_specs=[row,
                      pl.BlockSpec((1, d), const),
                      pl.BlockSpec((1, d), const),
                      pl.BlockSpec((d, 3 * d), const),
                      pl.BlockSpec((1, 3 * d), const)],
            out_specs=[row, row, row]),
        compiler_params=_cparams(("parallel",)),
    )(x_flat, scale, shift, wqkv, bqkv)


# ---------------------------------------------------------------------------
# 3) Flash-style attention (online softmax over KV tiles), K/V resident per
#    batch, fused with output projection, first residual add, and the
#    norm-2 partial statistics of x2.
# ---------------------------------------------------------------------------
def _attn_kernel(q_ref, k_ref, v_ref, x_ref, wo_ref, bo_ref,
                 x2_ref, stats_ref, m_ref, l_ref, acc_ref,
                 *, block_k, kv_resident):
    kv = pl.program_id(2)

    @pl.when(kv == 0)
    def _():
        m_ref[...] = jnp.full_like(m_ref, -jnp.inf)
        l_ref[...] = jnp.zeros_like(l_ref)
        acc_ref[...] = jnp.zeros_like(acc_ref)

    if kv_resident:
        start = pl.multiple_of(kv * block_k, block_k)
        k_tile = k_ref[pl.ds(start, block_k), :]
        v_tile = v_ref[pl.ds(start, block_k), :]
    else:
        k_tile = k_ref[...]
        v_tile = v_ref[...]

    # Scores (Q already carries the 1/sqrt(D) scale).
    s = lax.dot_general(q_ref[...], k_tile, (((1,), (1,)), ((), ())),
                        preferred_element_type=jnp.float32)
    m_prev = m_ref[...]
    m_new = jnp.maximum(m_prev, jnp.max(s, axis=-1, keepdims=True))
    corr = jnp.exp(m_prev - m_new)
    p = jnp.exp(s - m_new)
    l_ref[...] = corr * l_ref[...] + jnp.sum(p, axis=-1, keepdims=True)
    acc_ref[...] = corr * acc_ref[...] + jnp.dot(
        p.astype(jnp.bfloat16), v_tile, preferred_element_type=jnp.float32)
    m_ref[...] = m_new

    @pl.when(kv == pl.num_programs(2) - 1)
    def _():
        o = acc_ref[...] * pl.reciprocal(l_ref[...], approx=True)
        proj = jnp.dot(o.astype(jnp.bfloat16), wo_ref[...],
                       preferred_element_type=jnp.float32) + bo_ref[...]
        x2 = x_ref[...] + proj
        x2_ref[...] = x2
        # Norm-2 partial statistics of this x2 row tile (saves a full extra
        # HBM read of x2 for the second norm).
        ssum = jnp.sum(x2, axis=0, keepdims=True)
        ssq = jnp.sum(x2 * x2, axis=0, keepdims=True)
        row = lax.broadcasted_iota(jnp.int32, stats_ref.shape[1:], 0)
        stats_ref[...] = jnp.where(row == 0, ssum,
                                   jnp.where(row == 1, ssq, 0.0))[None]


def _attn_residual(q, k, v, x_flat, wo, bo, *, batch, seq, block_q, block_k,
                   kv_resident_budget=24 * 1024 * 1024):
    n, d = x_flat.shape
    q_tiles = seq // block_q
    k_tiles = seq // block_k

    # Hold the whole K/V for one batch resident in VMEM when it fits
    # (double-buffered bf16 K and V): removes the q_tiles-fold HBM re-read.
    kv_bytes = 2 * 2 * 2 * seq * d                 # 2 arrays x 2 bufs x bf16
    kv_resident = (seq % 16 == 0) and (kv_bytes <= kv_resident_budget)

    kern = functools.partial(_attn_kernel, block_k=block_k,
                             kv_resident=kv_resident)
    q_row = pl.BlockSpec((block_q, d), lambda b, qi, ki: (b * q_tiles + qi, 0))
    if kv_resident:
        kv_spec = pl.BlockSpec((seq, d), lambda b, qi, ki: (b, 0))
    else:
        kv_spec = pl.BlockSpec((block_k, d),
                               lambda b, qi, ki: (b * k_tiles + ki, 0))
    const2 = lambda b, qi, ki: (0, 0)
    return pl.pallas_call(
        kern,
        out_shape=(jax.ShapeDtypeStruct((n, d), jnp.float32),
                   jax.ShapeDtypeStruct((batch * q_tiles, 8, d), jnp.float32)),
        grid_spec=pltpu.PrefetchScalarGridSpec(
            num_scalar_prefetch=0,
            grid=(batch, q_tiles, k_tiles),
            in_specs=[q_row, kv_spec, kv_spec, q_row,
                      pl.BlockSpec((d, d), const2),
                      pl.BlockSpec((1, d), const2)],
            out_specs=[q_row,
                       pl.BlockSpec((1, 8, d),
                                    lambda b, qi, ki: (b * q_tiles + qi, 0, 0))],
            scratch_shapes=[pltpu.VMEM((block_q, 1), jnp.float32),
                            pltpu.VMEM((block_q, 1), jnp.float32),
                            pltpu.VMEM((block_q, d), jnp.float32)]),
        compiler_params=_cparams(("parallel", "parallel", "arbitrary")),
    )(q, k, v, x_flat, wo, bo)


# ---------------------------------------------------------------------------
# 4) Norm-2 apply + FeedForward (Linear -> ReLU -> Linear) + second residual.
#    Preferred path: w1/w2 VMEM-resident (constant index_maps), looping over
#    d_ff chunks inside the kernel so weights stream from HBM exactly once.
# ---------------------------------------------------------------------------
def _ffn_resident_kernel(x2_ref, scale_ref, shift_ref, w1_ref, b1_ref,
                         w2_ref, b2_ref, out_ref, *, block_f):
    x2 = x2_ref[...]
    xn = (x2 * scale_ref[...] + shift_ref[...]).astype(jnp.bfloat16)  # once per row tile
    acc = x2 + b2_ref[...]                       # residual + final bias
    f = w1_ref.shape[1]
    for c in range(f // block_f):                # static unrolled d_ff chunks
        lo, hi = c * block_f, (c + 1) * block_f
        h = jnp.dot(xn, w1_ref[:, lo:hi],
                    preferred_element_type=jnp.float32) + b1_ref[:, lo:hi]
        h = jnp.maximum(h, 0.0)
        acc = acc + jnp.dot(h.astype(jnp.bfloat16), w2_ref[lo:hi, :],
                            preferred_element_type=jnp.float32)
    out_ref[...] = acc


def _ffn_residual_resident(x2, scale, shift, w1, b1, w2, b2, *, block_n, block_f):
    n, d = x2.shape
    f = w1.shape[1]
    row = pl.BlockSpec((block_n, d), lambda i: (i, 0))
    full = lambda shape: pl.BlockSpec(shape, lambda i: (0,) * len(shape))
    kern = functools.partial(_ffn_resident_kernel, block_f=block_f)
    return pl.pallas_call(
        kern,
        out_shape=jax.ShapeDtypeStruct((n, d), jnp.float32),
        grid_spec=pltpu.PrefetchScalarGridSpec(
            num_scalar_prefetch=0,
            grid=(n // block_n,),
            in_specs=[row, full((1, d)), full((1, d)),
                      full((d, f)), full((1, f)),
                      full((f, d)), full((1, d))],
            out_specs=row),
        compiler_params=_cparams(("parallel",)),
    )(x2, scale, shift, w1, b1, w2, b2)


# Fallback for weights too large for VMEM residency: d_ff-tiled reduction
# grid with an f32 accumulator and a hoisted bf16 xn scratch.
def _ffn_tiled_kernel(x2_ref, scale_ref, shift_ref, w1_ref, b1_ref,
                      w2_ref, b2_ref, out_ref, acc_ref, xn_ref):
    fi = pl.program_id(1)

    @pl.when(fi == 0)
    def _():
        acc_ref[...] = x2_ref[...] + b2_ref[...]
        xn_ref[...] = (x2_ref[...] * scale_ref[...]
                       + shift_ref[...]).astype(jnp.bfloat16)

    h = jnp.dot(xn_ref[...], w1_ref[...],
                preferred_element_type=jnp.float32) + b1_ref[...]
    h = jnp.maximum(h, 0.0)
    acc_ref[...] += jnp.dot(h.astype(jnp.bfloat16), w2_ref[...],
                            preferred_element_type=jnp.float32)

    @pl.when(fi == pl.num_programs(1) - 1)
    def _():
        out_ref[...] = acc_ref[...]


def _ffn_residual_tiled(x2, scale, shift, w1, b1, w2, b2, *, block_n, block_f):
    n, d = x2.shape
    f = w1.shape[1]
    row = pl.BlockSpec((block_n, d), lambda i, fi: (i, 0))
    return pl.pallas_call(
        _ffn_tiled_kernel,
        out_shape=jax.ShapeDtypeStruct((n, d), jnp.float32),
        grid_spec=pltpu.PrefetchScalarGridSpec(
            num_scalar_prefetch=0,
            grid=(n // block_n, f // block_f),
            in_specs=[row,
                      pl.BlockSpec((1, d), lambda i, fi: (0, 0)),
                      pl.BlockSpec((1, d), lambda i, fi: (0, 0)),
                      pl.BlockSpec((d, block_f), lambda i, fi: (0, fi)),
                      pl.BlockSpec((1, block_f), lambda i, fi: (0, fi)),
                      pl.BlockSpec((block_f, d), lambda i, fi: (fi, 0)),
                      pl.BlockSpec((1, d), lambda i, fi: (0, 0))],
            out_specs=row,
            scratch_shapes=[pltpu.VMEM((block_n, d), jnp.float32),
                            pltpu.VMEM((block_n, d), jnp.bfloat16)]),
        compiler_params=_cparams(("parallel", "arbitrary")),
    )(x2, scale, shift, w1, b1, w2, b2)


def _ffn_residual(x2, scale, shift, w1, b1, w2, b2, *, block_n, block_f):
    d, f = w1.shape
    resident_bytes = 8 * d * f          # w1 + w2, bf16, double-buffered
    if resident_bytes <= _vmem_limit_bytes() // 2:
        return _ffn_residual_resident(x2, scale, shift, w1, b1, w2, b2,
                                      block_n=block_n, block_f=block_f)
    return _ffn_residual_tiled(x2, scale, shift, w1, b1, w2, b2,
                               block_n=block_n, block_f=block_f)


# ---------------------------------------------------------------------------
# Weight packing (runs ONCE, outside the per-call jit).
# ---------------------------------------------------------------------------
def pack_params(params):
    d = params["wq"].shape[0]
    inv_sqrt_d = jnp.float32(1.0 / math.sqrt(d))
    wqkv = jnp.concatenate([params["wq"] * inv_sqrt_d, params["wk"],
                            params["wv"]], axis=1).astype(jnp.bfloat16)
    bqkv = jnp.concatenate([params["bq"] * inv_sqrt_d, params["bk"],
                            params["bv"]], axis=1).astype(jnp.float32)
    return {
        "wqkv": wqkv, "bqkv": bqkv,
        "wo": params["wo"].astype(jnp.bfloat16), "bo": params["bo"],
        "w1": params["w1"].astype(jnp.bfloat16), "b1": params["b1"],
        "w2": params["w2"].astype(jnp.bfloat16), "b2": params["b2"],
        "n1_alpha": params["n1_alpha"], "n1_bias": params["n1_bias"],
        "n2_alpha": params["n2_alpha"], "n2_bias": params["n2_bias"],
    }


# ---------------------------------------------------------------------------
# Full EncoderLayer forward.
# ---------------------------------------------------------------------------
@functools.partial(jax.jit,
                   static_argnames=("block_n", "block_q", "block_k", "block_f"))
def encoder_layer(x, p, *, block_n=512, block_q=256, block_k=512, block_f=512):
    """x: (B, S, D) float32, p: pack_params(...) output  ->  (B, S, D) f32."""
    B, S, D = x.shape
    N = B * S
    F = p["w1"].shape[1]

    # 16-row alignment so bf16 outputs (q/k/v) never get sub-minimum tiles.
    bn = _pick_tile(N, block_n, 16)
    bq = _pick_tile(S, block_q, 16)
    bk = _pick_tile(S, block_k, 16)
    bf = _pick_tile(F, block_f, 128)

    x_flat = x.reshape(N, D)                 # lane-dense slab

    # Norm-1: parallel partial stats + tiny exact finalize.
    stats1 = _norm_partial_stats(x_flat, block_n=bn)
    scale1, shift1 = _finalize_norm(stats1, N, p["n1_alpha"], p["n1_bias"])

    q, k, v = _qkv_proj(x_flat, scale1, shift1, p["wqkv"], p["bqkv"],
                        block_n=bn)

    # Attention + Wo + residual; emits norm-2 partial stats as a by-product.
    x2, stats2 = _attn_residual(q, k, v, x_flat, p["wo"], p["bo"],
                                batch=B, seq=S, block_q=bq, block_k=bk)
    scale2, shift2 = _finalize_norm(stats2, N, p["n2_alpha"], p["n2_bias"])

    out = _ffn_residual(x2, scale2, shift2, p["w1"], p["b1"], p["w2"], p["b2"],
                        block_n=bn, block_f=bf)
    return out.reshape(B, S, D)


# ---------------------------------------------------------------------------
# Test harness.
# ---------------------------------------------------------------------------
def make_params(key, d_model, d_ff):
    ks = jax.random.split(key, 14)
    s = 0.02
    return {
        "n1_alpha": 1.0 + 0.1 * jax.random.normal(ks[12], (1, d_model), jnp.float32),
        "n1_bias": 0.1 * jax.random.normal(ks[13], (1, d_model), jnp.float32),
        "n2_alpha": jnp.ones((1, d_model), jnp.float32),
        "n2_bias": jnp.zeros((1, d_model), jnp.float32),
        "wq": s * jax.random.normal(ks[0], (d_model, d_model), jnp.float32),
        "wk": s * jax.random.normal(ks[1], (d_model, d_model), jnp.float32),
        "wv": s * jax.random.normal(ks[2], (d_model, d_model), jnp.float32),
        "wo": s * jax.random.normal(ks[3], (d_model, d_model), jnp.float32),
        "bq": s * jax.random.normal(ks[4], (1, d_model), jnp.float32),
        "bk": s * jax.random.normal(ks[5], (1, d_model), jnp.float32),
        "bv": s * jax.random.normal(ks[6], (1, d_model), jnp.float32),
        "bo": s * jax.random.normal(ks[7], (1, d_model), jnp.float32),
        "w1": s * jax.random.normal(ks[8], (d_model, d_ff), jnp.float32),
        "b1": s * jax.random.normal(ks[9], (1, d_ff), jnp.float32),
        "w2": s * jax.random.normal(ks[10], (d_ff, d_model), jnp.float32),
        "b2": s * jax.random.normal(ks[11], (1, d_model), jnp.float32),
    }


def reference_encoder_layer(x, p):
    """Pure-JAX f32 reference mirroring the PyTorch forward (eval mode)."""
    B, S, D = x.shape
    N = B * S
    eps = 1e-6

    def norm(z, a, b):
        zf = z.reshape(N, D)
        mean = zf.mean(axis=0, keepdims=True)
        std = jnp.sqrt(((zf - mean) ** 2).sum(axis=0, keepdims=True) / (N - 1))
        return (a * (zf - mean) / (std + eps) + b).reshape(B, S, D)

    xn1 = norm(x, p["n1_alpha"], p["n1_bias"])
    q = xn1 @ p["wq"] + p["bq"]
    k = xn1 @ p["wk"] + p["bk"]
    v = xn1 @ p["wv"] + p["bv"]
    sc = jnp.einsum("bqd,bkd->bqk", q, k) / math.sqrt(D)
    a = jax.nn.softmax(sc, axis=-1)
    ao = jnp.einsum("bqk,bkd->bqd", a, v) @ p["wo"] + p["bo"]
    x2 = x + ao
    xn2 = norm(x2, p["n2_alpha"], p["n2_bias"])
    h = jnp.maximum(xn2 @ p["w1"] + p["b1"], 0.0)
    ff = h @ p["w2"] + p["b2"]
    return x2 + ff


if __name__ == "__main__":
    B, S, D, F = 2, 64, 128, 256
    key = jax.random.PRNGKey(0)
    kx, kp = jax.random.split(key)
    x = jax.random.normal(kx, (B, S, D), dtype=jnp.float32)
    params = make_params(kp, D, F)
    packed = pack_params(params)      # one-time weight prep (outside jit)

    # Small tiles so the row-tile / Q-tile / KV-tile / d_ff-chunk paths all
    # take multiple steps and the online-softmax + partial-stats paths are
    # genuinely exercised.
    out = jax.block_until_ready(
        encoder_layer(x, packed, block_n=32, block_q=16, block_k=32,
                      block_f=128))
    ref = jax.block_until_ready(reference_encoder_layer(x, params))
    assert out.shape == (B, S, D)
    # bf16 MXU matmuls + EUP approximate reciprocal (softmax only) vs a
    # pure-f32 reference.
    np.testing.assert_allclose(np.asarray(out), np.asarray(ref),
                               rtol=2e-2, atol=2e-2)
    print("KERNEL_OK")
</pallas_src>

<mosaic_0001>
module attributes {stable_mosaic.version = 11 : i64} {
  func.func @_norm_partial_kernel(%arg0: i32, %arg1: memref<32x128xf32, #tpu.memory_space<vmem>>, %arg2: memref<1x8x128xf32, #tpu.memory_space<vmem>>) attributes {dimension_semantics = [#tpu.dimension_semantics<parallel>], iteration_bounds = array<i64: 4>, scalar_prefetch = 0 : i64, scratch_operands = 0 : i64, tpu.core_type = #tpu.core_type<tc>, window_params = [{transform_indices = @transform_0, window_bounds = array<i64: 32, 128>}, {transform_indices = @transform_1, window_bounds = array<i64: 1, 8, 128>}]} {
    %c0 = arith.constant 0 : index
    %c0_0 = arith.constant 0 : index
    %0 = vector.load %arg1[%c0, %c0_0] : memref<32x128xf32, #tpu.memory_space<vmem>>, vector<32x128xf32>
    %cst = arith.constant dense<0.000000e+00> : vector<128xf32>
    %1 = vector.multi_reduction <add>, %0, %cst [0] : vector<32x128xf32> to vector<128xf32>
    %2 = vector.shape_cast %1 : vector<128xf32> to vector<1x128xf32>
    %3 = arith.mulf %0, %0 : vector<32x128xf32>
    %cst_1 = arith.constant dense<0.000000e+00> : vector<128xf32>
    %4 = vector.multi_reduction <add>, %3, %cst_1 [0] : vector<32x128xf32> to vector<128xf32>
    %5 = vector.shape_cast %4 : vector<128xf32> to vector<1x128xf32>
    %6 = tpu.iota {dimensions = array<i32: 0>} : vector<8x128xi32>
    %c0_i32 = arith.constant 0 : i32
    %7 = vector.broadcast %c0_i32 : i32 to vector<8x128xi32>
    %8 = arith.cmpi eq, %6, %7 : vector<8x128xi32>
    %c1_i32 = arith.constant 1 : i32
    %9 = vector.broadcast %c1_i32 : i32 to vector<8x128xi32>
    %10 = arith.cmpi eq, %6, %9 : vector<8x128xi32>
    %cst_2 = arith.constant 0.000000e+00 : f32
    %11 = vector.shape_cast %5 : vector<1x128xf32> to vector<1x128xf32>
    %12 = vector.broadcast %11 : vector<1x128xf32> to vector<8x128xf32>
    %13 = vector.broadcast %cst_2 : f32 to vector<8x128xf32>
    %14 = arith.select %10, %12, %13 : vector<8x128xi1>, vector<8x128xf32>
    %15 = vector.shape_cast %2 : vector<1x128xf32> to vector<1x128xf32>
    %16 = vector.broadcast %15 : vector<1x128xf32> to vector<8x128xf32>
    %17 = arith.select %8, %16, %14 : vector<8x128xi1>, vector<8x128xf32>
    %18 = vector.shape_cast %17 : vector<8x128xf32> to vector<1x8x128xf32>
    %c0_3 = arith.constant 0 : index
    %c0_4 = arith.constant 0 : index
    %c0_5 = arith.constant 0 : index
    %19 = vector.load %arg2[%c0_3, %c0_4, %c0_5] : memref<1x8x128xf32, #tpu.memory_space<vmem>>, vector<1x8x128xf32>
    tpu.vector_store %arg2[%c0_3, %c0_4, %c0_5], %18 {strides = array<i32>} : memref<1x8x128xf32, #tpu.memory_space<vmem>>, vector<1x8x128xf32>,
    return
  }
  func.func @transform_0(%arg0: i32) -> (i32, i32) {
    %c0_i32 = arith.constant 0 : i32
    %c0_i32_0 = arith.constant 0 : i32
    return %arg0, %c0_i32 : i32, i32
  }
  func.func @transform_1(%arg0: i32) -> (i32, i32, i32) {
    %c0_i32 = arith.constant 0 : i32
    %c0_i32_0 = arith.constant 0 : i32
    %c0_i32_1 = arith.constant 0 : i32
    return %arg0, %c0_i32, %c0_i32_0 : i32, i32, i32
  }
}

module attributes {stable_mosaic.version = 11 : i64} {
  func.func @_qkv_kernel(%arg0: i32, %arg1: memref<32x128xf32, #tpu.memory_space<vmem>>, %arg2: memref<1x128xf32, #tpu.memory_space<vmem>>, %arg3: memref<1x128xf32, #tpu.memory_space<vmem>>, %arg4: memref<128x384xbf16, #tpu.memory_space<vmem>>, %arg5: memref<1x384xf32, #tpu.memory_space<vmem>>, %arg6: memref<32x128xbf16, #tpu.memory_space<vmem>>, %arg7: memref<32x128xbf16, #tpu.memory_space<vmem>>, %arg8: memref<32x128xbf16, #tpu.memory_space<vmem>>) attributes {dimension_semantics = [#tpu.dimension_semantics<parallel>], iteration_bounds = array<i64: 4>, scalar_prefetch = 0 : i64, scratch_operands = 0 : i64, tpu.core_type = #tpu.core_type<tc>, window_params = [{transform_indices = @transform_0, window_bounds = array<i64: 32, 128>}, {pipeline_mode = #tpu.pipeline_mode<synchronous>, transform_indices = @transform_1, window_bounds = array<i64: 1, 128>}, {pipeline_mode = #tpu.pipeline_mode<synchronous>, transform_indices = @transform_2, window_bounds = array<i64: 1, 128>}, {pipeline_mode = #tpu.pipeline_mode<synchronous>, transform_indices = @transform_3, window_bounds = array<i64: 128, 384>}, {pipeline_mode = #tpu.pipeline_mode<synchronous>, transform_indices = @transform_4, window_bounds = array<i64: 1, 384>}, {transform_indices = @transform_5, window_bounds = array<i64: 32, 128>}, {transform_indices = @transform_6, window_bounds = array<i64: 32, 128>}, {transform_indices = @transform_7, window_bounds = array<i64: 32, 128>}]} {
    %c0 = arith.constant 0 : index
    %c0_0 = arith.constant 0 : index
    %0 = vector.load %arg1[%c0, %c0_0] : memref<32x128xf32, #tpu.memory_space<vmem>>, vector<32x128xf32>
    %c0_1 = arith.constant 0 : index
    %c0_2 = arith.constant 0 : index
    %1 = vector.load %arg2[%c0_1, %c0_2] : memref<1x128xf32, #tpu.memory_space<vmem>>, vector<1x128xf32>
    %2 = vector.broadcast %1 : vector<1x128xf32> to vector<32x128xf32>
    %3 = arith.mulf %0, %2 : vector<32x128xf32>
    %c0_3 = arith.constant 0 : index
    %c0_4 = arith.constant 0 : index
    %4 = vector.load %arg3[%c0_3, %c0_4] : memref<1x128xf32, #tpu.memory_space<vmem>>, vector<1x128xf32>
    %5 = vector.broadcast %4 : vector<1x128xf32> to vector<32x128xf32>
    %6 = arith.addf %3, %5 : vector<32x128xf32>
    %7 = arith.truncf %6 : vector<32x128xf32> to vector<32x128xbf16>
    %c0_5 = arith.constant 0 : index
    %c0_6 = arith.constant 0 : index
    %8 = vector.load %arg4[%c0_5, %c0_6] : memref<128x384xbf16, #tpu.memory_space<vmem>>, vector<128x384xbf16>
    %cst = arith.constant dense<0.000000e+00> : vector<32x384xf32>
    %9 = tpu.matmul %7, %8, %cst {dimension_numbers = #tpu.dot_dimension_numbers<[1], [0], [0], [1], [0, 0, 1, 1], [], []>} : vector<32x128xbf16>, vector<128x384xbf16>, vector<32x384xf32> -> vector<32x384xf32>
    %c0_7 = arith.constant 0 : index
    %c0_8 = arith.constant 0 : index
    %10 = vector.load %arg5[%c0_7, %c0_8] : memref<1x384xf32, #tpu.memory_space<vmem>>, vector<1x384xf32>
    %11 = vector.broadcast %10 : vector<1x384xf32> to vector<32x384xf32>
    %12 = arith.addf %9, %11 : vector<32x384xf32>
    %13 = vector.extract_strided_slice %12 {offsets = [0, 0], sizes = [32, 128], strides = [1, 1]} : vector<32x384xf32> to vector<32x128xf32>
    %14 = arith.truncf %13 : vector<32x128xf32> to vector<32x128xbf16>
    %c0_9 = arith.constant 0 : index
    %c0_10 = arith.constant 0 : index
    %15 = vector.load %arg6[%c0_9, %c0_10] : memref<32x128xbf16, #tpu.memory_space<vmem>>, vector<32x128xbf16>
    tpu.vector_store %arg6[%c0_9, %c0_10], %14 {strides = array<i32>} : memref<32x128xbf16, #tpu.memory_space<vmem>>, vector<32x128xbf16>,
    %16 = vector.extract_strided_slice %12 {offsets = [0, 128], sizes = [32, 128], strides = [1, 1]} : vector<32x384xf32> to vector<32x128xf32>
    %17 = arith.truncf %16 : vector<32x128xf32> to vector<32x128xbf16>
    %c0_11 = arith.constant 0 : index
    %c0_12 = arith.constant 0 : index
    %18 = vector.load %arg7[%c0_11, %c0_12] : memref<32x128xbf16, #tpu.memory_space<vmem>>, vector<32x128xbf16>
    tpu.vector_store %arg7[%c0_11, %c0_12], %17 {strides = array<i32>} : memref<32x128xbf16, #tpu.memory_space<vmem>>, vector<32x128xbf16>,
    %19 = vector.extract_strided_slice %12 {offsets = [0, 256], sizes = [32, 128], strides = [1, 1]} : vector<32x384xf32> to vector<32x128xf32>
    %20 = arith.truncf %19 : vector<32x128xf32> to vector<32x128xbf16>
    %c0_13 = arith.constant 0 : index
    %c0_14 = arith.constant 0 : index
    %21 = vector.load %arg8[%c0_13, %c0_14] : memref<32x128xbf16, #tpu.memory_space<vmem>>, vector<32x128xbf16>
    tpu.vector_store %arg8[%c0_13, %c0_14], %20 {strides = array<i32>} : memref<32x128xbf16, #tpu.memory_space<vmem>>, vector<32x128xbf16>,
    return
  }
  func.func @transform_0(%arg0: i32) -> (i32, i32) {
    %c0_i32 = arith.constant 0 : i32
    %c0_i32_0 = arith.constant 0 : i32
    return %arg0, %c0_i32 : i32, i32
  }
  func.func @transform_1(%arg0: i32) -> (i32, i32) {
    %c0_i32 = arith.constant 0 : i32
    %c0_i32_0 = arith.constant 0 : i32
    %c0_i32_1 = arith.constant 0 : i32
    return %c0_i32, %c0_i32_0 : i32, i32
  }
  func.func @transform_2(%arg0: i32) -> (i32, i32) {
    %c0_i32 = arith.constant 0 : i32
    %c0_i32_0 = arith.constant 0 : i32
    %c0_i32_1 = arith.constant 0 : i32
    return %c0_i32, %c0_i32_0 : i32, i32
  }
  func.func @transform_3(%arg0: i32) -> (i32, i32) {
    %c0_i32 = arith.constant 0 : i32
    %c0_i32_0 = arith.constant 0 : i32
    %c0_i32_1 = arith.constant 0 : i32
    return %c0_i32, %c0_i32_0 : i32, i32
  }
  func.func @transform_4(%arg0: i32) -> (i32, i32) {
    %c0_i32 = arith.constant 0 : i32
    %c0_i32_0 = arith.constant 0 : i32
    %c0_i32_1 = arith.constant 0 : i32
    return %c0_i32, %c0_i32_0 : i32, i32
  }
  func.func @transform_5(%arg0: i32) -> (i32, i32) {
    %c0_i32 = arith.constant 0 : i32
    %c0_i32_0 = arith.constant 0 : i32
    return %arg0, %c0_i32 : i32, i32
  }
  func.func @transform_6(%arg0: i32) -> (i32, i32) {
    %c0_i32 = arith.constant 0 : i32
    %c0_i32_0 = arith.constant 0 : i32
    return %arg0, %c0_i32 : i32, i32
  }
  func.func @transform_7(%arg0: i32) -> (i32, i32) {
    %c0_i32 = arith.constant 0 : i32
    %c0_i32_0 = arith.constant 0 : i32
    return %arg0, %c0_i32 : i32, i32
  }
}

module attributes {stable_mosaic.version = 11 : i64} {
  func.func @_attn_kernel(%arg0: i32, %arg1: i32, %arg2: i32, %arg3: memref<16x128xbf16, #tpu.memory_space<vmem>>, %arg4: memref<64x128xbf16, #tpu.memory_space<vmem>>, %arg5: memref<64x128xbf16, #tpu.memory_space<vmem>>, %arg6: memref<16x128xf32, #tpu.memory_space<vmem>>, %arg7: memref<128x128xbf16, #tpu.memory_space<vmem>>, %arg8: memref<1x128xf32, #tpu.memory_space<vmem>>, %arg9: memref<16x128xf32, #tpu.memory_space<vmem>>, %arg10: memref<1x8x128xf32, #tpu.memory_space<vmem>>, %arg11: memref<16x1xf32, #tpu.memory_space<vmem>>, %arg12: memref<16x1xf32, #tpu.memory_space<vmem>>, %arg13: memref<16x128xf32, #tpu.memory_space<vmem>>) attributes {dimension_semantics = [#tpu.dimension_semantics<parallel>, #tpu.dimension_semantics<parallel>, #tpu.dimension_semantics<arbitrary>], iteration_bounds = array<i64: 2, 4, 2>, scalar_prefetch = 0 : i64, scratch_operands = 3 : i64, tpu.core_type = #tpu.core_type<tc>, window_params = [{transform_indices = @transform_0, window_bounds = array<i64: 16, 128>}, {transform_indices = @transform_1, window_bounds = array<i64: 64, 128>}, {transform_indices = @transform_2, window_bounds = array<i64: 64, 128>}, {transform_indices = @transform_3, window_bounds = array<i64: 16, 128>}, {pipeline_mode = #tpu.pipeline_mode<synchronous>, transform_indices = @transform_4, window_bounds = array<i64: 128, 128>}, {pipeline_mode = #tpu.pipeline_mode<synchronous>, transform_indices = @transform_5, window_bounds = array<i64: 1, 128>}, {transform_indices = @transform_6, window_bounds = array<i64: 16, 128>}, {transform_indices = @transform_7, window_bounds = array<i64: 1, 8, 128>}]} {
    %c0_i32 = arith.constant 0 : i32
    %0 = arith.cmpi eq, %arg2, %c0_i32 : i32
    %1 = arith.extui %0 : i1 to i32
    %c0_i32_0 = arith.constant 0 : i32
    %2 = arith.cmpi ne, %1, %c0_i32_0 : i32
    scf.if %2 {
      %cst_20 = arith.constant 0xFF800000 : f32
      %37 = vector.broadcast %cst_20 : f32 to vector<16x1xf32>
      %c0_21 = arith.constant 0 : index
      %c0_22 = arith.constant 0 : index
      %38 = vector.load %arg11[%c0_21, %c0_22] : memref<16x1xf32, #tpu.memory_space<vmem>>, vector<16x1xf32>
      tpu.vector_store %arg11[%c0_21, %c0_22], %37 {strides = array<i32>} : memref<16x1xf32, #tpu.memory_space<vmem>>, vector<16x1xf32>,
      %cst_23 = arith.constant 0.000000e+00 : f32
      %39 = vector.broadcast %cst_23 : f32 to vector<16x1xf32>
      %c0_24 = arith.constant 0 : index
      %c0_25 = arith.constant 0 : index
      %40 = vector.load %arg12[%c0_24, %c0_25] : memref<16x1xf32, #tpu.memory_space<vmem>>, vector<16x1xf32>
      tpu.vector_store %arg12[%c0_24, %c0_25], %39 {strides = array<i32>} : memref<16x1xf32, #tpu.memory_space<vmem>>, vector<16x1xf32>,
      %cst_26 = arith.constant 0.000000e+00 : f32
      %41 = vector.broadcast %cst_26 : f32 to vector<16x128xf32>
      %c0_27 = arith.constant 0 : index
      %c0_28 = arith.constant 0 : index
      %42 = vector.load %arg13[%c0_27, %c0_28] : memref<16x128xf32, #tpu.memory_space<vmem>>, vector<16x128xf32>
      tpu.vector_store %arg13[%c0_27, %c0_28], %41 {strides = array<i32>} : memref<16x128xf32, #tpu.memory_space<vmem>>, vector<16x128xf32>,
    } else {
    }
    %c32_i32 = arith.constant 32 : i32
    %3 = arith.muli %arg2, %c32_i32 : i32
    %4 = tpu.assume_multiple %3, 32 : i32
    %5 = arith.index_cast %4 : i32 to index
    %c0 = arith.constant 0 : index
    %6 = vector.load %arg4[%5, %c0] : memref<64x128xbf16, #tpu.memory_space<vmem>>, vector<32x128xbf16>
    %7 = arith.index_cast %4 : i32 to index
    %c0_1 = arith.constant 0 : index
    %8 = vector.load %arg5[%7, %c0_1] : memref<64x128xbf16, #tpu.memory_space<vmem>>, vector<32x128xbf16>
    %c0_2 = arith.constant 0 : index
    %c0_3 = arith.constant 0 : index
    %9 = vector.load %arg3[%c0_2, %c0_3] : memref<16x128xbf16, #tpu.memory_space<vmem>>, vector<16x128xbf16>
    %cst = arith.constant dense<0.000000e+00> : vector<16x32xf32>
    %10 = tpu.matmul %9, %6, %cst {dimension_numbers = #tpu.dot_dimension_numbers<[1], [1], [0], [0], [0, 0, 1, 0], [], []>} : vector<16x128xbf16>, vector<32x128xbf16>, vector<16x32xf32> -> vector<16x32xf32>
    %c0_4 = arith.constant 0 : index
    %c0_5 = arith.constant 0 : index
    %11 = vector.load %arg11[%c0_4, %c0_5] : memref<16x1xf32, #tpu.memory_space<vmem>>, vector<16x1xf32>
    %cst_6 = arith.constant dense<0xFF800000> : vector<16xf32>
    %12 = vector.multi_reduction <maximumf>, %10, %cst_6 [1] : vector<16x32xf32> to vector<16xf32>
    %13 = vector.shape_cast %12 : vector<16xf32> to vector<16x1xf32>
    %14 = arith.maximumf %11, %13 : vector<16x1xf32>
    %15 = arith.subf %11, %14 : vector<16x1xf32>
    %16 = math.exp %15 : vector<16x1xf32>
    %17 = vector.broadcast %14 : vector<16x1xf32> to vector<16x32xf32>
    %18 = arith.subf %10, %17 : vector<16x32xf32>
    %19 = math.exp %18 : vector<16x32xf32>
    %c0_7 = arith.constant 0 : index
    %c0_8 = arith.constant 0 : index
    %20 = vector.load %arg12[%c0_7, %c0_8] : memref<16x1xf32, #tpu.memory_space<vmem>>, vector<16x1xf32>
    %21 = arith.mulf %16, %20 : vector<16x1xf32>
    %cst_9 = arith.constant dense<0.000000e+00> : vector<16xf32>
    %22 = vector.multi_reduction <add>, %19, %cst_9 [1] : vector<16x32xf32> to vector<16xf32>
    %23 = vector.shape_cast %22 : vector<16xf32> to vector<16x1xf32>
    %24 = arith.addf %21, %23 : vector<16x1xf32>
    %c0_10 = arith.constant 0 : index
    %c0_11 = arith.constant 0 : index
    %25 = vector.load %arg12[%c0_10, %c0_11] : memref<16x1xf32, #tpu.memory_space<vmem>>, vector<16x1xf32>
    tpu.vector_store %arg12[%c0_10, %c0_11], %24 {strides = array<i32>} : memref<16x1xf32, #tpu.memory_space<vmem>>, vector<16x1xf32>,
    %c0_12 = arith.constant 0 : index
    %c0_13 = arith.constant 0 : index
    %26 = vector.load %arg13[%c0_12, %c0_13] : memref<16x128xf32, #tpu.memory_space<vmem>>, vector<16x128xf32>
    %27 = vector.broadcast %16 : vector<16x1xf32> to vector<16x128xf32>
    %28 = arith.mulf %27, %26 : vector<16x128xf32>
    %29 = arith.truncf %19 : vector<16x32xf32> to vector<16x32xbf16>
    %cst_14 = arith.constant dense<0.000000e+00> : vector<16x128xf32>
    %30 = tpu.matmul %29, %8, %cst_14 {dimension_numbers = #tpu.dot_dimension_numbers<[1], [0], [0], [1], [0, 0, 1, 1], [], []>} : vector<16x32xbf16>, vector<32x128xbf16>, vector<16x128xf32> -> vector<16x128xf32>
    %31 = arith.addf %28, %30 : vector<16x128xf32>
    %c0_15 = arith.constant 0 : index
    %c0_16 = arith.constant 0 : index
    %32 = vector.load %arg13[%c0_15, %c0_16] : memref<16x128xf32, #tpu.memory_space<vmem>>, vector<16x128xf32>
    tpu.vector_store %arg13[%c0_15, %c0_16], %31 {strides = array<i32>} : memref<16x128xf32, #tpu.memory_space<vmem>>, vector<16x128xf32>,
    %c0_17 = arith.constant 0 : index
    %c0_18 = arith.constant 0 : index
    %33 = vector.load %arg11[%c0_17, %c0_18] : memref<16x1xf32, #tpu.memory_space<vmem>>, vector<16x1xf32>
    tpu.vector_store %arg11[%c0_17, %c0_18], %14 {strides = array<i32>} : memref<16x1xf32, #tpu.memory_space<vmem>>, vector<16x1xf32>,
    %c1_i32 = arith.constant 1 : i32
    %34 = arith.cmpi eq, %arg2, %c1_i32 : i32
    %35 = arith.extui %34 : i1 to i32
    %c0_i32_19 = arith.constant 0 : i32
    %36 = arith.cmpi ne, %35, %c0_i32_19 : i32
    scf.if %36 {
      %c0_20 = arith.constant 0 : index
      %c0_21 = arith.constant 0 : index
      %37 = vector.load %arg13[%c0_20, %c0_21] : memref<16x128xf32, #tpu.memory_space<vmem>>, vector<16x128xf32>
      %c0_22 = arith.constant 0 : index
      %c0_23 = arith.constant 0 : index
      %38 = vector.load %arg12[%c0_22, %c0_23] : memref<16x1xf32, #tpu.memory_space<vmem>>, vector<16x1xf32>
      %39 = tpu.reciprocal %38 {approx = true} : vector<16x1xf32> -> vector<16x1xf32>
      %40 = vector.broadcast %39 : vector<16x1xf32> to vector<16x128xf32>
      %41 = arith.mulf %37, %40 : vector<16x128xf32>
      %42 = arith.truncf %41 : vector<16x128xf32> to vector<16x128xbf16>
      %c0_24 = arith.constant 0 : index
      %c0_25 = arith.constant 0 : index
      %43 = vector.load %arg7[%c0_24, %c0_25] : memref<128x128xbf16, #tpu.memory_space<vmem>>, vector<128x128xbf16>
      %cst_26 = arith.constant dense<0.000000e+00> : vector<16x128xf32>
      %44 = tpu.matmul %42, %43, %cst_26 {dimension_numbers = #tpu.dot_dimension_numbers<[1], [0], [0], [1], [0, 0, 1, 1], [], []>} : vector<16x128xbf16>, vector<128x128xbf16>, vector<16x128xf32> -> vector<16x128xf32>
      %c0_27 = arith.constant 0 : index
      %c0_28 = arith.constant 0 : index
      %45 = vector.load %arg8[%c0_27, %c0_28] : memref<1x128xf32, #tpu.memory_space<vmem>>, vector<1x128xf32>
      %46 = vector.broadcast %45 : vector<1x128xf32> to vector<16x128xf32>
      %47 = arith.addf %44, %46 : vector<16x128xf32>
      %c0_29 = arith.constant 0 : index
      %c0_30 = arith.constant 0 : index
      %48 = vector.load %arg6[%c0_29, %c0_30] : memref<16x128xf32, #tpu.memory_space<vmem>>, vector<16x128xf32>
      %49 = arith.addf %48, %47 : vector<16x128xf32>
      %c0_31 = arith.constant 0 : index
      %c0_32 = arith.constant 0 : index
      %50 = vector.load %arg9[%c0_31, %c0_32] : memref<16x128xf32, #tpu.memory_space<vmem>>, vector<16x128xf32>
      tpu.vector_store %arg9[%c0_31, %c0_32], %49 {strides = array<i32>} : memref<16x128xf32, #tpu.memory_space<vmem>>, vector<16x128xf32>,
      %cst_33 = arith.constant dense<0.000000e+00> : vector<128xf32>
      %51 = vector.multi_reduction <add>, %49, %cst_33 [0] : vector<16x128xf32> to vector<128xf32>
      %52 = vector.shape_cast %51 : vector<128xf32> to vector<1x128xf32>
      %53 = arith.mulf %49, %49 : vector<16x128xf32>
      %cst_34 = arith.constant dense<0.000000e+00> : vector<128xf32>
      %54 = vector.multi_reduction <add>, %53, %cst_34 [0] : vector<16x128xf32> to vector<128xf32>
      %55 = vector.shape_cast %54 : vector<128xf32> to vector<1x128xf32>
      %56 = tpu.iota {dimensions = array<i32: 0>} : vector<8x128xi32>
      %c0_i32_35 = arith.constant 0 : i32
      %57 = vector.broadcast %c0_i32_35 : i32 to vector<8x128xi32>
      %58 = arith.cmpi eq, %56, %57 : vector<8x128xi32>
      %c1_i32_36 = arith.constant 1 : i32
      %59 = vector.broadcast %c1_i32_36 : i32 to vector<8x128xi32>
      %60 = arith.cmpi eq, %56, %59 : vector<8x128xi32>
      %cst_37 = arith.constant 0.000000e+00 : f32
      %61 = vector.shape_cast %55 : vector<1x128xf32> to vector<1x128xf32>
      %62 = vector.broadcast %61 : vector<1x128xf32> to vector<8x128xf32>
      %63 = vector.broadcast %cst_37 : f32 to vector<8x128xf32>
      %64 = arith.select %60, %62, %63 : vector<8x128xi1>, vector<8x128xf32>
      %65 = vector.shape_cast %52 : vector<1x128xf32> to vector<1x128xf32>
      %66 = vector.broadcast %65 : vector<1x128xf32> to vector<8x128xf32>
      %67 = arith.select %58, %66, %64 : vector<8x128xi1>, vector<8x128xf32>
      %68 = vector.shape_cast %67 : vector<8x128xf32> to vector<1x8x128xf32>
      %c0_38 = arith.constant 0 : index
      %c0_39 = arith.constant 0 : index
      %c0_40 = arith.constant 0 : index
      %69 = vector.load %arg10[%c0_38, %c0_39, %c0_40] : memref<1x8x128xf32, #tpu.memory_space<vmem>>, vector<1x8x128xf32>
      tpu.vector_store %arg10[%c0_38, %c0_39, %c0_40], %68 {strides = array<i32>} : memref<1x8x128xf32, #tpu.memory_space<vmem>>, vector<1x8x128xf32>,
    } else {
    }
    return
  }
  func.func @transform_0(%arg0: i32, %arg1: i32, %arg2: i32) -> (i32, i32) {
    %c4_i32 = arith.constant 4 : i32
    %0 = arith.muli %arg0, %c4_i32 : i32
    %1 = arith.addi %0, %arg1 : i32
    %c0_i32 = arith.constant 0 : i32
    %c0_i32_0 = arith.constant 0 : i32
    return %1, %c0_i32 : i32, i32
  }
  func.func @transform_1(%arg0: i32, %arg1: i32, %arg2: i32) -> (i32, i32) {
    %c0_i32 = arith.constant 0 : i32
    %c0_i32_0 = arith.constant 0 : i32
    return %arg0, %c0_i32 : i32, i32
  }
  func.func @transform_2(%arg0: i32, %arg1: i32, %arg2: i32) -> (i32, i32) {
    %c0_i32 = arith.constant 0 : i32
    %c0_i32_0 = arith.constant 0 : i32
    return %arg0, %c0_i32 : i32, i32
  }
  func.func @transform_3(%arg0: i32, %arg1: i32, %arg2: i32) -> (i32, i32) {
    %c4_i32 = arith.constant 4 : i32
    %0 = arith.muli %arg0, %c4_i32 : i32
    %1 = arith.addi %0, %arg1 : i32
    %c0_i32 = arith.constant 0 : i32
    %c0_i32_0 = arith.constant 0 : i32
    return %1, %c0_i32 : i32, i32
  }
  func.func @transform_4(%arg0: i32, %arg1: i32, %arg2: i32) -> (i32, i32) {
    %c0_i32 = arith.constant 0 : i32
    %c0_i32_0 = arith.constant 0 : i32
    %c0_i32_1 = arith.constant 0 : i32
    return %c0_i32, %c0_i32_0 : i32, i32
  }
  func.func @transform_5(%arg0: i32, %arg1: i32, %arg2: i32) -> (i32, i32) {
    %c0_i32 = arith.constant 0 : i32
    %c0_i32_0 = arith.constant 0 : i32
    %c0_i32_1 = arith.constant 0 : i32
    return %c0_i32, %c0_i32_0 : i32, i32
  }
  func.func @transform_6(%arg0: i32, %arg1: i32, %arg2: i32) -> (i32, i32) {
    %c4_i32 = arith.constant 4 : i32
    %0 = arith.muli %arg0, %c4_i32 : i32
    %1 = arith.addi %0, %arg1 : i32
    %c0_i32 = arith.constant 0 : i32
    %c0_i32_0 = arith.constant 0 : i32
    return %1, %c0_i32 : i32, i32
  }
  func.func @transform_7(%arg0: i32, %arg1: i32, %arg2: i32) -> (i32, i32, i32) {
    %c4_i32 = arith.constant 4 : i32
    %0 = arith.muli %arg0, %c4_i32 : i32
    %1 = arith.addi %0, %arg1 : i32
    %c0_i32 = arith.constant 0 : i32
    %c0_i32_0 = arith.constant 0 : i32
    %c0_i32_1 = arith.constant 0 : i32
    return %1, %c0_i32, %c0_i32_0 : i32, i32, i32
  }
}

module attributes {stable_mosaic.version = 11 : i64} {
  func.func @_ffn_resident_kernel(%arg0: i32, %arg1: memref<32x128xf32, #tpu.memory_space<vmem>>, %arg2: memref<1x128xf32, #tpu.memory_space<vmem>>, %arg3: memref<1x128xf32, #tpu.memory_space<vmem>>, %arg4: memref<128x256xbf16, #tpu.memory_space<vmem>>, %arg5: memref<1x256xf32, #tpu.memory_space<vmem>>, %arg6: memref<256x128xbf16, #tpu.memory_space<vmem>>, %arg7: memref<1x128xf32, #tpu.memory_space<vmem>>, %arg8: memref<32x128xf32, #tpu.memory_space<vmem>>) attributes {dimension_semantics = [#tpu.dimension_semantics<parallel>], iteration_bounds = array<i64: 4>, scalar_prefetch = 0 : i64, scratch_operands = 0 : i64, tpu.core_type = #tpu.core_type<tc>, window_params = [{transform_indices = @transform_0, window_bounds = array<i64: 32, 128>}, {pipeline_mode = #tpu.pipeline_mode<synchronous>, transform_indices = @transform_1, window_bounds = array<i64: 1, 128>}, {pipeline_mode = #tpu.pipeline_mode<synchronous>, transform_indices = @transform_2, window_bounds = array<i64: 1, 128>}, {pipeline_mode = #tpu.pipeline_mode<synchronous>, transform_indices = @transform_3, window_bounds = array<i64: 128, 256>}, {pipeline_mode = #tpu.pipeline_mode<synchronous>, transform_indices = @transform_4, window_bounds = array<i64: 1, 256>}, {pipeline_mode = #tpu.pipeline_mode<synchronous>, transform_indices = @transform_5, window_bounds = array<i64: 256, 128>}, {pipeline_mode = #tpu.pipeline_mode<synchronous>, transform_indices = @transform_6, window_bounds = array<i64: 1, 128>}, {transform_indices = @transform_7, window_bounds = array<i64: 32, 128>}]} {
    %c0 = arith.constant 0 : index
    %c0_0 = arith.constant 0 : index
    %0 = vector.load %arg1[%c0, %c0_0] : memref<32x128xf32, #tpu.memory_space<vmem>>, vector<32x128xf32>
    %c0_1 = arith.constant 0 : index
    %c0_2 = arith.constant 0 : index
    %1 = vector.load %arg2[%c0_1, %c0_2] : memref<1x128xf32, #tpu.memory_space<vmem>>, vector<1x128xf32>
    %2 = vector.broadcast %1 : vector<1x128xf32> to vector<32x128xf32>
    %3 = arith.mulf %0, %2 : vector<32x128xf32>
    %c0_3 = arith.constant 0 : index
    %c0_4 = arith.constant 0 : index
    %4 = vector.load %arg3[%c0_3, %c0_4] : memref<1x128xf32, #tpu.memory_space<vmem>>, vector<1x128xf32>
    %5 = vector.broadcast %4 : vector<1x128xf32> to vector<32x128xf32>
    %6 = arith.addf %3, %5 : vector<32x128xf32>
    %7 = arith.truncf %6 : vector<32x128xf32> to vector<32x128xbf16>
    %c0_5 = arith.constant 0 : index
    %c0_6 = arith.constant 0 : index
    %8 = vector.load %arg7[%c0_5, %c0_6] : memref<1x128xf32, #tpu.memory_space<vmem>>, vector<1x128xf32>
    %9 = vector.broadcast %8 : vector<1x128xf32> to vector<32x128xf32>
    %10 = arith.addf %0, %9 : vector<32x128xf32>
    %c0_7 = arith.constant 0 : index
    %c0_8 = arith.constant 0 : index
    %11 = vector.load %arg4[%c0_7, %c0_8] : memref<128x256xbf16, #tpu.memory_space<vmem>>, vector<128x128xbf16>
    %cst = arith.constant dense<0.000000e+00> : vector<32x128xf32>
    %12 = tpu.matmul %7, %11, %cst {dimension_numbers = #tpu.dot_dimension_numbers<[1], [0], [0], [1], [0, 0, 1, 1], [], []>} : vector<32x128xbf16>, vector<128x128xbf16>, vector<32x128xf32> -> vector<32x128xf32>
    %c0_9 = arith.constant 0 : index
    %c0_10 = arith.constant 0 : index
    %13 = vector.load %arg5[%c0_9, %c0_10] : memref<1x256xf32, #tpu.memory_space<vmem>>, vector<1x128xf32>
    %14 = vector.broadcast %13 : vector<1x128xf32> to vector<32x128xf32>
    %15 = arith.addf %12, %14 : vector<32x128xf32>
    %cst_11 = arith.constant 0.000000e+00 : f32
    %16 = vector.broadcast %cst_11 : f32 to vector<32x128xf32>
    %17 = arith.maximumf %15, %16 : vector<32x128xf32>
    %18 = arith.truncf %17 : vector<32x128xf32> to vector<32x128xbf16>
    %c0_12 = arith.constant 0 : index
    %c0_13 = arith.constant 0 : index
    %19 = vector.load %arg6[%c0_12, %c0_13] : memref<256x128xbf16, #tpu.memory_space<vmem>>, vector<128x128xbf16>
    %cst_14 = arith.constant dense<0.000000e+00> : vector<32x128xf32>
    %20 = tpu.matmul %18, %19, %cst_14 {dimension_numbers = #tpu.dot_dimension_numbers<[1], [0], [0], [1], [0, 0, 1, 1], [], []>} : vector<32x128xbf16>, vector<128x128xbf16>, vector<32x128xf32> -> vector<32x128xf32>
    %21 = arith.addf %10, %20 : vector<32x128xf32>
    %c0_15 = arith.constant 0 : index
    %c128 = arith.constant 128 : index
    %22 = vector.load %arg4[%c0_15, %c128] : memref<128x256xbf16, #tpu.memory_space<vmem>>, vector<128x128xbf16>
    %cst_16 = arith.constant dense<0.000000e+00> : vector<32x128xf32>
    %23 = tpu.matmul %7, %22, %cst_16 {dimension_numbers = #tpu.dot_dimension_numbers<[1], [0], [0], [1], [0, 0, 1, 1], [], []>} : vector<32x128xbf16>, vector<128x128xbf16>, vector<32x128xf32> -> vector<32x128xf32>
    %c0_17 = arith.constant 0 : index
    %c128_18 = arith.constant 128 : index
    %24 = vector.load %arg5[%c0_17, %c128_18] : memref<1x256xf32, #tpu.memory_space<vmem>>, vector<1x128xf32>
    %25 = vector.broadcast %24 : vector<1x128xf32> to vector<32x128xf32>
    %26 = arith.addf %23, %25 : vector<32x128xf32>
    %cst_19 = arith.constant 0.000000e+00 : f32
    %27 = vector.broadcast %cst_19 : f32 to vector<32x128xf32>
    %28 = arith.maximumf %26, %27 : vector<32x128xf32>
    %29 = arith.truncf %28 : vector<32x128xf32> to vector<32x128xbf16>
    %c128_20 = arith.constant 128 : index
    %c0_21 = arith.constant 0 : index
    %30 = vector.load %arg6[%c128_20, %c0_21] : memref<256x128xbf16, #tpu.memory_space<vmem>>, vector<128x128xbf16>
    %cst_22 = arith.constant dense<0.000000e+00> : vector<32x128xf32>
    %31 = tpu.matmul %29, %30, %cst_22 {dimension_numbers = #tpu.dot_dimension_numbers<[1], [0], [0], [1], [0, 0, 1, 1], [], []>} : vector<32x128xbf16>, vector<128x128xbf16>, vector<32x128xf32> -> vector<32x128xf32>
    %32 = arith.addf %21, %31 : vector<32x128xf32>
    %c0_23 = arith.constant 0 : index
    %c0_24 = arith.constant 0 : index
    %33 = vector.load %arg8[%c0_23, %c0_24] : memref<32x128xf32, #tpu.memory_space<vmem>>, vector<32x128xf32>
    tpu.vector_store %arg8[%c0_23, %c0_24], %32 {strides = array<i32>} : memref<32x128xf32, #tpu.memory_space<vmem>>, vector<32x128xf32>,
    return
  }
  func.func @transform_0(%arg0: i32) -> (i32, i32) {
    %c0_i32 = arith.constant 0 : i32
    %c0_i32_0 = arith.constant 0 : i32
    return %arg0, %c0_i32 : i32, i32
  }
  func.func @transform_1(%arg0: i32) -> (i32, i32) {
    %c0_i32 = arith.constant 0 : i32
    %c0_i32_0 = arith.constant 0 : i32
    %c0_i32_1 = arith.constant 0 : i32
    return %c0_i32, %c0_i32_0 : i32, i32
  }
  func.func @transform_2(%arg0: i32) -> (i32, i32) {
    %c0_i32 = arith.constant 0 : i32
    %c0_i32_0 = arith.constant 0 : i32
    %c0_i32_1 = arith.constant 0 : i32
    return %c0_i32, %c0_i32_0 : i32, i32
  }
  func.func @transform_3(%arg0: i32) -> (i32, i32) {
    %c0_i32 = arith.constant 0 : i32
    %c0_i32_0 = arith.constant 0 : i32
    %c0_i32_1 = arith.constant 0 : i32
    return %c0_i32, %c0_i32_0 : i32, i32
  }
  func.func @transform_4(%arg0: i32) -> (i32, i32) {
    %c0_i32 = arith.constant 0 : i32
    %c0_i32_0 = arith.constant 0 : i32
    %c0_i32_1 = arith.constant 0 : i32
    return %c0_i32, %c0_i32_0 : i32, i32
  }
  func.func @transform_5(%arg0: i32) -> (i32, i32) {
    %c0_i32 = arith.constant 0 : i32
    %c0_i32_0 = arith.constant 0 : i32
    %c0_i32_1 = arith.constant 0 : i32
    return %c0_i32, %c0_i32_0 : i32, i32
  }
  func.func @transform_6(%arg0: i32) -> (i32, i32) {
    %c0_i32 = arith.constant 0 : i32
    %c0_i32_0 = arith.constant 0 : i32
    %c0_i32_1 = arith.constant 0 : i32
    return %c0_i32, %c0_i32_0 : i32, i32
  }
  func.func @transform_7(%arg0: i32) -> (i32, i32) {
    %c0_i32 = arith.constant 0 : i32
    %c0_i32_0 = arith.constant 0 : i32
    return %arg0, %c0_i32 : i32, i32
  }
}

</mosaic_0001>

<llo_original>
// kernel: encoder_layer.4
$region0: #{encoder_layer.4}
  #allocation0 [shape = 'u32[]', space=smem, size = 0x4, offset = 0x4, fixed_abs, tag = 'smem constant byte address 0x4 - core index']
  #allocation1 [shape = 'u32[144,128]{1,0:T(1,128)}', space=vmem, size = 0x12000, scoped, tag = 'internal scratch']
  %s0 = inlined_call_operand.hbm [shape: f32[128,128], index: 0, kind: input, shape index: {}]
  %s1 = inlined_call_operand.hbm [shape: f32[4,8,128], index: 1, kind: output, shape index: {}]
  %s2 = sld [smem:[#allocation0]]
  $region41: #{encoder_layer.4} parent=0
    _
  %s4 = ssub.s32 1, %s2
  %s5 = scalar_select 0, %s4, %s2
  $region1: #{encoder_layer.4} parent=0
    #allocation2 [shape = 'u8[32768]{0}', space=vmem, size = 0x8000, scoped, tag = 'input window, operand 0']
    #allocation3 [shape = 's32[2]{0}', space=sflag, size = 0x8, scoped, tag = 'scoped memory for encoder_layer.4']
    #allocation4 [shape = 's32[2]{0}', space=sflag, size = 0x8, scoped, tag = 'scoped memory for encoder_layer.4']
    #allocation5 [shape = 'u8[8192]{0}', space=vmem, size = 0x2000, scoped, tag = 'output window, operand 0']
    %6 = vsyncpa [#allocation3], 0
    %s7 = scalar_lea.sflag [#allocation3], 1
    %8 = vsyncpa %s7, 0
    %9 = vsyncpa [#allocation4], 0
    %s10 = scalar_lea.sflag [#allocation4], 1
    %11 = vsyncpa %s10, 0
    loop: start=0, step=1, limit=6
    $region2: #{encoder_layer.4} parent=1 // loop_pre_header
      _
    $region3: #{encoder_layer.4} parent=1 // loop_header
      %s13 = sphi 0, %s17
      %p14 = scmp.ge.s32.totalorder %s13, 6
      %s23 = sphi 0, %s25
      %s26 = sphi 0, %s23
      %s27 = sphi 0, %s26
      %s43 = sphi 0, %s27
      %s49 = sphi 0, %s51
      %s52 = sphi 0, %s49
      %s53 = sphi 0, %s52
      %s69 = sphi 0, %s53
    $region4: #{encoder_layer.4} parent=1 // loop_header_branch
      %16 = sbr.rel (%p14) target = $region8
    $region5: #{encoder_layer.4} parent=1 // loop_body
      %s18 = ssub.s32 %s13, 1
      %s19 = ssub.s32 %s13, 2
      %s20 = sadd.s32 %s13, 1
      %s21 = ssub.s32 %s13, %s20
      %p22 = scmp.eq.s32.totalorder %s21, 0
      %s24 = sadd.s32 %s23, 1
      %s25 = scalar_select %p22, %s23, %s24
      %p28 = pneg %p22
      %p29 = scmp.eq.s32.totalorder %s13, 3
      %p30 = por %p28, %p29
      %p31 = scmp.ne.s32.totalorder %s23, %s26
      %p32 = scmp.eq.s32.totalorder %s13, 0
      %p33 = por %p31, %p32
      %p34 = scmp.ne.s32.totalorder %s23, %s26
      %p35 = scmp.eq.s32.totalorder %s18, 3
      %p36 = por %p34, %p35
      %p37 = scmp.ne.s32.totalorder %s26, %s27
      %p38 = scmp.eq.s32.totalorder %s18, 0
      %p39 = por %p37, %p38
      %p40 = scmp.ne.s32.totalorder %s26, %s27
      %p41 = scmp.eq.s32.totalorder %s19, 3
      %p42 = por %p40, %p41
      %p44 = scmp.ne.s32.totalorder %s27, %s43
      %p45 = scmp.eq.s32.totalorder %s19, 0
      %p46 = por %p44, %p45
      %s47 = ssub.s32 %s13, %s20
      %p48 = scmp.eq.s32.totalorder %s47, 0
      %s50 = sadd.s32 %s49, 1
      %s51 = scalar_select %p48, %s49, %s50
      %p54 = pneg %p48
      %p55 = scmp.eq.s32.totalorder %s13, 3
      %p56 = por %p54, %p55
      %p57 = scmp.ne.s32.totalorder %s49, %s52
      %p58 = scmp.eq.s32.totalorder %s13, 0
      %p59 = por %p57, %p58
      %p60 = scmp.ne.s32.totalorder %s49, %s52
      %p61 = scmp.eq.s32.totalorder %s18, 3
      %p62 = por %p60, %p61
      %p63 = scmp.ne.s32.totalorder %s52, %s53
      %p64 = scmp.eq.s32.totalorder %s18, 0
      %p65 = por %p63, %p64
      %p66 = scmp.ne.s32.totalorder %s52, %s53
      %p67 = scmp.eq.s32.totalorder %s19, 3
      %p68 = por %p66, %p67
      %p70 = scmp.ne.s32.totalorder %s53, %s69
      %p71 = scmp.eq.s32.totalorder %s19, 0
      %p72 = por %p70, %p71
      %p73 = scmp.le.s32.totalorder 1, %s13
      %p74 = scmp.lt.s32.totalorder %s13, 5
      %p75 = pnand %p73, %p74
      %p76 = pneg %p75
      // Predicated region
      $region9: #{encoder_layer.4} parent=5 // pred_check
        _
      $region10: #{encoder_layer.4} parent=5 // pred_check_branch
        %78 = sbr.rel (%p75) target = $region12
      $region11: #{encoder_layer.4} parent=5 // pred_region
        %s79 = ssub.s32 %s13, 1
      $region12: #{encoder_layer.4} parent=5 // pred_fallthru
        _
      %p80 = scmp.lt.s32.totalorder %s13, 4
      // Predicated region
      $region13: #{encoder_layer.4} parent=5 // pred_check
        %p81 = pneg %p80
      $region14: #{encoder_layer.4} parent=5 // pred_check_branch
        %83 = sbr.rel (%p81) target = $region16
      $region15: #{encoder_layer.4} parent=5 // pred_region
        // Predicated region
        $region17: #{encoder_layer.4} parent=15 // pred_check
          %p84 = pneg %p33
        $region18: #{encoder_layer.4} parent=15 // pred_check_branch
          %86 = sbr.rel (%p84) target = $region20
        $region19: #{encoder_layer.4} parent=15 // pred_region
          %s87 = sand.u32 %s23, 1
          %s88 = scalar_lea.sflag [#allocation3], %s87
          %s89 = sand.u32 %s23, 1
          %s90 = smul.addr %s89, 32
          %s91 = scalar_lea.vmem [#allocation2], %s90
          %s92 = smul.u32 4, %s13
          %s94 = ssub.s32 512, 512
          %95 = vsyncadd %s88, %s94
          %s96 = smul.addr %s92, 128
          %s97 = scalar_lea.hbm %s0, %s96
          %s98 = sshll.u32 %s91, 4
          %s99 = int_to_ptr.vmem [resolvable:$true] %s98
          %104 = dma.hbm_to_vmem [thread:$0]  %s97, 512, %s99, %s88, 128, 128, 8
        $region20: #{encoder_layer.4} parent=15 // pred_fallthru
          _
      $region16: #{encoder_layer.4} parent=5 // pred_fallthru
        _
      %p105 = scmp.le.s32.totalorder 1, %s13
      %p106 = scmp.lt.s32.totalorder %s13, 5
      %p107 = pnand %p105, %p106
      %p108 = pneg %p107
      // Predicated region
      $region21: #{encoder_layer.4} parent=5 // pred_check
        _
      $region22: #{encoder_layer.4} parent=5 // pred_check_branch
        %110 = sbr.rel (%p107) target = $region24
      $region23: #{encoder_layer.4} parent=5 // pred_region
        %s111 = ssub.s32 %s13, 1
        %s112 = sand.u32 %s26, 1
        %s113 = scalar_lea.sflag [#allocation3], %s112
        %s114 = sand.u32 %s26, 1
        %s115 = smul.addr %s114, 32
        %s116 = scalar_lea.vmem [#allocation2], %s115
        // Predicated region
        $region25: #{encoder_layer.4} parent=23 // pred_check
          %p117 = pneg %p39
        $region26: #{encoder_layer.4} parent=23 // pred_check_branch
          %119 = sbr.rel (%p117) target = $region28
        $region27: #{encoder_layer.4} parent=23 // pred_region
          %120 = dma.done %s113, 512
        $region28: #{encoder_layer.4} parent=23 // pred_fallthru
          _
        %s121 = sand.u32 %s26, 1
        %s122 = scalar_lea.sflag [#allocation3], %s121
        %s123 = sand.u32 %s26, 1
        %s124 = smul.addr %s123, 32
        %s125 = scalar_lea.vmem [#allocation2], %s124
        %p126 = pneg %p39
        %p127 = pneg %p36
        %p128 = pneg %p65
        %p129 = pneg %p62
        %s130 = sand.u32 %s52, 1
        %s131 = scalar_lea.sflag [#allocation4], %s130
        %s132 = sand.u32 %s52, 1
        %s133 = smul.addr %s132, 8
        %s134 = scalar_lea.vmem [#allocation5], %s133
        %s135 = smul.u32 4, %s18
        %v136 = vld [vmem:[%s116] sm:$0xff]
        %v137 = vld [vmem:[%s116 + $0x8] sm:$0xff]
        %v138 = vld [vmem:[%s116 + $0x10] sm:$0xff]
        %v139 = vld [vmem:[%s116 + $0x18] sm:$0xff]
        %v140 = vadd.f32 %v136, %v137
        %v141 = vadd.f32 %v140, %v138
        %v142 = vadd.f32 %v141, %v139
        %v143 = vrot.slane %v142, 4
        %v144 = vadd.f32 %v142, %v143
        %v145 = vrot.slane %v144, 2
        %v146 = vadd.f32 %v144, %v145
        %v147 = vrot.slane %v146, 1
        %v148 = vadd.f32 %v146, %v147
        %v149 = vmul.f32 %v136, %v136
        %v150 = vmul.f32 %v137, %v137
        %v151 = vmul.f32 %v138, %v138
        %v152 = vmul.f32 %v139, %v139
        %v153 = vadd.f32 %v149, %v150
        %v154 = vadd.f32 %v153, %v151
        %v155 = vadd.f32 %v154, %v152
        %v156 = vrot.slane %v155, 4
        %v157 = vadd.f32 %v155, %v156
        %v158 = vrot.slane %v157, 2
        %v159 = vadd.f32 %v157, %v158
        %v160 = vrot.slane %v159, 1
        %v161 = vadd.f32 %v159, %v160
        %v162 = vlaneseq
        %v163 = vshrl.u32 %v162, 7
        %vm164 = vcmp.eq.s32.totalorder %v163, 0
        %vm165 = vcmp.eq.s32.totalorder %v163, 1
        %v166 = vsel %vm165, %v161, 0.0
        %v167 = vsel %vm164, %v148, %v166
        %168 = vst [vmem:[%s134] sm:$0xff] %v167
        %s169 = sand.u32 %s52, 1
        %s170 = scalar_lea.sflag [#allocation4], %s169
        %s171 = sand.u32 %s52, 1
        %s172 = smul.addr %s171, 8
        %s173 = scalar_lea.vmem [#allocation5], %s172
        // Predicated region
        $region29: #{encoder_layer.4} parent=23 // pred_check
          %p174 = pneg %p62
        $region30: #{encoder_layer.4} parent=23 // pred_check_branch
          %176 = sbr.rel (%p174) target = $region32
        $region31: #{encoder_layer.4} parent=23 // pred_region
          %s178 = ssub.s32 128, 128
          %179 = vsyncadd %s170, %s178
          %s180 = smul.addr %s18, 128
          %s181 = scalar_lea.hbm %s1, %s180
          %s183 = sshll.u32 %s173, 4
          %s184 = int_to_ptr.vmem [resolvable:$true] %s183
          %186 = dma.vmem_to_hbm [thread:$0]  %s184, 128, %s181, %s170
        $region32: #{encoder_layer.4} parent=23 // pred_fallthru
          _
      $region24: #{encoder_layer.4} parent=5 // pred_fallthru
        _
      %p187 = scmp.le.s32.totalorder 2, %s13
      // Predicated region
      $region33: #{encoder_layer.4} parent=5 // pred_check
        %p188 = pneg %p187
      $region34: #{encoder_layer.4} parent=5 // pred_check_branch
        %190 = sbr.rel (%p188) target = $region36
      $region35: #{encoder_layer.4} parent=5 // pred_region
        %s191 = ssub.s32 %s13, 2
        // Predicated region
        $region37: #{encoder_layer.4} parent=35 // pred_check
          %p192 = pneg %p68
        $region38: #{encoder_layer.4} parent=35 // pred_check_branch
          %194 = sbr.rel (%p192) target = $region40
        $region39: #{encoder_layer.4} parent=35 // pred_region
          %s195 = sand.u32 %s53, 1
          %s196 = scalar_lea.sflag [#allocation4], %s195
          %s197 = sand.u32 %s53, 1
          %s198 = smul.addr %s197, 8
          %s199 = scalar_lea.vmem [#allocation5], %s198
          %200 = dma.done %s196, 128
        $region40: #{encoder_layer.4} parent=35 // pred_fallthru
          _
      $region36: #{encoder_layer.4} parent=5 // pred_fallthru
        _
    $region6: #{encoder_layer.4} parent=1 // loop_footer
      %s17 = sadd.s32 1, %s13
    $region7: #{encoder_layer.4} parent=1 // loop_footer_branch
      %12 = sbr.rel target = $region3
    $region8: #{encoder_layer.4} parent=1 // loop_exit
      _
    %201 = vsyncpa [#allocation3], 1
    %s202 = scalar_lea.sflag [#allocation3], 1
    %203 = vsyncpa %s202, 1
    %204 = vsyncpa [#allocation4], 1
    %s205 = scalar_lea.sflag [#allocation4], 1
    %206 = vsyncpa %s205, 1

// kernel: encoder_layer.5
$region0: #{encoder_layer.5}
  #allocation0 [shape = 'u32[]', space=smem, size = 0x4, offset = 0x4, fixed_abs, tag = 'smem constant byte address 0x4 - core index']
  #allocation1 [shape = 'u32[144,128]{1,0:T(1,128)}', space=vmem, size = 0x12000, scoped, tag = 'internal scratch']
  %s0 = inlined_call_operand.hbm [shape: f32[128,128], index: 0, kind: input, shape index: {}]
  %s1 = inlined_call_operand.hbm [shape: f32[1,128], index: 1, kind: input, shape index: {}]
  %s2 = inlined_call_operand.hbm [shape: f32[1,128], index: 2, kind: input, shape index: {}]
  %s3 = inlined_call_operand.hbm [shape: bf16[128,384], index: 3, kind: input, shape index: {}]
  %s4 = inlined_call_operand.hbm [shape: f32[1,384], index: 4, kind: input, shape index: {}]
  %s5 = inlined_call_operand.hbm [shape: bf16[128,128], index: 5, kind: output, shape index: {0}]
  %s6 = inlined_call_operand.hbm [shape: bf16[128,128], index: 6, kind: output, shape index: {1}]
  %s7 = inlined_call_operand.hbm [shape: bf16[128,128], index: 7, kind: output, shape index: {2}]
  %8 = xla_tuple %s5, %s6, %s7
  %s9 = sld [smem:[#allocation0]]
  $region89: #{encoder_layer.5} parent=0
    _
  %s11 = ssub.s32 1, %s9
  %s12 = scalar_select 0, %s11, %s9
  $region1: #{encoder_layer.5} parent=0
    #allocation2 [shape = 'u8[32768]{0}', space=vmem, size = 0x8000, scoped, tag = 'input window, operand 0']
    #allocation3 [shape = 's32[2]{0}', space=sflag, size = 0x8, scoped, tag = 'scoped memory for encoder_layer.5']
    #allocation4 [shape = 's32[2]{0}', space=sflag, size = 0x8, scoped, tag = 'scoped memory for encoder_layer.5']
    #allocation5 [shape = 'u8[512]{0}', space=vmem, size = 0x400, scoped, tag = 'input window, operand 1, single buffered']
    #allocation6 [shape = 's32[1]{0}', space=sflag, size = 0x4, scoped, tag = 'scoped memory for encoder_layer.5']
    #allocation7 [shape = 'u8[512]{0}', space=vmem, size = 0x400, scoped, tag = 'input window, operand 2, single buffered']
    #allocation8 [shape = 'u8[98304]{0}', space=vmem, size = 0x18000, scoped, tag = 'input window, operand 3, single buffered']
    #allocation9 [shape = 's32[1]{0}', space=sflag, size = 0x4, scoped, tag = 'scoped memory for encoder_layer.5']
    #allocation10 [shape = 'u8[1536]{0}', space=vmem, size = 0x800, scoped, tag = 'input window, operand 4, single buffered']
    #allocation11 [shape = 'u8[16384]{0}', space=vmem, size = 0x4000, scoped, tag = 'output window, operand 0']
    #allocation12 [shape = 'u8[16384]{0}', space=vmem, size = 0x4000, scoped, tag = 'output window, operand 1']
    #allocation13 [shape = 's32[2]{0}', space=sflag, size = 0x8, scoped, tag = 'scoped memory for encoder_layer.5']
    #allocation14 [shape = 'u8[16384]{0}', space=vmem, size = 0x4000, scoped, tag = 'output window, operand 2']
    %13 = vsyncpa [#allocation3], 0
    %s14 = scalar_lea.sflag [#allocation3], 1
    %15 = vsyncpa %s14, 0
    %16 = vsyncpa [#allocation6], 0
    %17 = vsyncpa [#allocation9], 0
    %18 = vsyncpa [#allocation4], 0
    %s19 = scalar_lea.sflag [#allocation4], 1
    %20 = vsyncpa %s19, 0
    %21 = vsyncpa [#allocation13], 0
    %s22 = scalar_lea.sflag [#allocation13], 1
    %23 = vsyncpa %s22, 0
    loop: start=0, step=1, limit=6
    $region2: #{encoder_layer.5} parent=1 // loop_pre_header
      _
    $region3: #{encoder_layer.5} parent=1 // loop_header
      %s25 = sphi 0, %s29
      %p26 = scmp.ge.s32.totalorder %s25, 6
      %s35 = sphi 0, %s37
      %s38 = sphi 0, %s35
      %s39 = sphi 0, %s38
      %s55 = sphi 0, %s39
      %s59 = sphi 0, %s59
      %s61 = sphi 0, %s59
      %s62 = sphi 0, %s61
      %s76 = sphi 0, %s62
      %s80 = sphi 0, %s80
      %s82 = sphi 0, %s80
      %s83 = sphi 0, %s82
      %s97 = sphi 0, %s83
      %s101 = sphi 0, %s101
      %s103 = sphi 0, %s101
      %s104 = sphi 0, %s103
      %s118 = sphi 0, %s104
      %s122 = sphi 0, %s122
      %s124 = sphi 0, %s122
      %s125 = sphi 0, %s124
      %s139 = sphi 0, %s125
      %s145 = sphi 0, %s147
      %s148 = sphi 0, %s145
      %s149 = sphi 0, %s148
      %s165 = sphi 0, %s149
      %s171 = sphi 0, %s173
      %s174 = sphi 0, %s171
      %s175 = sphi 0, %s174
      %s191 = sphi 0, %s175
      %s197 = sphi 0, %s199
      %s200 = sphi 0, %s197
      %s201 = sphi 0, %s200
      %s217 = sphi 0, %s201
    $region4: #{encoder_layer.5} parent=1 // loop_header_branch
      %28 = sbr.rel (%p26) target = $region8
    $region5: #{encoder_layer.5} parent=1 // loop_body
      %s30 = ssub.s32 %s25, 1
      %s31 = ssub.s32 %s25, 2
      %s32 = sadd.s32 %s25, 1
      %s33 = ssub.s32 %s25, %s32
      %p34 = scmp.eq.s32.totalorder %s33, 0
      %s36 = sadd.s32 %s35, 1
      %s37 = scalar_select %p34, %s35, %s36
      %p40 = pneg %p34
      %p41 = scmp.eq.s32.totalorder %s25, 3
      %p42 = por %p40, %p41
      %p43 = scmp.ne.s32.totalorder %s35, %s38
      %p44 = scmp.eq.s32.totalorder %s25, 0
      %p45 = por %p43, %p44
      %p46 = scmp.ne.s32.totalorder %s35, %s38
      %p47 = scmp.eq.s32.totalorder %s30, 3
      %p48 = por %p46, %p47
      %p49 = scmp.ne.s32.totalorder %s38, %s39
      %p50 = scmp.eq.s32.totalorder %s30, 0
      %p51 = por %p49, %p50
      %p52 = scmp.ne.s32.totalorder %s38, %s39
      %p53 = scmp.eq.s32.totalorder %s31, 3
      %p54 = por %p52, %p53
      %p56 = scmp.ne.s32.totalorder %s39, %s55
      %p57 = scmp.eq.s32.totalorder %s31, 0
      %p58 = por %p56, %p57
      %s60 = sadd.s32 %s59, 1
      %p63 = scmp.eq.s32.totalorder %s25, 3
      %p64 = scmp.ne.s32.totalorder %s59, %s61
      %p65 = scmp.eq.s32.totalorder %s25, 0
      %p66 = por %p64, %p65
      %p67 = scmp.ne.s32.totalorder %s59, %s61
      %p68 = scmp.eq.s32.totalorder %s30, 3
      %p69 = por %p67, %p68
      %p70 = scmp.ne.s32.totalorder %s61, %s62
      %p71 = scmp.eq.s32.totalorder %s30, 0
      %p72 = por %p70, %p71
      %p73 = scmp.ne.s32.totalorder %s61, %s62
      %p74 = scmp.eq.s32.totalorder %s31, 3
      %p75 = por %p73, %p74
      %p77 = scmp.ne.s32.totalorder %s62, %s76
      %p78 = scmp.eq.s32.totalorder %s31, 0
      %p79 = por %p77, %p78
      %s81 = sadd.s32 %s80, 1
      %p84 = scmp.eq.s32.totalorder %s25, 3
      %p85 = scmp.ne.s32.totalorder %s80, %s82
      %p86 = scmp.eq.s32.totalorder %s25, 0
      %p87 = por %p85, %p86
      %p88 = scmp.ne.s32.totalorder %s80, %s82
      %p89 = scmp.eq.s32.totalorder %s30, 3
      %p90 = por %p88, %p89
      %p91 = scmp.ne.s32.totalorder %s82, %s83
      %p92 = scmp.eq.s32.totalorder %s30, 0
      %p93 = por %p91, %p92
      %p94 = scmp.ne.s32.totalorder %s82, %s83
      %p95 = scmp.eq.s32.totalorder %s31, 3
      %p96 = por %p94, %p95
      %p98 = scmp.ne.s32.totalorder %s83, %s97
      %p99 = scmp.eq.s32.totalorder %s31, 0
      %p100 = por %p98, %p99
      %s102 = sadd.s32 %s101, 1
      %p105 = scmp.eq.s32.totalorder %s25, 3
      %p106 = scmp.ne.s32.totalorder %s101, %s103
      %p107 = scmp.eq.s32.totalorder %s25, 0
      %p108 = por %p106, %p107
      %p109 = scmp.ne.s32.totalorder %s101, %s103
      %p110 = scmp.eq.s32.totalorder %s30, 3
      %p111 = por %p109, %p110
      %p112 = scmp.ne.s32.totalorder %s103, %s104
      %p113 = scmp.eq.s32.totalorder %s30, 0
      %p114 = por %p112, %p113
      %p115 = scmp.ne.s32.totalorder %s103, %s104
      %p116 = scmp.eq.s32.totalorder %s31, 3
      %p117 = por %p115, %p116
      %p119 = scmp.ne.s32.totalorder %s104, %s118
      %p120 = scmp.eq.s32.totalorder %s31, 0
      %p121 = por %p119, %p120
      %s123 = sadd.s32 %s122, 1
      %p126 = scmp.eq.s32.totalorder %s25, 3
      %p127 = scmp.ne.s32.totalorder %s122, %s124
      %p128 = scmp.eq.s32.totalorder %s25, 0
      %p129 = por %p127, %p128
      %p130 = scmp.ne.s32.totalorder %s122, %s124
      %p131 = scmp.eq.s32.totalorder %s30, 3
      %p132 = por %p130, %p131
      %p133 = scmp.ne.s32.totalorder %s124, %s125
      %p134 = scmp.eq.s32.totalorder %s30, 0
      %p135 = por %p133, %p134
      %p136 = scmp.ne.s32.totalorder %s124, %s125
      %p137 = scmp.eq.s32.totalorder %s31, 3
      %p138 = por %p136, %p137
      %p140 = scmp.ne.s32.totalorder %s125, %s139
      %p141 = scmp.eq.s32.totalorder %s31, 0
      %p142 = por %p140, %p141
      %s143 = ssub.s32 %s25, %s32
      %p144 = scmp.eq.s32.totalorder %s143, 0
      %s146 = sadd.s32 %s145, 1
      %s147 = scalar_select %p144, %s145, %s146
      %p150 = pneg %p144
      %p151 = scmp.eq.s32.totalorder %s25, 3
      %p152 = por %p150, %p151
      %p153 = scmp.ne.s32.totalorder %s145, %s148
      %p154 = scmp.eq.s32.totalorder %s25, 0
      %p155 = por %p153, %p154
      %p156 = scmp.ne.s32.totalorder %s145, %s148
      %p157 = scmp.eq.s32.totalorder %s30, 3
      %p158 = por %p156, %p157
      %p159 = scmp.ne.s32.totalorder %s148, %s149
      %p160 = scmp.eq.s32.totalorder %s30, 0
      %p161 = por %p159, %p160
      %p162 = scmp.ne.s32.totalorder %s148, %s149
      %p163 = scmp.eq.s32.totalorder %s31, 3
      %p164 = por %p162, %p163
      %p166 = scmp.ne.s32.totalorder %s149, %s165
      %p167 = scmp.eq.s32.totalorder %s31, 0
      %p168 = por %p166, %p167
      %s169 = ssub.s32 %s25, %s32
      %p170 = scmp.eq.s32.totalorder %s169, 0
      %s172 = sadd.s32 %s171, 1
      %s173 = scalar_select %p170, %s171, %s172
      %p176 = pneg %p170
      %p177 = scmp.eq.s32.totalorder %s25, 3
      %p178 = por %p176, %p177
      %p179 = scmp.ne.s32.totalorder %s171, %s174
      %p180 = scmp.eq.s32.totalorder %s25, 0
      %p181 = por %p179, %p180
      %p182 = scmp.ne.s32.totalorder %s171, %s174
      %p183 = scmp.eq.s32.totalorder %s30, 3
      %p184 = por %p182, %p183
      %p185 = scmp.ne.s32.totalorder %s174, %s175
      %p186 = scmp.eq.s32.totalorder %s30, 0
      %p187 = por %p185, %p186
      %p188 = scmp.ne.s32.totalorder %s174, %s175
      %p189 = scmp.eq.s32.totalorder %s31, 3
      %p190 = por %p188, %p189
      %p192 = scmp.ne.s32.totalorder %s175, %s191
      %p193 = scmp.eq.s32.totalorder %s31, 0
      %p194 = por %p192, %p193
      %s195 = ssub.s32 %s25, %s32
      %p196 = scmp.eq.s32.totalorder %s195, 0
      %s198 = sadd.s32 %s197, 1
      %s199 = scalar_select %p196, %s197, %s198
      %p202 = pneg %p196
      %p203 = scmp.eq.s32.totalorder %s25, 3
      %p204 = por %p202, %p203
      %p205 = scmp.ne.s32.totalorder %s197, %s200
      %p206 = scmp.eq.s32.totalorder %s25, 0
      %p207 = por %p205, %p206
      %p208 = scmp.ne.s32.totalorder %s197, %s200
      %p209 = scmp.eq.s32.totalorder %s30, 3
      %p210 = por %p208, %p209
      %p211 = scmp.ne.s32.totalorder %s200, %s201
      %p212 = scmp.eq.s32.totalorder %s30, 0
      %p213 = por %p211, %p212
      %p214 = scmp.ne.s32.totalorder %s200, %s201
      %p215 = scmp.eq.s32.totalorder %s31, 3
      %p216 = por %p214, %p215
      %p218 = scmp.ne.s32.totalorder %s201, %s217
      %p219 = scmp.eq.s32.totalorder %s31, 0
      %p220 = por %p218, %p219
      %p221 = scmp.le.s32.totalorder 1, %s25
      %p222 = scmp.lt.s32.totalorder %s25, 5
      %p223 = pnand %p221, %p222
      %p224 = pneg %p223
      // Predicated region
      $region9: #{encoder_layer.5} parent=5 // pred_check
        _
      $region10: #{encoder_layer.5} parent=5 // pred_check_branch
        %226 = sbr.rel (%p223) target = $region12
      $region11: #{encoder_layer.5} parent=5 // pred_region
        %s227 = ssub.s32 %s25, 1
        // Predicated region
        $region13: #{encoder_layer.5} parent=11 // pred_check
          %p228 = pneg %p72
        $region14: #{encoder_layer.5} parent=11 // pred_check_branch
          %230 = sbr.rel (%p228) target = $region16
        $region15: #{encoder_layer.5} parent=11 // pred_region
          %s232 = ssub.s32 16, 16
          %233 = vsyncadd [#allocation6], %s232
          %s235 = sshll.u32 [#allocation5], 4
          %s236 = int_to_ptr.vmem [resolvable:$true] %s235
          %238 = dma.hbm_to_vmem [thread:$0]  %s1, 16, %s236, [#allocation6]
        $region16: #{encoder_layer.5} parent=11 // pred_fallthru
          _
        // Predicated region
        $region17: #{encoder_layer.5} parent=11 // pred_check
          %p239 = pneg %p93
        $region18: #{encoder_layer.5} parent=11 // pred_check_branch
          %241 = sbr.rel (%p239) target = $region20
        $region19: #{encoder_layer.5} parent=11 // pred_region
          %s243 = ssub.s32 16, 16
          %244 = vsyncadd [#allocation6], %s243
          %s246 = sshll.u32 [#allocation7], 4
          %s247 = int_to_ptr.vmem [resolvable:$true] %s246
          %249 = dma.hbm_to_vmem [thread:$0]  %s2, 16, %s247, [#allocation6]
        $region20: #{encoder_layer.5} parent=11 // pred_fallthru
          _
        // Predicated region
        $region21: #{encoder_layer.5} parent=11 // pred_check
          %p250 = pneg %p114
        $region22: #{encoder_layer.5} parent=11 // pred_check_branch
          %252 = sbr.rel (%p250) target = $region24
        $region23: #{encoder_layer.5} parent=11 // pred_region
          %s254 = ssub.s32 3072, 3072
          %255 = vsyncadd [#allocation9], %s254
          %s256 = sshll.u32 [#allocation8], 4
          %s257 = int_to_ptr.vmem [resolvable:$true] %s256
          %262 = dma.hbm_to_vmem [thread:$0]  %s3, 3072, %s257, [#allocation9], 192, 192, 12
        $region24: #{encoder_layer.5} parent=11 // pred_fallthru
          _
        // Predicated region
        $region25: #{encoder_layer.5} parent=11 // pred_check
          %p263 = pneg %p135
        $region26: #{encoder_layer.5} parent=11 // pred_check_branch
          %265 = sbr.rel (%p263) target = $region28
        $region27: #{encoder_layer.5} parent=11 // pred_region
          %s267 = ssub.s32 48, 48
          %268 = vsyncadd [#allocation9], %s267
          %s270 = sshll.u32 [#allocation10], 4
          %s271 = int_to_ptr.vmem [resolvable:$true] %s270
          %273 = dma.hbm_to_vmem [thread:$0]  %s4, 48, %s271, [#allocation9]
        $region28: #{encoder_layer.5} parent=11 // pred_fallthru
          _
      $region12: #{encoder_layer.5} parent=5 // pred_fallthru
        _
      %p274 = scmp.lt.s32.totalorder %s25, 4
      // Predicated region
      $region29: #{encoder_layer.5} parent=5 // pred_check
        %p275 = pneg %p274
      $region30: #{encoder_layer.5} parent=5 // pred_check_branch
        %277 = sbr.rel (%p275) target = $region32
      $region31: #{encoder_layer.5} parent=5 // pred_region
        // Predicated region
        $region33: #{encoder_layer.5} parent=31 // pred_check
          %p278 = pneg %p45
        $region34: #{encoder_layer.5} parent=31 // pred_check_branch
          %280 = sbr.rel (%p278) target = $region36
        $region35: #{encoder_layer.5} parent=31 // pred_region
          %s281 = sand.u32 %s35, 1
          %s282 = scalar_lea.sflag [#allocation3], %s281
          %s283 = sand.u32 %s35, 1
          %s284 = smul.addr %s283, 32
          %s285 = scalar_lea.vmem [#allocation2], %s284
          %s286 = smul.u32 4, %s25
          %s288 = ssub.s32 512, 512
          %289 = vsyncadd %s282, %s288
          %s290 = smul.addr %s286, 128
          %s291 = scalar_lea.hbm %s0, %s290
          %s292 = sshll.u32 %s285, 4
          %s293 = int_to_ptr.vmem [resolvable:$true] %s292
          %298 = dma.hbm_to_vmem [thread:$0]  %s291, 512, %s293, %s282, 128, 128, 8
        $region36: #{encoder_layer.5} parent=31 // pred_fallthru
          _
      $region32: #{encoder_layer.5} parent=5 // pred_fallthru
        _
      %p299 = scmp.le.s32.totalorder 1, %s25
      %p300 = scmp.lt.s32.totalorder %s25, 5
      %p301 = pnand %p299, %p300
      %p302 = pneg %p301
      // Predicated region
      $region37: #{encoder_layer.5} parent=5 // pred_check
        _
      $region38: #{encoder_layer.5} parent=5 // pred_check_branch
        %304 = sbr.rel (%p301) target = $region40
      $region39: #{encoder_layer.5} parent=5 // pred_region
        %s305 = ssub.s32 %s25, 1
        %s306 = sand.u32 %s38, 1
        %s307 = scalar_lea.sflag [#allocation3], %s306
        %s308 = sand.u32 %s38, 1
        %s309 = smul.addr %s308, 32
        %s310 = scalar_lea.vmem [#allocation2], %s309
        // Predicated region
        $region41: #{encoder_layer.5} parent=39 // pred_check
          %p311 = pneg %p51
        $region42: #{encoder_layer.5} parent=39 // pred_check_branch
          %313 = sbr.rel (%p311) target = $region44
        $region43: #{encoder_layer.5} parent=39 // pred_region
          %314 = dma.done %s307, 512
        $region44: #{encoder_layer.5} parent=39 // pred_fallthru
          _
        // Predicated region
        $region45: #{encoder_layer.5} parent=39 // pred_check
          %p315 = pneg %p72
        $region46: #{encoder_layer.5} parent=39 // pred_check_branch
          %317 = sbr.rel (%p315) target = $region48
        $region47: #{encoder_layer.5} parent=39 // pred_region
          %318 = dma.done [#allocation6], 16
        $region48: #{encoder_layer.5} parent=39 // pred_fallthru
          _
        // Predicated region
        $region49: #{encoder_layer.5} parent=39 // pred_check
          %p319 = pneg %p93
        $region50: #{encoder_layer.5} parent=39 // pred_check_branch
          %321 = sbr.rel (%p319) target = $region52
        $region51: #{encoder_layer.5} parent=39 // pred_region
          %322 = dma.done [#allocation6], 16
        $region52: #{encoder_layer.5} parent=39 // pred_fallthru
          _
        // Predicated region
        $region53: #{encoder_layer.5} parent=39 // pred_check
          %p323 = pneg %p114
        $region54: #{encoder_layer.5} parent=39 // pred_check_branch
          %325 = sbr.rel (%p323) target = $region56
        $region55: #{encoder_layer.5} parent=39 // pred_region
          %326 = dma.done [#allocation9], 3072
        $region56: #{encoder_layer.5} parent=39 // pred_fallthru
          _
        // Predicated region
        $region57: #{encoder_layer.5} parent=39 // pred_check
          %p327 = pneg %p135
        $region58: #{encoder_layer.5} parent=39 // pred_check_branch
          %329 = sbr.rel (%p327) target = $region60
        $region59: #{encoder_layer.5} parent=39 // pred_region
          %330 = dma.done [#allocation9], 48
        $region60: #{encoder_layer.5} parent=39 // pred_fallthru
          _
        %s331 = sand.u32 %s38, 1
        %s332 = scalar_lea.sflag [#allocation3], %s331
        %s333 = sand.u32 %s38, 1
        %s334 = smul.addr %s333, 32
        %s335 = scalar_lea.vmem [#allocation2], %s334
        %p336 = pneg %p51
        %p337 = pneg %p48
        %p338 = pneg %p72
        %p339 = pneg %p69
        %p340 = pneg %p93
        %p341 = pneg %p90
        %p342 = pneg %p114
        %p343 = pneg %p111
        %p344 = pneg %p135
        %p345 = pneg %p132
        %p346 = pneg %p161
        %p347 = pneg %p158
        %s348 = sand.u32 %s148, 1
        %s349 = scalar_lea.sflag [#allocation4], %s348
        %s350 = sand.u32 %s148, 1
        %s351 = smul.addr %s350, 16
        %s352 = scalar_lea.vmem [#allocation11], %s351
        %p353 = pneg %p187
        %p354 = pneg %p184
        %s355 = sand.u32 %s30, 1
        %s356 = scalar_lea.sflag [#allocation13], %s355
        %s357 = sand.u32 %s174, 1
        %s358 = smul.addr %s357, 16
        %s359 = scalar_lea.vmem [#allocation12], %s358
        %p360 = pneg %p213
        %p361 = pneg %p210
        %s362 = sand.u32 %s30, 1
        %s363 = scalar_lea.sflag [#allocation13], %s362
        %s364 = sand.u32 %s200, 1
        %s365 = smul.addr %s364, 16
        %s366 = scalar_lea.vmem [#allocation14], %s365
        %s367 = smul.u32 4, %s30
        %s368 = smul.u32 4, %s30
        %s369 = smul.u32 4, %s30
        %s370 = smul.u32 4, %s30
        %v372 = vld [vmem:[%s310] sm:$0xff]
        %v373 = vld [vmem:[%s310 + $0x8] sm:$0xff]
        %v374 = vld [vmem:[%s310 + $0x10] sm:$0xff]
        %v375 = vld [vmem:[%s310 + $0x18] sm:$0xff]
        %v376 = vld [vmem:[#allocation5] sm:$0x1]
        %v378 = vlaneseq
        %v379 = vshrl.u32 %v378, 7
        %v380 = vsub.s32 0, %v379
        %v381 = vrot.slane %v376, %v380
        %v383 = vmul.f32 %v372, %v381
        %v384 = vmul.f32 %v373, %v381
        %v385 = vmul.f32 %v374, %v381
        %v386 = vmul.f32 %v375, %v381
        %v387 = vld [vmem:[#allocation7] sm:$0x1]
        %v389 = vlaneseq
        %v390 = vshrl.u32 %v389, 7
        %v391 = vsub.s32 0, %v390
        %v392 = vrot.slane %v387, %v391
        %v394 = vadd.f32 %v383, %v392
        %v395 = vadd.f32 %v384, %v392
        %v396 = vadd.f32 %v385, %v392
        %v397 = vadd.f32 %v386, %v392
        %v398 = vpack.c.bf16 %v395, %v394
        %v399 = vpack.c.bf16 %v397, %v396
        %v400 = vld [vmem:[#allocation8] sm:$0xff]
        %v401 = vld [vmem:[#allocation8 + $0x8] sm:$0xf]
        %v402 = vld [vmem:[#allocation8 + $0xc] sm:$0xff]
        %v403 = vld [vmem:[#allocation8 + $0x14] sm:$0xf]
        %v404 = vld [vmem:[#allocation8 + $0x18] sm:$0xff]
        %v405 = vld [vmem:[#allocation8 + $0x20] sm:$0xf]
        %v406 = vld [vmem:[#allocation8 + $0x24] sm:$0xff]
        %v407 = vld [vmem:[#allocation8 + $0x2c] sm:$0xf]
        %v408 = vld [vmem:[#allocation8 + $0x30] sm:$0xff]
        %v409 = vld [vmem:[#allocation8 + $0x38] sm:$0xf]
        %v410 = vld [vmem:[#allocation8 + $0x3c] sm:$0xff]
        %v411 = vld [vmem:[#allocation8 + $0x44] sm:$0xf]
        %v412 = vld [vmem:[#allocation8 + $0x48] sm:$0xff]
        %v413 = vld [vmem:[#allocation8 + $0x50] sm:$0xf]
        %v414 = vld [vmem:[#allocation8 + $0x54] sm:$0xff]
        %v415 = vld [vmem:[#allocation8 + $0x5c] sm:$0xf]
        %v416 = vld [vmem:[#allocation8 + $0x60] sm:$0xff]
        %v417 = vld [vmem:[#allocation8 + $0x68] sm:$0xf]
        %v418 = vld [vmem:[#allocation8 + $0x6c] sm:$0xff]
        %v419 = vld [vmem:[#allocation8 + $0x74] sm:$0xf]
        %v420 = vld [vmem:[#allocation8 + $0x78] sm:$0xff]
        %v421 = vld [vmem:[#allocation8 + $0x80] sm:$0xf]
        %v422 = vld [vmem:[#allocation8 + $0x84] sm:$0xff]
        %v423 = vld [vmem:[#allocation8 + $0x8c] sm:$0xf]
        %v424 = vld [vmem:[#allocation8 + $0x90] sm:$0xff]
        %v425 = vld [vmem:[#allocation8 + $0x98] sm:$0xf]
        %v426 = vld [vmem:[#allocation8 + $0x9c] sm:$0xff]
        %v427 = vld [vmem:[#allocation8 + $0xa4] sm:$0xf]
        %v428 = vld [vmem:[#allocation8 + $0xa8] sm:$0xff]
        %v429 = vld [vmem:[#allocation8 + $0xb0] sm:$0xf]
        %v430 = vld [vmem:[#allocation8 + $0xb4] sm:$0xff]
        %v431 = vld [vmem:[#allocation8 + $0xbc] sm:$0xf]
        %v432 = vld [vmem:[#allocation10] sm:$0x7]
        %v434 = vlaneseq
        %v435 = vshrl.u32 %v434, 7
        %v436 = vsub.s32 0, %v435
        %v437 = vrot.slane %v432, %v436
        %v438 = vlaneseq
        %v439 = vshrl.u32 %v438, 7
        %v440 = vsub.s32 1, %v439
        %v441 = vrot.slane %v432, %v440
        %v442 = vlaneseq
        %v443 = vshrl.u32 %v442, 7
        %v444 = vsub.s32 2, %v443
        %v445 = vrot.slane %v432, %v444
        %v481 = vunpack.c.l.b16 %v400
        %v482 = vunpack.c.h.b16 %v400
        %v483 = vunpack.c.l.b16 %v401
        %v484 = vunpack.c.l.b16 %v402
        %v485 = vunpack.c.h.b16 %v402
        %v486 = vunpack.c.l.b16 %v403
        %v487 = vunpack.c.l.b16 %v404
        %v488 = vunpack.c.h.b16 %v404
        %v489 = vunpack.c.l.b16 %v405
        %v490 = vunpack.c.l.b16 %v406
        %v491 = vunpack.c.h.b16 %v406
        %v492 = vunpack.c.l.b16 %v407
        %v493 = vunpack.c.l.b16 %v408
        %v494 = vunpack.c.h.b16 %v408
        %v495 = vunpack.c.l.b16 %v409
        %v496 = vunpack.c.l.b16 %v410
        %v497 = vunpack.c.h.b16 %v410
        %v498 = vunpack.c.l.b16 %v411
        %v499 = vunpack.c.l.b16 %v412
        %v500 = vunpack.c.h.b16 %v412
        %v501 = vunpack.c.l.b16 %v413
        %v502 = vunpack.c.l.b16 %v414
        %v503 = vunpack.c.h.b16 %v414
        %v504 = vunpack.c.l.b16 %v415
        %v505 = vunpack.c.l.b16 %v416
        %v506 = vunpack.c.h.b16 %v416
        %v507 = vunpack.c.l.b16 %v417
        %v508 = vunpack.c.l.b16 %v418
        %v509 = vunpack.c.h.b16 %v418
        %v510 = vunpack.c.l.b16 %v419
        %v511 = vunpack.c.l.b16 %v420
        %v512 = vunpack.c.h.b16 %v420
        %v513 = vunpack.c.l.b16 %v421
        %v514 = vunpack.c.l.b16 %v422
        %v515 = vunpack.c.h.b16 %v422
        %v516 = vunpack.c.l.b16 %v423
        %v517 = vunpack.c.l.b16 %v424
        %v518 = vunpack.c.h.b16 %v424
        %v519 = vunpack.c.l.b16 %v425
        %v520 = vunpack.c.l.b16 %v426
        %v521 = vunpack.c.h.b16 %v426
        %v522 = vunpack.c.l.b16 %v427
        %v523 = vunpack.c.l.b16 %v428
        %v524 = vunpack.c.h.b16 %v428
        %v525 = vunpack.c.l.b16 %v429
        %v526 = vunpack.c.l.b16 %v430
        %v527 = vunpack.c.h.b16 %v430
        %v528 = vunpack.c.l.b16 %v431
        %v529 = vpack.c.b16 %v484, %v481
        %v530 = vpack.c.b16 %v485, %v482
        %v531 = vpack.c.b16 %v486, %v483
        %v532 = vpack.c.b16 %v490, %v487
        %v533 = vpack.c.b16 %v491, %v488
        %v534 = vpack.c.b16 %v492, %v489
        %v535 = vpack.c.b16 %v496, %v493
        %v536 = vpack.c.b16 %v497, %v494
        %v537 = vpack.c.b16 %v498, %v495
        %v538 = vpack.c.b16 %v502, %v499
        %v539 = vpack.c.b16 %v503, %v500
        %v540 = vpack.c.b16 %v504, %v501
        %v541 = vpack.c.b16 %v508, %v505
        %v542 = vpack.c.b16 %v509, %v506
        %v543 = vpack.c.b16 %v510, %v507
        %v544 = vpack.c.b16 %v514, %v511
        %v545 = vpack.c.b16 %v515, %v512
        %v546 = vpack.c.b16 %v516, %v513
        %v547 = vpack.c.b16 %v520, %v517
        %v548 = vpack.c.b16 %v521, %v518
        %v549 = vpack.c.b16 %v522, %v519
        %v550 = vpack.c.b16 %v526, %v523
        %v551 = vpack.c.b16 %v527, %v524
        %v552 = vpack.c.b16 %v528, %v525
        %577 = vmatprep.subr.bf16.mxu0 %v530
        %578 = vmatpush1.bf16.msra.mxu0 %v529
        %579 = vmatprep.subr.bf16.mxu0 %v533
        %580 = vmatpush1.bf16.msra.mxu0 %v532
        %581 = vmatprep.subr.bf16.mxu0 %v536
        %582 = vmatpush1.bf16.msra.mxu0 %v535
        %583 = vmatprep.subr.bf16.mxu0 %v539
        %584 = vmatpush1.bf16.msra.mxu0 %v538
        %585 = vmatprep.subr.bf16.mxu0 %v542
        %586 = vmatpush1.bf16.msra.mxu0 %v541
        %587 = vmatprep.subr.bf16.mxu0 %v545
        %588 = vmatpush1.bf16.msra.mxu0 %v544
        %589 = vmatprep.subr.bf16.mxu0 %v548
        %590 = vmatpush1.bf16.msra.mxu0 %v547
        %591 = vmatprep.subr.bf16.mxu0 %v551
        %592 = vmatpush1.bf16.msra.mxu0 %v550
        %593 = vmatprep.subr.bf16.mxu0 0
        %594 = vmatpush1.bf16.msra.mxu0 0
        %595 = vmatprep.subr.bf16.mxu0 0
        %596 = vmatpush1.bf16.msra.mxu0 0
        %597 = vmatprep.subr.bf16.mxu0 0
        %598 = vmatpush1.bf16.msra.mxu0 0
        %599 = vmatprep.subr.bf16.mxu0 0
        %600 = vmatpush1.bf16.msra.mxu0 0
        %601 = vmatprep.subr.bf16.mxu0 0
        %602 = vmatpush1.bf16.msra.mxu0 0
        %603 = vmatprep.subr.bf16.mxu0 0
        %604 = vmatpush1.bf16.msra.mxu0 0
        %605 = vmatprep.subr.bf16.mxu0 0
        %606 = vmatpush1.bf16.msra.mxu0 0
        %607 = vmatprep.subr.bf16.mxu0 0
        %608 = vmatpush1.bf16.msra.mxu0 0
        %609 = vmatprep.mubr.bf16.mxu0 0
        %610 = vmatmul.mubr.bf16.gmra.mrb[0].mxu0 %v398
        %v611 = vpop.f32.mrb[0].mxu0
        %v612 = vadd.f32 %v437, %v611
        %v613 = vpop.f32.mrb[0].mxu0
        %v614 = vadd.f32 %v441, %v613
        %v615 = vpop.f32.mrb[0].mxu0
        %v616 = vadd.f32 %v437, %v615
        %v617 = vpop.f32.mrb[0].mxu0
        %v618 = vadd.f32 %v441, %v617
        %619 = vmatprep.mubr.bf16.mxu0 0
        %620 = vmatmul.mubr.bf16.gmra.mrb[0].mxu0 %v399
        %v621 = vpop.f32.mrb[0].mxu0
        %v622 = vadd.f32 %v437, %v621
        %v623 = vpop.f32.mrb[0].mxu0
        %v624 = vadd.f32 %v441, %v623
        %v625 = vpop.f32.mrb[0].mxu0
        %v626 = vadd.f32 %v437, %v625
        %v627 = vpop.f32.mrb[0].mxu0
        %v628 = vadd.f32 %v441, %v627
        %629 = vdwg.mxu0
        %630 = vmatprep.subr.bf16.mxu0 0
        %631 = vmatpush1.bf16.msra.mxu0 %v531
        %632 = vmatprep.subr.bf16.mxu0 0
        %633 = vmatpush1.bf16.msra.mxu0 %v534
        %634 = vmatprep.subr.bf16.mxu0 0
        %635 = vmatpush1.bf16.msra.mxu0 %v537
        %636 = vmatprep.subr.bf16.mxu0 0
        %637 = vmatpush1.bf16.msra.mxu0 %v540
        %638 = vmatprep.subr.bf16.mxu0 0
        %639 = vmatpush1.bf16.msra.mxu0 %v543
        %640 = vmatprep.subr.bf16.mxu0 0
        %641 = vmatpush1.bf16.msra.mxu0 %v546
        %642 = vmatprep.subr.bf16.mxu0 0
        %643 = vmatpush1.bf16.msra.mxu0 %v549
        %644 = vmatprep.subr.bf16.mxu0 0
        %645 = vmatpush1.bf16.msra.mxu0 %v552
        %646 = vmatprep.subr.bf16.mxu0 0
        %647 = vmatpush1.bf16.msra.mxu0 0
        %648 = vmatprep.subr.bf16.mxu0 0
        %649 = vmatpush1.bf16.msra.mxu0 0
        %650 = vmatprep.subr.bf16.mxu0 0
        %651 = vmatpush1.bf16.msra.mxu0 0
        %652 = vmatprep.subr.bf16.mxu0 0
        %653 = vmatpush1.bf16.msra.mxu0 0
        %654 = vmatprep.subr.bf16.mxu0 0
        %655 = vmatpush1.bf16.msra.mxu0 0
        %656 = vmatprep.subr.bf16.mxu0 0
        %657 = vmatpush1.bf16.msra.mxu0 0
        %658 = vmatprep.subr.bf16.mxu0 0
        %659 = vmatpush1.bf16.msra.mxu0 0
        %660 = vmatprep.subr.bf16.mxu0 0
        %661 = vmatpush1.bf16.msra.mxu0 0
        %662 = vmatprep.mubr.bf16.mxu0 0
        %663 = vmatmul.mubr.bf16.gmra.mrb[0].mxu0 %v398
        %v664 = vpop.f32.mrb[0].mxu0
        %v665 = vadd.f32 %v445, %v664
        %v666 = vpop.f32.mrb[0].mxu0
        %v667 = vpop.f32.mrb[0].mxu0
        %v668 = vadd.f32 %v445, %v667
        %v669 = vpop.f32.mrb[0].mxu0
        %670 = vmatprep.mubr.bf16.mxu0 0
        %671 = vmatmul.mubr.bf16.gmra.mrb[0].mxu0 %v399
        %v672 = vpop.f32.mrb[0].mxu0
        %v673 = vadd.f32 %v445, %v672
        %v674 = vpop.f32.mrb[0].mxu0
        %v675 = vpop.f32.mrb[0].mxu0
        %v676 = vadd.f32 %v445, %v675
        %v677 = vpop.f32.mrb[0].mxu0
        %678 = vdwg.mxu0
        %v679 = vpack.c.bf16 %v616, %v612
        %v680 = vpack.c.bf16 %v626, %v622
        %v683 = vunpack.c.l.b16 %v679
        %v684 = vunpack.c.h.b16 %v679
        %v685 = vunpack.c.l.b16 %v680
        %v686 = vunpack.c.h.b16 %v680
        %v687 = vpack.c.b16 %v683, %v683
        %v688 = vpack.c.b16 %v684, %v684
        %v689 = vpack.c.b16 %v685, %v685
        %v690 = vpack.c.b16 %v686, %v686
        %695 = vst [vmem:[%s352] sm:$0xf] %v687
        %696 = vst [vmem:[%s352 + $0x4] sm:$0xf] %v688
        %697 = vst [vmem:[%s352 + $0x8] sm:$0xf] %v689
        %698 = vst [vmem:[%s352 + $0xc] sm:$0xf] %v690
        %v699 = vpack.c.bf16 %v618, %v614
        %v700 = vpack.c.bf16 %v628, %v624
        %v703 = vunpack.c.l.b16 %v699
        %v704 = vunpack.c.h.b16 %v699
        %v705 = vunpack.c.l.b16 %v700
        %v706 = vunpack.c.h.b16 %v700
        %v707 = vpack.c.b16 %v703, %v703
        %v708 = vpack.c.b16 %v704, %v704
        %v709 = vpack.c.b16 %v705, %v705
        %v710 = vpack.c.b16 %v706, %v706
        %715 = vst [vmem:[%s359] sm:$0xf] %v707
        %716 = vst [vmem:[%s359 + $0x4] sm:$0xf] %v708
        %717 = vst [vmem:[%s359 + $0x8] sm:$0xf] %v709
        %718 = vst [vmem:[%s359 + $0xc] sm:$0xf] %v710
        %v719 = vpack.c.bf16 %v668, %v665
        %v720 = vpack.c.bf16 %v676, %v673
        %v723 = vunpack.c.l.b16 %v719
        %v724 = vunpack.c.h.b16 %v719
        %v725 = vunpack.c.l.b16 %v720
        %v726 = vunpack.c.h.b16 %v720
        %v727 = vpack.c.b16 %v723, %v723
        %v728 = vpack.c.b16 %v724, %v724
        %v729 = vpack.c.b16 %v725, %v725
        %v730 = vpack.c.b16 %v726, %v726
        %735 = vst [vmem:[%s366] sm:$0xf] %v727
        %736 = vst [vmem:[%s366 + $0x4] sm:$0xf] %v728
        %737 = vst [vmem:[%s366 + $0x8] sm:$0xf] %v729
        %738 = vst [vmem:[%s366 + $0xc] sm:$0xf] %v730
        %s739 = sand.u32 %s148, 1
        %s740 = scalar_lea.sflag [#allocation4], %s739
        %s741 = sand.u32 %s148, 1
        %s742 = smul.addr %s741, 16
        %s743 = scalar_lea.vmem [#allocation11], %s742
        %s744 = sand.u32 %s30, 1
        %s745 = scalar_lea.sflag [#allocation13], %s744
        %s746 = sand.u32 %s174, 1
        %s747 = smul.addr %s746, 16
        %s748 = scalar_lea.vmem [#allocation12], %s747
        %s749 = sand.u32 %s30, 1
        %s750 = scalar_lea.sflag [#allocation13], %s749
        %s751 = sand.u32 %s200, 1
        %s752 = smul.addr %s751, 16
        %s753 = scalar_lea.vmem [#allocation14], %s752
        // Predicated region
        $region61: #{encoder_layer.5} parent=39 // pred_check
          %p754 = pneg %p158
        $region62: #{encoder_layer.5} parent=39 // pred_check_branch
          %756 = sbr.rel (%p754) target = $region64
        $region63: #{encoder_layer.5} parent=39 // pred_region
          %s757 = smul.u32 4, %s30
          %s759 = ssub.s32 256, 256
          %760 = vsyncadd %s740, %s759
          %s761 = smul.addr %s757, 64
          %s762 = scalar_lea.hbm %s5, %s761
          %s763 = sshll.u32 %s743, 4
          %s764 = int_to_ptr.vmem [resolvable:$true] %s763
          %769 = dma.vmem_to_hbm [thread:$0]  %s764, 256, %s762, %s740, 64, 64, 4
        $region64: #{encoder_layer.5} parent=39 // pred_fallthru
          _
        // Predicated region
        $region65: #{encoder_layer.5} parent=39 // pred_check
          %p770 = pneg %p184
        $region66: #{encoder_layer.5} parent=39 // pred_check_branch
          %772 = sbr.rel (%p770) target = $region68
        $region67: #{encoder_layer.5} parent=39 // pred_region
          %s773 = smul.u32 4, %s30
          %s775 = ssub.s32 256, 256
          %776 = vsyncadd %s745, %s775
          %s777 = smul.addr %s773, 64
          %s778 = scalar_lea.hbm %s6, %s777
          %s779 = sshll.u32 %s748, 4
          %s780 = int_to_ptr.vmem [resolvable:$true] %s779
          %785 = dma.vmem_to_hbm [thread:$0]  %s780, 256, %s778, %s745, 64, 64, 4
        $region68: #{encoder_layer.5} parent=39 // pred_fallthru
          _
        // Predicated region
        $region69: #{encoder_layer.5} parent=39 // pred_check
          %p786 = pneg %p210
        $region70: #{encoder_layer.5} parent=39 // pred_check_branch
          %788 = sbr.rel (%p786) target = $region72
        $region71: #{encoder_layer.5} parent=39 // pred_region
          %s789 = smul.u32 4, %s30
          %s791 = ssub.s32 256, 256
          %792 = vsyncadd %s750, %s791
          %s793 = smul.addr %s789, 64
          %s794 = scalar_lea.hbm %s7, %s793
          %s795 = sshll.u32 %s753, 4
          %s796 = int_to_ptr.vmem [resolvable:$true] %s795
          %801 = dma.vmem_to_hbm [thread:$0]  %s796, 256, %s794, %s750, 64, 64, 4
        $region72: #{encoder_layer.5} parent=39 // pred_fallthru
          _
      $region40: #{encoder_layer.5} parent=5 // pred_fallthru
        _
      %p802 = scmp.le.s32.totalorder 2, %s25
      // Predicated region
      $region73: #{encoder_layer.5} parent=5 // pred_check
        %p803 = pneg %p802
      $region74: #{encoder_layer.5} parent=5 // pred_check_branch
        %805 = sbr.rel (%p803) target = $region76
      $region75: #{encoder_layer.5} parent=5 // pred_region
        %s806 = ssub.s32 %s25, 2
        // Predicated region
        $region77: #{encoder_layer.5} parent=75 // pred_check
          %p807 = pneg %p164
        $region78: #{encoder_layer.5} parent=75 // pred_check_branch
          %809 = sbr.rel (%p807) target = $region80
        $region79: #{encoder_layer.5} parent=75 // pred_region
          %s810 = sand.u32 %s149, 1
          %s811 = scalar_lea.sflag [#allocation4], %s810
          %s812 = sand.u32 %s149, 1
          %s813 = smul.addr %s812, 16
          %s814 = scalar_lea.vmem [#allocation11], %s813
          %815 = dma.done %s811, 256
        $region80: #{encoder_layer.5} parent=75 // pred_fallthru
          _
        // Predicated region
        $region81: #{encoder_layer.5} parent=75 // pred_check
          %p816 = pneg %p190
        $region82: #{encoder_layer.5} parent=75 // pred_check_branch
          %818 = sbr.rel (%p816) target = $region84
        $region83: #{encoder_layer.5} parent=75 // pred_region
          %s819 = sand.u32 %s31, 1
          %s820 = scalar_lea.sflag [#allocation13], %s819
          %s821 = sand.u32 %s175, 1
          %s822 = smul.addr %s821, 16
          %s823 = scalar_lea.vmem [#allocation12], %s822
          %824 = dma.done %s820, 256
        $region84: #{encoder_layer.5} parent=75 // pred_fallthru
          _
        // Predicated region
        $region85: #{encoder_layer.5} parent=75 // pred_check
          %p825 = pneg %p216
        $region86: #{encoder_layer.5} parent=75 // pred_check_branch
          %827 = sbr.rel (%p825) target = $region88
        $region87: #{encoder_layer.5} parent=75 // pred_region
          %s828 = sand.u32 %s31, 1
          %s829 = scalar_lea.sflag [#allocation13], %s828
          %s830 = sand.u32 %s201, 1
          %s831 = smul.addr %s830, 16
          %s832 = scalar_lea.vmem [#allocation14], %s831
          %833 = dma.done %s829, 256
        $region88: #{encoder_layer.5} parent=75 // pred_fallthru
          _
      $region76: #{encoder_layer.5} parent=5 // pred_fallthru
        _
    $region6: #{encoder_layer.5} parent=1 // loop_footer
      %s29 = sadd.s32 1, %s25
    $region7: #{encoder_layer.5} parent=1 // loop_footer_branch
      %24 = sbr.rel target = $region3
    $region8: #{encoder_layer.5} parent=1 // loop_exit
      _
    %834 = vsyncpa [#allocation3], 1
    %s835 = scalar_lea.sflag [#allocation3], 1
    %836 = vsyncpa %s835, 1
    %837 = vsyncpa [#allocation6], 1
    %838 = vsyncpa [#allocation9], 1
    %839 = vsyncpa [#allocation4], 1
    %s840 = scalar_lea.sflag [#allocation4], 1
    %841 = vsyncpa %s840, 1
    %842 = vsyncpa [#allocation13], 1
    %s843 = scalar_lea.sflag [#allocation13], 1
    %844 = vsyncpa %s843, 1

// kernel: encoder_layer.6
$region0: #{encoder_layer.6}
  #allocation0 [shape = 'u32[]', space=smem, size = 0x4, offset = 0x4, fixed_abs, tag = 'smem constant byte address 0x4 - core index']
  #allocation1 [shape = 'u32[144,128]{1,0:T(1,128)}', space=vmem, size = 0x12000, scoped, tag = 'internal scratch']
  #allocation2 [shape = 'f32[16,1]{1,0:T(8,128)}', space=vmem, size = 0x2000, scoped, tag = 'scratch operand']
  #allocation3 [shape = 'f32[16,1]{1,0:T(8,128)}', space=vmem, size = 0x2000, scoped, tag = 'scratch operand']
  #allocation4 [shape = 'f32[16,128]{1,0:T(8,128)}', space=vmem, size = 0x2000, scoped, tag = 'scratch operand']
  %s0 = inlined_call_operand.hbm [shape: bf16[128,128], index: 0, kind: input, shape index: {}]
  %s1 = inlined_call_operand.hbm [shape: bf16[128,128], index: 1, kind: input, shape index: {}]
  %s2 = inlined_call_operand.hbm [shape: bf16[128,128], index: 2, kind: input, shape index: {}]
  %s3 = inlined_call_operand.hbm [shape: f32[128,128], index: 3, kind: input, shape index: {}]
  %s4 = inlined_call_operand.hbm [shape: bf16[128,128], index: 4, kind: input, shape index: {}]
  %s5 = inlined_call_operand.hbm [shape: f32[1,128], index: 5, kind: input, shape index: {}]
  %s6 = inlined_call_operand.hbm [shape: f32[128,128], index: 6, kind: output, shape index: {0}]
  %s7 = inlined_call_operand.hbm [shape: f32[8,8,128], index: 7, kind: output, shape index: {1}]
  %8 = xla_tuple %s6, %s7
  %s9 = sld [smem:[#allocation0]]
  $region97: #{encoder_layer.6} parent=0
    _
  %s11 = ssub.s32 1, %s9
  %s12 = scalar_select 0, %s11, %s9
  $region1: #{encoder_layer.6} parent=0
    #allocation5 [shape = 'u8[8192]{0}', space=vmem, size = 0x2000, scoped, tag = 'input window, operand 0']
    #allocation6 [shape = 's32[2]{0}', space=sflag, size = 0x8, scoped, tag = 'scoped memory for encoder_layer.6']
    #allocation7 [shape = 's32[2]{0}', space=sflag, size = 0x8, scoped, tag = 'scoped memory for encoder_layer.6']
    #allocation8 [shape = 'u8[32768]{0}', space=vmem, size = 0x8000, scoped, tag = 'input window, operand 1']
    #allocation9 [shape = 's32[2]{0}', space=sflag, size = 0x8, scoped, tag = 'scoped memory for encoder_layer.6']
    #allocation10 [shape = 'u8[32768]{0}', space=vmem, size = 0x8000, scoped, tag = 'input window, operand 2']
    #allocation11 [shape = 'u8[16384]{0}', space=vmem, size = 0x4000, scoped, tag = 'input window, operand 3']
    #allocation12 [shape = 's32[2]{0}', space=sflag, size = 0x8, scoped, tag = 'scoped memory for encoder_layer.6']
    #allocation13 [shape = 'u8[32768]{0}', space=vmem, size = 0x8000, scoped, tag = 'input window, operand 4, single buffered']
    #allocation14 [shape = 'u8[512]{0}', space=vmem, size = 0x400, scoped, tag = 'input window, operand 5, single buffered']
    #allocation15 [shape = 's32[1]{0}', space=sflag, size = 0x4, scoped, tag = 'scoped memory for encoder_layer.6']
    #allocation16 [shape = 'u8[16384]{0}', space=vmem, size = 0x4000, scoped, tag = 'output window, operand 0']
    #allocation17 [shape = 'u8[8192]{0}', space=vmem, size = 0x2000, scoped, tag = 'output window, operand 1']
    #allocation18 [shape = 's32[2]{0}', space=sflag, size = 0x8, scoped, tag = 'scoped memory for encoder_layer.6']
    %13 = vsyncpa [#allocation6], 0
    %s14 = scalar_lea.sflag [#allocation6], 1
    %15 = vsyncpa %s14, 0
    %16 = vsyncpa [#allocation9], 0
    %s17 = scalar_lea.sflag [#allocation9], 1
    %18 = vsyncpa %s17, 0
    %19 = vsyncpa [#allocation12], 0
    %s20 = scalar_lea.sflag [#allocation12], 1
    %21 = vsyncpa %s20, 0
    %22 = vsyncpa [#allocation15], 0
    %23 = vsyncpa [#allocation7], 0
    %s24 = scalar_lea.sflag [#allocation7], 1
    %25 = vsyncpa %s24, 0
    %26 = vsyncpa [#allocation18], 0
    %s27 = scalar_lea.sflag [#allocation18], 1
    %28 = vsyncpa %s27, 0
    loop: start=0, step=1, limit=18
    $region2: #{encoder_layer.6} parent=1 // loop_pre_header
      _
    $region3: #{encoder_layer.6} parent=1 // loop_header
      %s30 = sphi 0, %s34
      %p31 = scmp.ge.s32.totalorder %s30, 18
      %s37 = sphi 0, %s56
      %s38 = sphi 0, %s52
      %s39 = sphi 0, %s48
      %s40 = sphi 0, %s37
      %s41 = sphi 0, %s38
      %s42 = sphi 0, %s39
      %s43 = sphi 0, %s40
      %s44 = sphi 0, %s41
      %s45 = sphi 0, %s42
      %s63 = sphi 0, %s65
      %s66 = sphi 0, %s63
      %s67 = sphi 0, %s66
      %s83 = sphi 0, %s67
      %s89 = sphi 0, %s91
      %s92 = sphi 0, %s89
      %s93 = sphi 0, %s92
      %s109 = sphi 0, %s93
      %s115 = sphi 0, %s117
      %s118 = sphi 0, %s115
      %s119 = sphi 0, %s118
      %s135 = sphi 0, %s119
      %s145 = sphi 0, %s147
      %s148 = sphi 0, %s145
      %s149 = sphi 0, %s148
      %s165 = sphi 0, %s149
      %s169 = sphi 0, %s169
      %s171 = sphi 0, %s169
      %s172 = sphi 0, %s171
      %s186 = sphi 0, %s172
      %s190 = sphi 0, %s190
      %s192 = sphi 0, %s190
      %s193 = sphi 0, %s192
      %s207 = sphi 0, %s193
      %s217 = sphi 0, %s219
      %s220 = sphi 0, %s217
      %s221 = sphi 0, %s220
      %s237 = sphi 0, %s221
      %s247 = sphi 0, %s249
      %s250 = sphi 0, %s247
      %s251 = sphi 0, %s250
      %s267 = sphi 0, %s251
    $region4: #{encoder_layer.6} parent=1 // loop_header_branch
      %33 = sbr.rel (%p31) target = $region8
    $region5: #{encoder_layer.6} parent=1 // loop_body
      %s35 = ssub.s32 %s30, 1
      %s36 = ssub.s32 %s30, 2
      %s46 = sadd.s32 1, %s39
      %p47 = scmp.ge.s32.totalorder %s46, 2
      %s48 = scalar_select %p47, 0, %s46
      %s49 = sadd.s32 1, %s38
      %s50 = scalar_select %p47, %s49, %s38
      %p51 = scmp.ge.s32.totalorder %s50, 4
      %s52 = scalar_select %p51, 0, %s50
      %s53 = sadd.s32 1, %s37
      %s54 = scalar_select %p51, %s53, %s37
      %p55 = scmp.ge.s32.totalorder %s54, 2
      %s56 = scalar_select %p55, 0, %s54
      %s57 = smul.u32 %s37, 4
      %s58 = sadd.s32 %s57, %s38
      %s59 = smul.u32 %s56, 4
      %s60 = sadd.s32 %s59, %s52
      %s61 = ssub.s32 %s58, %s60
      %p62 = scmp.eq.s32.totalorder %s61, 0
      %s64 = sadd.s32 %s63, 1
      %s65 = scalar_select %p62, %s63, %s64
      %p68 = pneg %p62
      %p69 = scmp.eq.s32.totalorder %s30, 15
      %p70 = por %p68, %p69
      %p71 = scmp.ne.s32.totalorder %s63, %s66
      %p72 = scmp.eq.s32.totalorder %s30, 0
      %p73 = por %p71, %p72
      %p74 = scmp.ne.s32.totalorder %s63, %s66
      %p75 = scmp.eq.s32.totalorder %s35, 15
      %p76 = por %p74, %p75
      %p77 = scmp.ne.s32.totalorder %s66, %s67
      %p78 = scmp.eq.s32.totalorder %s35, 0
      %p79 = por %p77, %p78
      %p80 = scmp.ne.s32.totalorder %s66, %s67
      %p81 = scmp.eq.s32.totalorder %s36, 15
      %p82 = por %p80, %p81
      %p84 = scmp.ne.s32.totalorder %s67, %s83
      %p85 = scmp.eq.s32.totalorder %s36, 0
      %p86 = por %p84, %p85
      %s87 = ssub.s32 %s37, %s56
      %p88 = scmp.eq.s32.totalorder %s87, 0
      %s90 = sadd.s32 %s89, 1
      %s91 = scalar_select %p88, %s89, %s90
      %p94 = pneg %p88
      %p95 = scmp.eq.s32.totalorder %s30, 15
      %p96 = por %p94, %p95
      %p97 = scmp.ne.s32.totalorder %s89, %s92
      %p98 = scmp.eq.s32.totalorder %s30, 0
      %p99 = por %p97, %p98
      %p100 = scmp.ne.s32.totalorder %s89, %s92
      %p101 = scmp.eq.s32.totalorder %s35, 15
      %p102 = por %p100, %p101
      %p103 = scmp.ne.s32.totalorder %s92, %s93
      %p104 = scmp.eq.s32.totalorder %s35, 0
      %p105 = por %p103, %p104
      %p106 = scmp.ne.s32.totalorder %s92, %s93
      %p107 = scmp.eq.s32.totalorder %s36, 15
      %p108 = por %p106, %p107
      %p110 = scmp.ne.s32.totalorder %s93, %s109
      %p111 = scmp.eq.s32.totalorder %s36, 0
      %p112 = por %p110, %p111
      %s113 = ssub.s32 %s37, %s56
      %p114 = scmp.eq.s32.totalorder %s113, 0
      %s116 = sadd.s32 %s115, 1
      %s117 = scalar_select %p114, %s115, %s116
      %p120 = pneg %p114
      %p121 = scmp.eq.s32.totalorder %s30, 15
      %p122 = por %p120, %p121
      %p123 = scmp.ne.s32.totalorder %s115, %s118
      %p124 = scmp.eq.s32.totalorder %s30, 0
      %p125 = por %p123, %p124
      %p126 = scmp.ne.s32.totalorder %s115, %s118
      %p127 = scmp.eq.s32.totalorder %s35, 15
      %p128 = por %p126, %p127
      %p129 = scmp.ne.s32.totalorder %s118, %s119
      %p130 = scmp.eq.s32.totalorder %s35, 0
      %p131 = por %p129, %p130
      %p132 = scmp.ne.s32.totalorder %s118, %s119
      %p133 = scmp.eq.s32.totalorder %s36, 15
      %p134 = por %p132, %p133
      %p136 = scmp.ne.s32.totalorder %s119, %s135
      %p137 = scmp.eq.s32.totalorder %s36, 0
      %p138 = por %p136, %p137
      %s139 = smul.u32 %s37, 4
      %s140 = sadd.s32 %s139, %s38
      %s141 = smul.u32 %s56, 4
      %s142 = sadd.s32 %s141, %s52
      %s143 = ssub.s32 %s140, %s142
      %p144 = scmp.eq.s32.totalorder %s143, 0
      %s146 = sadd.s32 %s145, 1
      %s147 = scalar_select %p144, %s145, %s146
      %p150 = pneg %p144
      %p151 = scmp.eq.s32.totalorder %s30, 15
      %p152 = por %p150, %p151
      %p153 = scmp.ne.s32.totalorder %s145, %s148
      %p154 = scmp.eq.s32.totalorder %s30, 0
      %p155 = por %p153, %p154
      %p156 = scmp.ne.s32.totalorder %s145, %s148
      %p157 = scmp.eq.s32.totalorder %s35, 15
      %p158 = por %p156, %p157
      %p159 = scmp.ne.s32.totalorder %s148, %s149
      %p160 = scmp.eq.s32.totalorder %s35, 0
      %p161 = por %p159, %p160
      %p162 = scmp.ne.s32.totalorder %s148, %s149
      %p163 = scmp.eq.s32.totalorder %s36, 15
      %p164 = por %p162, %p163
      %p166 = scmp.ne.s32.totalorder %s149, %s165
      %p167 = scmp.eq.s32.totalorder %s36, 0
      %p168 = por %p166, %p167
      %s170 = sadd.s32 %s169, 1
      %p173 = scmp.eq.s32.totalorder %s30, 15
      %p174 = scmp.ne.s32.totalorder %s169, %s171
      %p175 = scmp.eq.s32.totalorder %s30, 0
      %p176 = por %p174, %p175
      %p177 = scmp.ne.s32.totalorder %s169, %s171
      %p178 = scmp.eq.s32.totalorder %s35, 15
      %p179 = por %p177, %p178
      %p180 = scmp.ne.s32.totalorder %s171, %s172
      %p181 = scmp.eq.s32.totalorder %s35, 0
      %p182 = por %p180, %p181
      %p183 = scmp.ne.s32.totalorder %s171, %s172
      %p184 = scmp.eq.s32.totalorder %s36, 15
      %p185 = por %p183, %p184
      %p187 = scmp.ne.s32.totalorder %s172, %s186
      %p188 = scmp.eq.s32.totalorder %s36, 0
      %p189 = por %p187, %p188
      %s191 = sadd.s32 %s190, 1
      %p194 = scmp.eq.s32.totalorder %s30, 15
      %p195 = scmp.ne.s32.totalorder %s190, %s192
      %p196 = scmp.eq.s32.totalorder %s30, 0
      %p197 = por %p195, %p196
      %p198 = scmp.ne.s32.totalorder %s190, %s192
      %p199 = scmp.eq.s32.totalorder %s35, 15
      %p200 = por %p198, %p199
      %p201 = scmp.ne.s32.totalorder %s192, %s193
      %p202 = scmp.eq.s32.totalorder %s35, 0
      %p203 = por %p201, %p202
      %p204 = scmp.ne.s32.totalorder %s192, %s193
      %p205 = scmp.eq.s32.totalorder %s36, 15
      %p206 = por %p204, %p205
      %p208 = scmp.ne.s32.totalorder %s193, %s207
      %p209 = scmp.eq.s32.totalorder %s36, 0
      %p210 = por %p208, %p209
      %s211 = smul.u32 %s37, 4
      %s212 = sadd.s32 %s211, %s38
      %s213 = smul.u32 %s56, 4
      %s214 = sadd.s32 %s213, %s52
      %s215 = ssub.s32 %s212, %s214
      %p216 = scmp.eq.s32.totalorder %s215, 0
      %s218 = sadd.s32 %s217, 1
      %s219 = scalar_select %p216, %s217, %s218
      %p222 = pneg %p216
      %p223 = scmp.eq.s32.totalorder %s30, 15
      %p224 = por %p222, %p223
      %p225 = scmp.ne.s32.totalorder %s217, %s220
      %p226 = scmp.eq.s32.totalorder %s30, 0
      %p227 = por %p225, %p226
      %p228 = scmp.ne.s32.totalorder %s217, %s220
      %p229 = scmp.eq.s32.totalorder %s35, 15
      %p230 = por %p228, %p229
      %p231 = scmp.ne.s32.totalorder %s220, %s221
      %p232 = scmp.eq.s32.totalorder %s35, 0
      %p233 = por %p231, %p232
      %p234 = scmp.ne.s32.totalorder %s220, %s221
      %p235 = scmp.eq.s32.totalorder %s36, 15
      %p236 = por %p234, %p235
      %p238 = scmp.ne.s32.totalorder %s221, %s237
      %p239 = scmp.eq.s32.totalorder %s36, 0
      %p240 = por %p238, %p239
      %s241 = smul.u32 %s37, 4
      %s242 = sadd.s32 %s241, %s38
      %s243 = smul.u32 %s56, 4
      %s244 = sadd.s32 %s243, %s52
      %s245 = ssub.s32 %s242, %s244
      %p246 = scmp.eq.s32.totalorder %s245, 0
      %s248 = sadd.s32 %s247, 1
      %s249 = scalar_select %p246, %s247, %s248
      %p252 = pneg %p246
      %p253 = scmp.eq.s32.totalorder %s30, 15
      %p254 = por %p252, %p253
      %p255 = scmp.ne.s32.totalorder %s247, %s250
      %p256 = scmp.eq.s32.totalorder %s30, 0
      %p257 = por %p255, %p256
      %p258 = scmp.ne.s32.totalorder %s247, %s250
      %p259 = scmp.eq.s32.totalorder %s35, 15
      %p260 = por %p258, %p259
      %p261 = scmp.ne.s32.totalorder %s250, %s251
      %p262 = scmp.eq.s32.totalorder %s35, 0
      %p263 = por %p261, %p262
      %p264 = scmp.ne.s32.totalorder %s250, %s251
      %p265 = scmp.eq.s32.totalorder %s36, 15
      %p266 = por %p264, %p265
      %p268 = scmp.ne.s32.totalorder %s251, %s267
      %p269 = scmp.eq.s32.totalorder %s36, 0
      %p270 = por %p268, %p269
      %p271 = scmp.le.s32.totalorder 1, %s30
      %p272 = scmp.lt.s32.totalorder %s30, 17
      %p273 = pnand %p271, %p272
      %p274 = pneg %p273
      // Predicated region
      $region9: #{encoder_layer.6} parent=5 // pred_check
        _
      $region10: #{encoder_layer.6} parent=5 // pred_check_branch
        %276 = sbr.rel (%p273) target = $region12
      $region11: #{encoder_layer.6} parent=5 // pred_region
        %s277 = ssub.s32 %s30, 1
        // Predicated region
        $region13: #{encoder_layer.6} parent=11 // pred_check
          %p278 = pneg %p182
        $region14: #{encoder_layer.6} parent=11 // pred_check_branch
          %280 = sbr.rel (%p278) target = $region16
        $region15: #{encoder_layer.6} parent=11 // pred_region
          %s282 = ssub.s32 1024, 1024
          %283 = vsyncadd [#allocation12], %s282
          %s284 = sshll.u32 [#allocation13], 4
          %s285 = int_to_ptr.vmem [resolvable:$true] %s284
          %290 = dma.hbm_to_vmem [thread:$0]  %s4, 1024, %s285, [#allocation12], 64, 64, 4
        $region16: #{encoder_layer.6} parent=11 // pred_fallthru
          _
        // Predicated region
        $region17: #{encoder_layer.6} parent=11 // pred_check
          %p291 = pneg %p203
        $region18: #{encoder_layer.6} parent=11 // pred_check_branch
          %293 = sbr.rel (%p291) target = $region20
        $region19: #{encoder_layer.6} parent=11 // pred_region
          %s295 = ssub.s32 16, 16
          %296 = vsyncadd [#allocation15], %s295
          %s298 = sshll.u32 [#allocation14], 4
          %s299 = int_to_ptr.vmem [resolvable:$true] %s298
          %301 = dma.hbm_to_vmem [thread:$0]  %s5, 16, %s299, [#allocation15]
        $region20: #{encoder_layer.6} parent=11 // pred_fallthru
          _
      $region12: #{encoder_layer.6} parent=5 // pred_fallthru
        _
      %p302 = scmp.lt.s32.totalorder %s30, 16
      // Predicated region
      $region21: #{encoder_layer.6} parent=5 // pred_check
        %p303 = pneg %p302
      $region22: #{encoder_layer.6} parent=5 // pred_check_branch
        %305 = sbr.rel (%p303) target = $region24
      $region23: #{encoder_layer.6} parent=5 // pred_region
        // Predicated region
        $region25: #{encoder_layer.6} parent=23 // pred_check
          %p306 = pneg %p73
        $region26: #{encoder_layer.6} parent=23 // pred_check_branch
          %308 = sbr.rel (%p306) target = $region28
        $region27: #{encoder_layer.6} parent=23 // pred_region
          %s309 = sand.u32 %s63, 1
          %s310 = scalar_lea.sflag [#allocation6], %s309
          %s311 = sand.u32 %s63, 1
          %s312 = smul.addr %s311, 8
          %s313 = scalar_lea.vmem [#allocation5], %s312
          %s314 = smul.u32 %s37, 4
          %s315 = sadd.s32 %s314, %s38
          %s316 = smul.u32 2, %s315
          %s318 = ssub.s32 128, 128
          %319 = vsyncadd %s310, %s318
          %s320 = smul.addr %s316, 64
          %s321 = scalar_lea.hbm %s0, %s320
          %s322 = sshll.u32 %s313, 4
          %s323 = int_to_ptr.vmem [resolvable:$true] %s322
          %328 = dma.hbm_to_vmem [thread:$0]  %s321, 128, %s323, %s310, 64, 64, 4
        $region28: #{encoder_layer.6} parent=23 // pred_fallthru
          _
        // Predicated region
        $region29: #{encoder_layer.6} parent=23 // pred_check
          %p329 = pneg %p99
        $region30: #{encoder_layer.6} parent=23 // pred_check_branch
          %331 = sbr.rel (%p329) target = $region32
        $region31: #{encoder_layer.6} parent=23 // pred_region
          %s332 = sand.u32 %s30, 1
          %s333 = scalar_lea.sflag [#allocation9], %s332
          %s334 = sand.u32 %s89, 1
          %s335 = smul.addr %s334, 32
          %s336 = scalar_lea.vmem [#allocation8], %s335
          %s337 = smul.u32 8, %s37
          %s339 = ssub.s32 512, 512
          %340 = vsyncadd %s333, %s339
          %s341 = smul.addr %s337, 64
          %s342 = scalar_lea.hbm %s1, %s341
          %s343 = sshll.u32 %s336, 4
          %s344 = int_to_ptr.vmem [resolvable:$true] %s343
          %349 = dma.hbm_to_vmem [thread:$0]  %s342, 512, %s344, %s333, 64, 64, 4
        $region32: #{encoder_layer.6} parent=23 // pred_fallthru
          _
        // Predicated region
        $region33: #{encoder_layer.6} parent=23 // pred_check
          %p350 = pneg %p125
        $region34: #{encoder_layer.6} parent=23 // pred_check_branch
          %352 = sbr.rel (%p350) target = $region36
        $region35: #{encoder_layer.6} parent=23 // pred_region
          %s353 = sand.u32 %s30, 1
          %s354 = scalar_lea.sflag [#allocation9], %s353
          %s355 = sand.u32 %s115, 1
          %s356 = smul.addr %s355, 32
          %s357 = scalar_lea.vmem [#allocation10], %s356
          %s358 = smul.u32 8, %s37
          %s360 = ssub.s32 512, 512
          %361 = vsyncadd %s354, %s360
          %s362 = smul.addr %s358, 64
          %s363 = scalar_lea.hbm %s2, %s362
          %s364 = sshll.u32 %s357, 4
          %s365 = int_to_ptr.vmem [resolvable:$true] %s364
          %370 = dma.hbm_to_vmem [thread:$0]  %s363, 512, %s365, %s354, 64, 64, 4
        $region36: #{encoder_layer.6} parent=23 // pred_fallthru
          _
        // Predicated region
        $region37: #{encoder_layer.6} parent=23 // pred_check
          %p371 = pneg %p155
        $region38: #{encoder_layer.6} parent=23 // pred_check_branch
          %373 = sbr.rel (%p371) target = $region40
        $region39: #{encoder_layer.6} parent=23 // pred_region
          %s374 = sand.u32 %s30, 1
          %s375 = scalar_lea.sflag [#allocation12], %s374
          %s376 = sand.u32 %s145, 1
          %s377 = smul.addr %s376, 16
          %s378 = scalar_lea.vmem [#allocation11], %s377
          %s379 = smul.u32 %s37, 4
          %s380 = sadd.s32 %s379, %s38
          %s381 = smul.u32 2, %s380
          %s383 = ssub.s32 256, 256
          %384 = vsyncadd %s375, %s383
          %s385 = smul.addr %s381, 128
          %s386 = scalar_lea.hbm %s3, %s385
          %s387 = sshll.u32 %s378, 4
          %s388 = int_to_ptr.vmem [resolvable:$true] %s387
          %393 = dma.hbm_to_vmem [thread:$0]  %s386, 256, %s388, %s375, 128, 128, 8
        $region40: #{encoder_layer.6} parent=23 // pred_fallthru
          _
      $region24: #{encoder_layer.6} parent=5 // pred_fallthru
        _
      %p394 = scmp.le.s32.totalorder 1, %s30
      %p395 = scmp.lt.s32.totalorder %s30, 17
      %p396 = pnand %p394, %p395
      %p397 = pneg %p396
      // Predicated region
      $region41: #{encoder_layer.6} parent=5 // pred_check
        _
      $region42: #{encoder_layer.6} parent=5 // pred_check_branch
        %399 = sbr.rel (%p396) target = $region44
      $region43: #{encoder_layer.6} parent=5 // pred_region
        %s400 = ssub.s32 %s30, 1
        %s401 = sand.u32 %s66, 1
        %s402 = scalar_lea.sflag [#allocation6], %s401
        %s403 = sand.u32 %s66, 1
        %s404 = smul.addr %s403, 8
        %s405 = scalar_lea.vmem [#allocation5], %s404
        // Predicated region
        $region45: #{encoder_layer.6} parent=43 // pred_check
          %p406 = pneg %p79
        $region46: #{encoder_layer.6} parent=43 // pred_check_branch
          %408 = sbr.rel (%p406) target = $region48
        $region47: #{encoder_layer.6} parent=43 // pred_region
          %409 = dma.done %s402, 128
        $region48: #{encoder_layer.6} parent=43 // pred_fallthru
          _
        %s410 = sand.u32 %s35, 1
        %s411 = scalar_lea.sflag [#allocation9], %s410
        %s412 = sand.u32 %s92, 1
        %s413 = smul.addr %s412, 32
        %s414 = scalar_lea.vmem [#allocation8], %s413
        // Predicated region
        $region49: #{encoder_layer.6} parent=43 // pred_check
          %p415 = pneg %p105
        $region50: #{encoder_layer.6} parent=43 // pred_check_branch
          %417 = sbr.rel (%p415) target = $region52
        $region51: #{encoder_layer.6} parent=43 // pred_region
          %418 = dma.done %s411, 512
        $region52: #{encoder_layer.6} parent=43 // pred_fallthru
          _
        %s419 = sand.u32 %s35, 1
        %s420 = scalar_lea.sflag [#allocation9], %s419
        %s421 = sand.u32 %s118, 1
        %s422 = smul.addr %s421, 32
        %s423 = scalar_lea.vmem [#allocation10], %s422
        // Predicated region
        $region53: #{encoder_layer.6} parent=43 // pred_check
          %p424 = pneg %p131
        $region54: #{encoder_layer.6} parent=43 // pred_check_branch
          %426 = sbr.rel (%p424) target = $region56
        $region55: #{encoder_layer.6} parent=43 // pred_region
          %427 = dma.done %s420, 512
        $region56: #{encoder_layer.6} parent=43 // pred_fallthru
          _
        %s428 = sand.u32 %s35, 1
        %s429 = scalar_lea.sflag [#allocation12], %s428
        %s430 = sand.u32 %s148, 1
        %s431 = smul.addr %s430, 16
        %s432 = scalar_lea.vmem [#allocation11], %s431
        // Predicated region
        $region57: #{encoder_layer.6} parent=43 // pred_check
          %p433 = pneg %p161
        $region58: #{encoder_layer.6} parent=43 // pred_check_branch
          %435 = sbr.rel (%p433) target = $region60
        $region59: #{encoder_layer.6} parent=43 // pred_region
          %436 = dma.done %s429, 256
        $region60: #{encoder_layer.6} parent=43 // pred_fallthru
          _
        // Predicated region
        $region61: #{encoder_layer.6} parent=43 // pred_check
          %p437 = pneg %p182
        $region62: #{encoder_layer.6} parent=43 // pred_check_branch
          %439 = sbr.rel (%p437) target = $region64
        $region63: #{encoder_layer.6} parent=43 // pred_region
          %440 = dma.done [#allocation12], 1024
        $region64: #{encoder_layer.6} parent=43 // pred_fallthru
          _
        // Predicated region
        $region65: #{encoder_layer.6} parent=43 // pred_check
          %p441 = pneg %p203
        $region66: #{encoder_layer.6} parent=43 // pred_check_branch
          %443 = sbr.rel (%p441) target = $region68
        $region67: #{encoder_layer.6} parent=43 // pred_region
          %444 = dma.done [#allocation15], 16
        $region68: #{encoder_layer.6} parent=43 // pred_fallthru
          _
        %s445 = sand.u32 %s66, 1
        %s446 = scalar_lea.sflag [#allocation6], %s445
        %s447 = sand.u32 %s66, 1
        %s448 = smul.addr %s447, 8
        %s449 = scalar_lea.vmem [#allocation5], %s448
        %p450 = pneg %p79
        %p451 = pneg %p76
        %s452 = sand.u32 %s35, 1
        %s453 = scalar_lea.sflag [#allocation9], %s452
        %s454 = sand.u32 %s92, 1
        %s455 = smul.addr %s454, 32
        %s456 = scalar_lea.vmem [#allocation8], %s455
        %p457 = pneg %p105
        %p458 = pneg %p102
        %s459 = sand.u32 %s35, 1
        %s460 = scalar_lea.sflag [#allocation9], %s459
        %s461 = sand.u32 %s118, 1
        %s462 = smul.addr %s461, 32
        %s463 = scalar_lea.vmem [#allocation10], %s462
        %p464 = pneg %p131
        %p465 = pneg %p128
        %s466 = sand.u32 %s35, 1
        %s467 = scalar_lea.sflag [#allocation12], %s466
        %s468 = sand.u32 %s148, 1
        %s469 = smul.addr %s468, 16
        %s470 = scalar_lea.vmem [#allocation11], %s469
        %p471 = pneg %p161
        %p472 = pneg %p158
        %p473 = pneg %p182
        %p474 = pneg %p179
        %p475 = pneg %p203
        %p476 = pneg %p200
        %p477 = pneg %p233
        %p478 = pneg %p230
        %s479 = sand.u32 %s220, 1
        %s480 = scalar_lea.sflag [#allocation7], %s479
        %s481 = sand.u32 %s220, 1
        %s482 = smul.addr %s481, 16
        %s483 = scalar_lea.vmem [#allocation16], %s482
        %p484 = pneg %p263
        %p485 = pneg %p260
        %s486 = sand.u32 %s250, 1
        %s487 = scalar_lea.sflag [#allocation18], %s486
        %s488 = sand.u32 %s250, 1
        %s489 = smul.addr %s488, 8
        %s490 = scalar_lea.vmem [#allocation17], %s489
        %s491 = smul.u32 %s40, 4
        %s492 = sadd.s32 %s491, %s41
        %s493 = smul.u32 2, %s492
        %s494 = smul.u32 8, %s40
        %s495 = smul.u32 8, %s40
        %s496 = smul.u32 %s40, 4
        %s497 = sadd.s32 %s496, %s41
        %s498 = smul.u32 2, %s497
        %s499 = smul.u32 %s40, 4
        %s500 = sadd.s32 %s499, %s41
        %s501 = smul.u32 2, %s500
        %s502 = smul.u32 %s40, 4
        %s503 = sadd.s32 %s502, %s41
        %p505 = scmp.eq.s32.totalorder %s42, 0
        // Predicated region
        $region69: #{encoder_layer.6} parent=43 // pred_check
          %p506 = pneg %p505
        $region70: #{encoder_layer.6} parent=43 // pred_check_branch
          %508 = sbr.rel (%p506) target = $region72
        $region71: #{encoder_layer.6} parent=43 // pred_region
          %vm509 = vcmask 7168
          %510 = vst.msk [vmem:[#allocation2] sm:$0xff] %vm509, -inf
          %511 = vst.msk [vmem:[#allocation2 + $0x8] sm:$0xff] %vm509, -inf
          %512 = vst.msk [vmem:[#allocation3] sm:$0xff] %vm509, 0.0
          %513 = vst.msk [vmem:[#allocation3 + $0x8] sm:$0xff] %vm509, 0.0
          %514 = vst [vmem:[#allocation4] sm:$0xff] 0.0
          %515 = vst [vmem:[#allocation4 + $0x8] sm:$0xff] 0.0
        $region72: #{encoder_layer.6} parent=43 // pred_fallthru
          _
        %s516 = smul.u32 %s42, 32
        %s517 = sshra.s32 %s516, 3
        %s518 = sand.u32 %s516, 7
        %s519 = smul.addr %s517, 4
        %s520 = scalar_lea.vmem %s414, %s519 [#allocation8]
        %v521 = vld [vmem:[%s520] sm:$0xf]
        %v522 = vld [vmem:[%s520 + $0x4] sm:$0xf]
        %v523 = vld [vmem:[%s520 + $0x8] sm:$0xf]
        %v524 = vld [vmem:[%s520 + $0xc] sm:$0xf]
        %s525 = smul.addr %s517, 4
        %s526 = scalar_lea.vmem %s423, %s525 [#allocation10]
        %v527 = vld [vmem:[%s526] sm:$0xf]
        %v528 = vld [vmem:[%s526 + $0x4] sm:$0xf]
        %v529 = vld [vmem:[%s526 + $0x8] sm:$0xf]
        %v530 = vld [vmem:[%s526 + $0xc] sm:$0xf]
        %v531 = vld [vmem:[%s405] sm:$0xf]
        %v532 = vld [vmem:[%s405 + $0x4] sm:$0xf]
        %v535 = vunpack.c.l.b16 %v531
        %v536 = vunpack.c.l.b16 %v532
        %v537 = vpack.c.b16 %v536, %v535
        %v543 = vunpack.c.l.b16 %v521
        %v544 = vunpack.c.l.b16 %v522
        %v545 = vunpack.c.l.b16 %v523
        %v546 = vunpack.c.l.b16 %v524
        %v547 = vpack.c.b16 %v544, %v543
        %v548 = vpack.c.b16 %v546, %v545
        %551 = vmatprep.subr.bf16.mxu0 0
        %552 = vmatpush1.bf16.xpose.msra.mxu0 %v547
        %553 = vmatprep.subr.bf16.mxu0 0
        %554 = vmatpush1.bf16.xpose.msra.mxu0 %v548
        %555 = vmatprep.subr.bf16.mxu0 0
        %556 = vmatpush1.bf16.xpose.msra.mxu0 0
        %557 = vmatprep.subr.bf16.mxu0 0
        %558 = vmatpush1.bf16.xpose.msra.mxu0 0
        %559 = vmatprep.subr.bf16.mxu0 0
        %560 = vmatpush1.bf16.xpose.msra.mxu0 0
        %561 = vmatprep.subr.bf16.mxu0 0
        %562 = vmatpush1.bf16.xpose.msra.mxu0 0
        %563 = vmatprep.subr.bf16.mxu0 0
        %564 = vmatpush1.bf16.xpose.msra.mxu0 0
        %565 = vmatprep.subr.bf16.mxu0 0
        %566 = vmatpush1.bf16.xpose.msra.mxu0 0
        %567 = vmatprep.subr.bf16.mxu0 0
        %568 = vmatpush1.bf16.xpose.msra.mxu0 0
        %569 = vmatprep.subr.bf16.mxu0 0
        %570 = vmatpush1.bf16.xpose.msra.mxu0 0
        %571 = vmatprep.subr.bf16.mxu0 0
        %572 = vmatpush1.bf16.xpose.msra.mxu0 0
        %573 = vmatprep.subr.bf16.mxu0 0
        %574 = vmatpush1.bf16.xpose.msra.mxu0 0
        %575 = vmatprep.subr.bf16.mxu0 0
        %576 = vmatpush1.bf16.xpose.msra.mxu0 0
        %577 = vmatprep.subr.bf16.mxu0 0
        %578 = vmatpush1.bf16.xpose.msra.mxu0 0
        %579 = vmatprep.subr.bf16.mxu0 0
        %580 = vmatpush1.bf16.xpose.msra.mxu0 0
        %581 = vmatprep.subr.bf16.mxu0 0
        %582 = vmatpush1.bf16.xpose.msra.mxu0 0
        %583 = vmatprep.mubr.bf16.mxu0 0
        %584 = vmatmul.mubr.bf16.gmra.mrb[0].mxu0 %v537
        %v585 = vpop.f32.mrb[0].mxu0
        %v586 = vadd.f32 0.0, %v585
        %v587 = vpop.f32.mrb[0].mxu0
        %v588 = vpop.f32.mrb[0].mxu0
        %v589 = vadd.f32 0.0, %v588
        %v590 = vpop.f32.mrb[0].mxu0
        %591 = vdwg.mxu0
        %v592 = vld [vmem:[#allocation2] sm:$0xff]
        %v593 = vld [vmem:[#allocation2 + $0x8] sm:$0xff]
        %vm594 = vcmask 261120
        %v595 = vsel %vm594, %v586, -inf
        %596 = vmax.xlane.f32.xlu0 %v595
        %v597 = vpop.xlane.xlu0 %596
        %v598 = vsel %vm594, %v589, -inf
        %599 = vmax.xlane.f32.xlu0 %v598
        %v600 = vpop.xlane.xlu0 %599
        %v601 = vmax.f32 %v592, %v597
        %v602 = vmax.f32 %v593, %v600
        %v603 = vsub.f32 %v592, %v601
        %v604 = vsub.f32 %v593, %v602
        %v605 = vmul.f32 %v603, 1.442695
        %v606 = vpow.pop %v605
        %v607 = vmul.f32 %v604, 1.442695
        %v608 = vpow.pop %v607
        %610 = vset.pattern.permute.xlu0 0
        %611 = vperm.xlu0 %610, %v601
        %v612 = vpop.permute.xlu0 %611
        %615 = vset.pattern.permute.xlu0 0
        %616 = vperm.xlu0 %615, %v602
        %v617 = vpop.permute.xlu0 %616
        %v619 = vsub.f32 %v586, %v612
        %v620 = vsub.f32 %v589, %v617
        %v621 = vmul.f32 %v619, 1.442695
        %v622 = vpow.pop %v621
        %v623 = vmul.f32 %v620, 1.442695
        %v624 = vpow.pop %v623
        %v625 = vld [vmem:[#allocation3] sm:$0xff]
        %v626 = vld [vmem:[#allocation3 + $0x8] sm:$0xff]
        %v627 = vmul.f32 %v606, %v625
        %v628 = vmul.f32 %v608, %v626
        %v629 = vsel %vm594, %v622, 0.0
        %630 = vadd.xlane.f32.xlu0 %v629
        %v631 = vpop.xlane.xlu0 %630
        %v632 = vsel %vm594, %v624, 0.0
        %633 = vadd.xlane.f32.xlu0 %v632
        %v634 = vpop.xlane.xlu0 %633
        %v635 = vadd.f32 %v627, %v631
        %v636 = vadd.f32 %v628, %v634
        %vm637 = vcmask 7168
        %638 = vst.msk [vmem:[#allocation3] sm:$0xff] %vm637, %v635
        %639 = vst.msk [vmem:[#allocation3 + $0x8] sm:$0xff] %vm637, %v636
        %v640 = vld [vmem:[#allocation4] sm:$0xff]
        %v641 = vld [vmem:[#allocation4 + $0x8] sm:$0xff]
        %643 = vset.pattern.permute.xlu0 0
        %644 = vperm.xlu0 %643, %v606
        %v645 = vpop.permute.xlu0 %644
        %648 = vset.pattern.permute.xlu0 0
        %649 = vperm.xlu0 %648, %v608
        %v650 = vpop.permute.xlu0 %649
        %v652 = vmul.f32 %v645, %v640
        %v653 = vmul.f32 %v650, %v641
        %v654 = vpack.c.bf16 %v624, %v622
        %v659 = vunpack.c.l.b16 %v527
        %v660 = vunpack.c.l.b16 %v528
        %v661 = vunpack.c.l.b16 %v529
        %v662 = vunpack.c.l.b16 %v530
        %v663 = vpack.c.b16 %v660, %v659
        %v664 = vpack.c.b16 %v662, %v661
        %v668 = vsel %vm594, %v654, 0
        %670 = vmatprep.subr.bf16.mxu0 0
        %671 = vmatpush1.bf16.msra.mxu0 %v663
        %672 = vmatprep.subr.bf16.mxu0 0
        %673 = vmatpush1.bf16.msra.mxu0 %v664
        %674 = vmatprep.subr.bf16.mxu0 0
        %675 = vmatpush1.bf16.msra.mxu0 0
        %676 = vmatprep.subr.bf16.mxu0 0
        %677 = vmatpush1.bf16.msra.mxu0 0
        %678 = vmatprep.subr.bf16.mxu0 0
        %679 = vmatpush1.bf16.msra.mxu0 0
        %680 = vmatprep.subr.bf16.mxu0 0
        %681 = vmatpush1.bf16.msra.mxu0 0
        %682 = vmatprep.subr.bf16.mxu0 0
        %683 = vmatpush1.bf16.msra.mxu0 0
        %684 = vmatprep.subr.bf16.mxu0 0
        %685 = vmatpush1.bf16.msra.mxu0 0
        %686 = vmatprep.subr.bf16.mxu0 0
        %687 = vmatpush1.bf16.msra.mxu0 0
        %688 = vmatprep.subr.bf16.mxu0 0
        %689 = vmatpush1.bf16.msra.mxu0 0
        %690 = vmatprep.subr.bf16.mxu0 0
        %691 = vmatpush1.bf16.msra.mxu0 0
        %692 = vmatprep.subr.bf16.mxu0 0
        %693 = vmatpush1.bf16.msra.mxu0 0
        %694 = vmatprep.subr.bf16.mxu0 0
        %695 = vmatpush1.bf16.msra.mxu0 0
        %696 = vmatprep.subr.bf16.mxu0 0
        %697 = vmatpush1.bf16.msra.mxu0 0
        %698 = vmatprep.subr.bf16.mxu0 0
        %699 = vmatpush1.bf16.msra.mxu0 0
        %700 = vmatprep.subr.bf16.mxu0 0
        %701 = vmatpush1.bf16.msra.mxu0 0
        %702 = vmatprep.mubr.bf16.mxu0 0
        %703 = vmatmul.mubr.bf16.gmra.mrb[0].mxu0 %v668
        %v704 = vpop.f32.mrb[0].mxu0
        %v705 = vadd.f32 0.0, %v704
        %v706 = vpop.f32.mrb[0].mxu0
        %v707 = vpop.f32.mrb[0].mxu0
        %v708 = vadd.f32 0.0, %v707
        %v709 = vpop.f32.mrb[0].mxu0
        %710 = vdwg.mxu0
        %v711 = vadd.f32 %v652, %v705
        %v712 = vadd.f32 %v653, %v708
        %713 = vst [vmem:[#allocation4] sm:$0xff] %v711
        %714 = vst [vmem:[#allocation4 + $0x8] sm:$0xff] %v712
        %715 = vst.msk [vmem:[#allocation2] sm:$0xff] %vm637, %v601
        %716 = vst.msk [vmem:[#allocation2 + $0x8] sm:$0xff] %vm637, %v602
        %p717 = scmp.eq.s32.totalorder %s42, 1
        // Predicated region
        $region73: #{encoder_layer.6} parent=43 // pred_check
          %p718 = pneg %p717
        $region74: #{encoder_layer.6} parent=43 // pred_check_branch
          %720 = sbr.rel (%p718) target = $region76
        $region75: #{encoder_layer.6} parent=43 // pred_region
          %v721 = vld [vmem:[#allocation4] sm:$0xff]
          %v722 = vld [vmem:[#allocation4 + $0x8] sm:$0xff]
          %v723 = vld [vmem:[#allocation3] sm:$0xff]
          %v724 = vld [vmem:[#allocation3 + $0x8] sm:$0xff]
          %v725 = vrcp.pop %v723
          %v726 = vrcp.pop %v724
          %728 = vset.pattern.permute.xlu0 0
          %729 = vperm.xlu0 %728, %v725
          %v730 = vpop.permute.xlu0 %729
          %733 = vset.pattern.permute.xlu0 0
          %734 = vperm.xlu0 %733, %v726
          %v735 = vpop.permute.xlu0 %734
          %v737 = vmul.f32 %v721, %v730
          %v738 = vmul.f32 %v722, %v735
          %v739 = vpack.c.bf16 %v738, %v737
          %v740 = vld [vmem:[#allocation13] sm:$0xf]
          %v741 = vld [vmem:[#allocation13 + $0x4] sm:$0xf]
          %v742 = vld [vmem:[#allocation13 + $0x8] sm:$0xf]
          %v743 = vld [vmem:[#allocation13 + $0xc] sm:$0xf]
          %v744 = vld [vmem:[#allocation13 + $0x10] sm:$0xf]
          %v745 = vld [vmem:[#allocation13 + $0x14] sm:$0xf]
          %v746 = vld [vmem:[#allocation13 + $0x18] sm:$0xf]
          %v747 = vld [vmem:[#allocation13 + $0x1c] sm:$0xf]
          %v748 = vld [vmem:[#allocation13 + $0x20] sm:$0xf]
          %v749 = vld [vmem:[#allocation13 + $0x24] sm:$0xf]
          %v750 = vld [vmem:[#allocation13 + $0x28] sm:$0xf]
          %v751 = vld [vmem:[#allocation13 + $0x2c] sm:$0xf]
          %v752 = vld [vmem:[#allocation13 + $0x30] sm:$0xf]
          %v753 = vld [vmem:[#allocation13 + $0x34] sm:$0xf]
          %v754 = vld [vmem:[#allocation13 + $0x38] sm:$0xf]
          %v755 = vld [vmem:[#allocation13 + $0x3c] sm:$0xf]
          %v756 = vld [vmem:[#allocation14] sm:$0x1]
          %v758 = vlaneseq
          %v759 = vshrl.u32 %v758, 7
          %v760 = vsub.s32 0, %v759
          %v761 = vrot.slane %v756, %v760
          %v779 = vunpack.c.l.b16 %v740
          %v780 = vunpack.c.l.b16 %v741
          %v781 = vunpack.c.l.b16 %v742
          %v782 = vunpack.c.l.b16 %v743
          %v783 = vunpack.c.l.b16 %v744
          %v784 = vunpack.c.l.b16 %v745
          %v785 = vunpack.c.l.b16 %v746
          %v786 = vunpack.c.l.b16 %v747
          %v787 = vunpack.c.l.b16 %v748
          %v788 = vunpack.c.l.b16 %v749
          %v789 = vunpack.c.l.b16 %v750
          %v790 = vunpack.c.l.b16 %v751
          %v791 = vunpack.c.l.b16 %v752
          %v792 = vunpack.c.l.b16 %v753
          %v793 = vunpack.c.l.b16 %v754
          %v794 = vunpack.c.l.b16 %v755
          %v795 = vpack.c.b16 %v780, %v779
          %v796 = vpack.c.b16 %v782, %v781
          %v797 = vpack.c.b16 %v784, %v783
          %v798 = vpack.c.b16 %v786, %v785
          %v799 = vpack.c.b16 %v788, %v787
          %v800 = vpack.c.b16 %v790, %v789
          %v801 = vpack.c.b16 %v792, %v791
          %v802 = vpack.c.b16 %v794, %v793
          %811 = vmatprep.subr.bf16.mxu0 0
          %812 = vmatpush1.bf16.msra.mxu0 %v795
          %813 = vmatprep.subr.bf16.mxu0 0
          %814 = vmatpush1.bf16.msra.mxu0 %v796
          %815 = vmatprep.subr.bf16.mxu0 0
          %816 = vmatpush1.bf16.msra.mxu0 %v797
          %817 = vmatprep.subr.bf16.mxu0 0
          %818 = vmatpush1.bf16.msra.mxu0 %v798
          %819 = vmatprep.subr.bf16.mxu0 0
          %820 = vmatpush1.bf16.msra.mxu0 %v799
          %821 = vmatprep.subr.bf16.mxu0 0
          %822 = vmatpush1.bf16.msra.mxu0 %v800
          %823 = vmatprep.subr.bf16.mxu0 0
          %824 = vmatpush1.bf16.msra.mxu0 %v801
          %825 = vmatprep.subr.bf16.mxu0 0
          %826 = vmatpush1.bf16.msra.mxu0 %v802
          %827 = vmatprep.subr.bf16.mxu0 0
          %828 = vmatpush1.bf16.msra.mxu0 0
          %829 = vmatprep.subr.bf16.mxu0 0
          %830 = vmatpush1.bf16.msra.mxu0 0
          %831 = vmatprep.subr.bf16.mxu0 0
          %832 = vmatpush1.bf16.msra.mxu0 0
          %833 = vmatprep.subr.bf16.mxu0 0
          %834 = vmatpush1.bf16.msra.mxu0 0
          %835 = vmatprep.subr.bf16.mxu0 0
          %836 = vmatpush1.bf16.msra.mxu0 0
          %837 = vmatprep.subr.bf16.mxu0 0
          %838 = vmatpush1.bf16.msra.mxu0 0
          %839 = vmatprep.subr.bf16.mxu0 0
          %840 = vmatpush1.bf16.msra.mxu0 0
          %841 = vmatprep.subr.bf16.mxu0 0
          %842 = vmatpush1.bf16.msra.mxu0 0
          %843 = vmatprep.mubr.bf16.mxu0 0
          %844 = vmatmul.mubr.bf16.gmra.mrb[0].mxu0 %v739
          %v845 = vpop.f32.mrb[0].mxu0
          %v846 = vadd.f32 %v761, %v845
          %v847 = vpop.f32.mrb[0].mxu0
          %v848 = vpop.f32.mrb[0].mxu0
          %v849 = vadd.f32 %v761, %v848
          %v850 = vpop.f32.mrb[0].mxu0
          %851 = vdwg.mxu0
          %v852 = vld [vmem:[%s432] sm:$0xff]
          %v853 = vld [vmem:[%s432 + $0x8] sm:$0xff]
          %v854 = vadd.f32 %v852, %v846
          %v855 = vadd.f32 %v853, %v849
          %856 = vst [vmem:[%s483] sm:$0xff] %v854
          %857 = vst [vmem:[%s483 + $0x8] sm:$0xff] %v855
          %v858 = vadd.f32 %v854, %v855
          %v859 = vrot.slane %v858, 4
          %v860 = vadd.f32 %v858, %v859
          %v861 = vrot.slane %v860, 2
          %v862 = vadd.f32 %v860, %v861
          %v863 = vrot.slane %v862, 1
          %v864 = vadd.f32 %v862, %v863
          %v865 = vmul.f32 %v854, %v854
          %v866 = vmul.f32 %v855, %v855
          %v867 = vadd.f32 %v865, %v866
          %v868 = vrot.slane %v867, 4
          %v869 = vadd.f32 %v867, %v868
          %v870 = vrot.slane %v869, 2
          %v871 = vadd.f32 %v869, %v870
          %v872 = vrot.slane %v871, 1
          %v873 = vadd.f32 %v871, %v872
          %v874 = vlaneseq
          %v875 = vshrl.u32 %v874, 7
          %vm876 = vcmp.eq.s32.totalorder %v875, 0
          %vm877 = vcmp.eq.s32.totalorder %v875, 1
          %v878 = vsel %vm877, %v873, 0.0
          %v879 = vsel %vm876, %v864, %v878
          %880 = vst [vmem:[%s490] sm:$0xff] %v879
        $region76: #{encoder_layer.6} parent=43 // pred_fallthru
          _
        %s881 = sand.u32 %s220, 1
        %s882 = scalar_lea.sflag [#allocation7], %s881
        %s883 = sand.u32 %s220, 1
        %s884 = smul.addr %s883, 16
        %s885 = scalar_lea.vmem [#allocation16], %s884
        %s886 = sand.u32 %s250, 1
        %s887 = scalar_lea.sflag [#allocation18], %s886
        %s888 = sand.u32 %s250, 1
        %s889 = smul.addr %s888, 8
        %s890 = scalar_lea.vmem [#allocation17], %s889
        // Predicated region
        $region77: #{encoder_layer.6} parent=43 // pred_check
          %p891 = pneg %p230
        $region78: #{encoder_layer.6} parent=43 // pred_check_branch
          %893 = sbr.rel (%p891) target = $region80
        $region79: #{encoder_layer.6} parent=43 // pred_region
          %s894 = smul.u32 %s40, 4
          %s895 = sadd.s32 %s894, %s41
          %s896 = smul.u32 2, %s895
          %s898 = ssub.s32 256, 256
          %899 = vsyncadd %s882, %s898
          %s900 = smul.addr %s896, 128
          %s901 = scalar_lea.hbm %s6, %s900
          %s902 = sshll.u32 %s885, 4
          %s903 = int_to_ptr.vmem [resolvable:$true] %s902
          %908 = dma.vmem_to_hbm [thread:$0]  %s903, 256, %s901, %s882, 128, 128, 8
        $region80: #{encoder_layer.6} parent=43 // pred_fallthru
          _
        // Predicated region
        $region81: #{encoder_layer.6} parent=43 // pred_check
          %p909 = pneg %p260
        $region82: #{encoder_layer.6} parent=43 // pred_check_branch
          %911 = sbr.rel (%p909) target = $region84
        $region83: #{encoder_layer.6} parent=43 // pred_region
          %s912 = smul.u32 %s40, 4
          %s913 = sadd.s32 %s912, %s41
          %s915 = ssub.s32 128, 128
          %916 = vsyncadd %s887, %s915
          %s917 = smul.addr %s913, 128
          %s918 = scalar_lea.hbm %s7, %s917
          %s920 = sshll.u32 %s890, 4
          %s921 = int_to_ptr.vmem [resolvable:$true] %s920
          %923 = dma.vmem_to_hbm [thread:$0]  %s921, 128, %s918, %s887
        $region84: #{encoder_layer.6} parent=43 // pred_fallthru
          _
      $region44: #{encoder_layer.6} parent=5 // pred_fallthru
        _
      %p924 = scmp.le.s32.totalorder 2, %s30
      // Predicated region
      $region85: #{encoder_layer.6} parent=5 // pred_check
        %p925 = pneg %p924
      $region86: #{encoder_layer.6} parent=5 // pred_check_branch
        %927 = sbr.rel (%p925) target = $region88
      $region87: #{encoder_layer.6} parent=5 // pred_region
        %s928 = ssub.s32 %s30, 2
        // Predicated region
        $region89: #{encoder_layer.6} parent=87 // pred_check
          %p929 = pneg %p236
        $region90: #{encoder_layer.6} parent=87 // pred_check_branch
          %931 = sbr.rel (%p929) target = $region92
        $region91: #{encoder_layer.6} parent=87 // pred_region
          %s932 = sand.u32 %s221, 1
          %s933 = scalar_lea.sflag [#allocation7], %s932
          %s934 = sand.u32 %s221, 1
          %s935 = smul.addr %s934, 16
          %s936 = scalar_lea.vmem [#allocation16], %s935
          %937 = dma.done %s933, 256
        $region92: #{encoder_layer.6} parent=87 // pred_fallthru
          _
        // Predicated region
        $region93: #{encoder_layer.6} parent=87 // pred_check
          %p938 = pneg %p266
        $region94: #{encoder_layer.6} parent=87 // pred_check_branch
          %940 = sbr.rel (%p938) target = $region96
        $region95: #{encoder_layer.6} parent=87 // pred_region
          %s941 = sand.u32 %s251, 1
          %s942 = scalar_lea.sflag [#allocation18], %s941
          %s943 = sand.u32 %s251, 1
          %s944 = smul.addr %s943, 8
          %s945 = scalar_lea.vmem [#allocation17], %s944
          %946 = dma.done %s942, 128
        $region96: #{encoder_layer.6} parent=87 // pred_fallthru
          _
      $region88: #{encoder_layer.6} parent=5 // pred_fallthru
        _
    $region6: #{encoder_layer.6} parent=1 // loop_footer
      %s34 = sadd.s32 1, %s30
    $region7: #{encoder_layer.6} parent=1 // loop_footer_branch
      %29 = sbr.rel target = $region3
    $region8: #{encoder_layer.6} parent=1 // loop_exit
      _
    %947 = vsyncpa [#allocation6], 1
    %s948 = scalar_lea.sflag [#allocation6], 1
    %949 = vsyncpa %s948, 1
    %950 = vsyncpa [#allocation9], 1
    %s951 = scalar_lea.sflag [#allocation9], 1
    %952 = vsyncpa %s951, 1
    %953 = vsyncpa [#allocation12], 1
    %s954 = scalar_lea.sflag [#allocation12], 1
    %955 = vsyncpa %s954, 1
    %956 = vsyncpa [#allocation15], 1
    %957 = vsyncpa [#allocation7], 1
    %s958 = scalar_lea.sflag [#allocation7], 1
    %959 = vsyncpa %s958, 1
    %960 = vsyncpa [#allocation18], 1
    %s961 = scalar_lea.sflag [#allocation18], 1
    %962 = vsyncpa %s961, 1

// kernel: encoder_layer.7
$region0: #{encoder_layer.7}
  #allocation0 [shape = 'u32[]', space=smem, size = 0x4, offset = 0x4, fixed_abs, tag = 'smem constant byte address 0x4 - core index']
  #allocation1 [shape = 'u32[144,128]{1,0:T(1,128)}', space=vmem, size = 0x12000, scoped, tag = 'internal scratch']
  %s0 = inlined_call_operand.hbm [shape: f32[128,128], index: 0, kind: input, shape index: {}]
  %s1 = inlined_call_operand.hbm [shape: f32[1,128], index: 1, kind: input, shape index: {}]
  %s2 = inlined_call_operand.hbm [shape: f32[1,128], index: 2, kind: input, shape index: {}]
  %s3 = inlined_call_operand.hbm [shape: bf16[128,256], index: 3, kind: input, shape index: {}]
  %s4 = inlined_call_operand.hbm [shape: f32[1,256], index: 4, kind: input, shape index: {}]
  %s5 = inlined_call_operand.hbm [shape: bf16[256,128], index: 5, kind: input, shape index: {}]
  %s6 = inlined_call_operand.hbm [shape: f32[1,128], index: 6, kind: input, shape index: {}]
  %s7 = inlined_call_operand.hbm [shape: f32[128,128], index: 7, kind: output, shape index: {}]
  %s8 = sld [smem:[#allocation0]]
  $region89: #{encoder_layer.7} parent=0
    _
  %s10 = ssub.s32 1, %s8
  %s11 = scalar_select 0, %s10, %s8
  $region1: #{encoder_layer.7} parent=0
    #allocation2 [shape = 'u8[32768]{0}', space=vmem, size = 0x8000, scoped, tag = 'input window, operand 0']
    #allocation3 [shape = 's32[2]{0}', space=sflag, size = 0x8, scoped, tag = 'scoped memory for encoder_layer.7']
    #allocation4 [shape = 's32[2]{0}', space=sflag, size = 0x8, scoped, tag = 'scoped memory for encoder_layer.7']
    #allocation5 [shape = 'u8[512]{0}', space=vmem, size = 0x400, scoped, tag = 'input window, operand 1, single buffered']
    #allocation6 [shape = 's32[1]{0}', space=sflag, size = 0x4, scoped, tag = 'scoped memory for encoder_layer.7']
    #allocation7 [shape = 'u8[512]{0}', space=vmem, size = 0x400, scoped, tag = 'input window, operand 2, single buffered']
    #allocation8 [shape = 'u8[65536]{0}', space=vmem, size = 0x10000, scoped, tag = 'input window, operand 3, single buffered']
    #allocation9 [shape = 's32[1]{0}', space=sflag, size = 0x4, scoped, tag = 'scoped memory for encoder_layer.7']
    #allocation10 [shape = 'u8[1024]{0}', space=vmem, size = 0x400, scoped, tag = 'input window, operand 4, single buffered']
    #allocation11 [shape = 'u8[65536]{0}', space=vmem, size = 0x10000, scoped, tag = 'input window, operand 5, single buffered']
    #allocation12 [shape = 's32[1]{0}', space=sflag, size = 0x4, scoped, tag = 'scoped memory for encoder_layer.7']
    #allocation13 [shape = 'u8[512]{0}', space=vmem, size = 0x400, scoped, tag = 'input window, operand 6, single buffered']
    #allocation14 [shape = 'u8[32768]{0}', space=vmem, size = 0x8000, scoped, tag = 'output window, operand 0']
    %12 = vsyncpa [#allocation3], 0
    %s13 = scalar_lea.sflag [#allocation3], 1
    %14 = vsyncpa %s13, 0
    %15 = vsyncpa [#allocation6], 0
    %16 = vsyncpa [#allocation9], 0
    %17 = vsyncpa [#allocation12], 0
    %18 = vsyncpa [#allocation4], 0
    %s19 = scalar_lea.sflag [#allocation4], 1
    %20 = vsyncpa %s19, 0
    loop: start=0, step=1, limit=6
    $region2: #{encoder_layer.7} parent=1 // loop_pre_header
      _
    $region3: #{encoder_layer.7} parent=1 // loop_header
      %s22 = sphi 0, %s26
      %p23 = scmp.ge.s32.totalorder %s22, 6
      %s32 = sphi 0, %s34
      %s35 = sphi 0, %s32
      %s36 = sphi 0, %s35
      %s52 = sphi 0, %s36
      %s56 = sphi 0, %s56
      %s58 = sphi 0, %s56
      %s59 = sphi 0, %s58
      %s73 = sphi 0, %s59
      %s77 = sphi 0, %s77
      %s79 = sphi 0, %s77
      %s80 = sphi 0, %s79
      %s94 = sphi 0, %s80
      %s98 = sphi 0, %s98
      %s100 = sphi 0, %s98
      %s101 = sphi 0, %s100
      %s115 = sphi 0, %s101
      %s119 = sphi 0, %s119
      %s121 = sphi 0, %s119
      %s122 = sphi 0, %s121
      %s136 = sphi 0, %s122
      %s140 = sphi 0, %s140
      %s142 = sphi 0, %s140
      %s143 = sphi 0, %s142
      %s157 = sphi 0, %s143
      %s161 = sphi 0, %s161
      %s163 = sphi 0, %s161
      %s164 = sphi 0, %s163
      %s178 = sphi 0, %s164
      %s184 = sphi 0, %s186
      %s187 = sphi 0, %s184
      %s188 = sphi 0, %s187
      %s204 = sphi 0, %s188
    $region4: #{encoder_layer.7} parent=1 // loop_header_branch
      %25 = sbr.rel (%p23) target = $region8
    $region5: #{encoder_layer.7} parent=1 // loop_body
      %s27 = ssub.s32 %s22, 1
      %s28 = ssub.s32 %s22, 2
      %s29 = sadd.s32 %s22, 1
      %s30 = ssub.s32 %s22, %s29
      %p31 = scmp.eq.s32.totalorder %s30, 0
      %s33 = sadd.s32 %s32, 1
      %s34 = scalar_select %p31, %s32, %s33
      %p37 = pneg %p31
      %p38 = scmp.eq.s32.totalorder %s22, 3
      %p39 = por %p37, %p38
      %p40 = scmp.ne.s32.totalorder %s32, %s35
      %p41 = scmp.eq.s32.totalorder %s22, 0
      %p42 = por %p40, %p41
      %p43 = scmp.ne.s32.totalorder %s32, %s35
      %p44 = scmp.eq.s32.totalorder %s27, 3
      %p45 = por %p43, %p44
      %p46 = scmp.ne.s32.totalorder %s35, %s36
      %p47 = scmp.eq.s32.totalorder %s27, 0
      %p48 = por %p46, %p47
      %p49 = scmp.ne.s32.totalorder %s35, %s36
      %p50 = scmp.eq.s32.totalorder %s28, 3
      %p51 = por %p49, %p50
      %p53 = scmp.ne.s32.totalorder %s36, %s52
      %p54 = scmp.eq.s32.totalorder %s28, 0
      %p55 = por %p53, %p54
      %s57 = sadd.s32 %s56, 1
      %p60 = scmp.eq.s32.totalorder %s22, 3
      %p61 = scmp.ne.s32.totalorder %s56, %s58
      %p62 = scmp.eq.s32.totalorder %s22, 0
      %p63 = por %p61, %p62
      %p64 = scmp.ne.s32.totalorder %s56, %s58
      %p65 = scmp.eq.s32.totalorder %s27, 3
      %p66 = por %p64, %p65
      %p67 = scmp.ne.s32.totalorder %s58, %s59
      %p68 = scmp.eq.s32.totalorder %s27, 0
      %p69 = por %p67, %p68
      %p70 = scmp.ne.s32.totalorder %s58, %s59
      %p71 = scmp.eq.s32.totalorder %s28, 3
      %p72 = por %p70, %p71
      %p74 = scmp.ne.s32.totalorder %s59, %s73
      %p75 = scmp.eq.s32.totalorder %s28, 0
      %p76 = por %p74, %p75
      %s78 = sadd.s32 %s77, 1
      %p81 = scmp.eq.s32.totalorder %s22, 3
      %p82 = scmp.ne.s32.totalorder %s77, %s79
      %p83 = scmp.eq.s32.totalorder %s22, 0
      %p84 = por %p82, %p83
      %p85 = scmp.ne.s32.totalorder %s77, %s79
      %p86 = scmp.eq.s32.totalorder %s27, 3
      %p87 = por %p85, %p86
      %p88 = scmp.ne.s32.totalorder %s79, %s80
      %p89 = scmp.eq.s32.totalorder %s27, 0
      %p90 = por %p88, %p89
      %p91 = scmp.ne.s32.totalorder %s79, %s80
      %p92 = scmp.eq.s32.totalorder %s28, 3
      %p93 = por %p91, %p92
      %p95 = scmp.ne.s32.totalorder %s80, %s94
      %p96 = scmp.eq.s32.totalorder %s28, 0
      %p97 = por %p95, %p96
      %s99 = sadd.s32 %s98, 1
      %p102 = scmp.eq.s32.totalorder %s22, 3
      %p103 = scmp.ne.s32.totalorder %s98, %s100
      %p104 = scmp.eq.s32.totalorder %s22, 0
      %p105 = por %p103, %p104
      %p106 = scmp.ne.s32.totalorder %s98, %s100
      %p107 = scmp.eq.s32.totalorder %s27, 3
      %p108 = por %p106, %p107
      %p109 = scmp.ne.s32.totalorder %s100, %s101
      %p110 = scmp.eq.s32.totalorder %s27, 0
      %p111 = por %p109, %p110
      %p112 = scmp.ne.s32.totalorder %s100, %s101
      %p113 = scmp.eq.s32.totalorder %s28, 3
      %p114 = por %p112, %p113
      %p116 = scmp.ne.s32.totalorder %s101, %s115
      %p117 = scmp.eq.s32.totalorder %s28, 0
      %p118 = por %p116, %p117
      %s120 = sadd.s32 %s119, 1
      %p123 = scmp.eq.s32.totalorder %s22, 3
      %p124 = scmp.ne.s32.totalorder %s119, %s121
      %p125 = scmp.eq.s32.totalorder %s22, 0
      %p126 = por %p124, %p125
      %p127 = scmp.ne.s32.totalorder %s119, %s121
      %p128 = scmp.eq.s32.totalorder %s27, 3
      %p129 = por %p127, %p128
      %p130 = scmp.ne.s32.totalorder %s121, %s122
      %p131 = scmp.eq.s32.totalorder %s27, 0
      %p132 = por %p130, %p131
      %p133 = scmp.ne.s32.totalorder %s121, %s122
      %p134 = scmp.eq.s32.totalorder %s28, 3
      %p135 = por %p133, %p134
      %p137 = scmp.ne.s32.totalorder %s122, %s136
      %p138 = scmp.eq.s32.totalorder %s28, 0
      %p139 = por %p137, %p138
      %s141 = sadd.s32 %s140, 1
      %p144 = scmp.eq.s32.totalorder %s22, 3
      %p145 = scmp.ne.s32.totalorder %s140, %s142
      %p146 = scmp.eq.s32.totalorder %s22, 0
      %p147 = por %p145, %p146
      %p148 = scmp.ne.s32.totalorder %s140, %s142
      %p149 = scmp.eq.s32.totalorder %s27, 3
      %p150 = por %p148, %p149
      %p151 = scmp.ne.s32.totalorder %s142, %s143
      %p152 = scmp.eq.s32.totalorder %s27, 0
      %p153 = por %p151, %p152
      %p154 = scmp.ne.s32.totalorder %s142, %s143
      %p155 = scmp.eq.s32.totalorder %s28, 3
      %p156 = por %p154, %p155
      %p158 = scmp.ne.s32.totalorder %s143, %s157
      %p159 = scmp.eq.s32.totalorder %s28, 0
      %p160 = por %p158, %p159
      %s162 = sadd.s32 %s161, 1
      %p165 = scmp.eq.s32.totalorder %s22, 3
      %p166 = scmp.ne.s32.totalorder %s161, %s163
      %p167 = scmp.eq.s32.totalorder %s22, 0
      %p168 = por %p166, %p167
      %p169 = scmp.ne.s32.totalorder %s161, %s163
      %p170 = scmp.eq.s32.totalorder %s27, 3
      %p171 = por %p169, %p170
      %p172 = scmp.ne.s32.totalorder %s163, %s164
      %p173 = scmp.eq.s32.totalorder %s27, 0
      %p174 = por %p172, %p173
      %p175 = scmp.ne.s32.totalorder %s163, %s164
      %p176 = scmp.eq.s32.totalorder %s28, 3
      %p177 = por %p175, %p176
      %p179 = scmp.ne.s32.totalorder %s164, %s178
      %p180 = scmp.eq.s32.totalorder %s28, 0
      %p181 = por %p179, %p180
      %s182 = ssub.s32 %s22, %s29
      %p183 = scmp.eq.s32.totalorder %s182, 0
      %s185 = sadd.s32 %s184, 1
      %s186 = scalar_select %p183, %s184, %s185
      %p189 = pneg %p183
      %p190 = scmp.eq.s32.totalorder %s22, 3
      %p191 = por %p189, %p190
      %p192 = scmp.ne.s32.totalorder %s184, %s187
      %p193 = scmp.eq.s32.totalorder %s22, 0
      %p194 = por %p192, %p193
      %p195 = scmp.ne.s32.totalorder %s184, %s187
      %p196 = scmp.eq.s32.totalorder %s27, 3
      %p197 = por %p195, %p196
      %p198 = scmp.ne.s32.totalorder %s187, %s188
      %p199 = scmp.eq.s32.totalorder %s27, 0
      %p200 = por %p198, %p199
      %p201 = scmp.ne.s32.totalorder %s187, %s188
      %p202 = scmp.eq.s32.totalorder %s28, 3
      %p203 = por %p201, %p202
      %p205 = scmp.ne.s32.totalorder %s188, %s204
      %p206 = scmp.eq.s32.totalorder %s28, 0
      %p207 = por %p205, %p206
      %p208 = scmp.le.s32.totalorder 1, %s22
      %p209 = scmp.lt.s32.totalorder %s22, 5
      %p210 = pnand %p208, %p209
      %p211 = pneg %p210
      // Predicated region
      $region9: #{encoder_layer.7} parent=5 // pred_check
        _
      $region10: #{encoder_layer.7} parent=5 // pred_check_branch
        %213 = sbr.rel (%p210) target = $region12
      $region11: #{encoder_layer.7} parent=5 // pred_region
        %s214 = ssub.s32 %s22, 1
        // Predicated region
        $region13: #{encoder_layer.7} parent=11 // pred_check
          %p215 = pneg %p69
        $region14: #{encoder_layer.7} parent=11 // pred_check_branch
          %217 = sbr.rel (%p215) target = $region16
        $region15: #{encoder_layer.7} parent=11 // pred_region
          %s219 = ssub.s32 16, 16
          %220 = vsyncadd [#allocation6], %s219
          %s222 = sshll.u32 [#allocation5], 4
          %s223 = int_to_ptr.vmem [resolvable:$true] %s222
          %225 = dma.hbm_to_vmem [thread:$0]  %s1, 16, %s223, [#allocation6]
        $region16: #{encoder_layer.7} parent=11 // pred_fallthru
          _
        // Predicated region
        $region17: #{encoder_layer.7} parent=11 // pred_check
          %p226 = pneg %p90
        $region18: #{encoder_layer.7} parent=11 // pred_check_branch
          %228 = sbr.rel (%p226) target = $region20
        $region19: #{encoder_layer.7} parent=11 // pred_region
          %s230 = ssub.s32 16, 16
          %231 = vsyncadd [#allocation6], %s230
          %s233 = sshll.u32 [#allocation7], 4
          %s234 = int_to_ptr.vmem [resolvable:$true] %s233
          %236 = dma.hbm_to_vmem [thread:$0]  %s2, 16, %s234, [#allocation6]
        $region20: #{encoder_layer.7} parent=11 // pred_fallthru
          _
        // Predicated region
        $region21: #{encoder_layer.7} parent=11 // pred_check
          %p237 = pneg %p111
        $region22: #{encoder_layer.7} parent=11 // pred_check_branch
          %239 = sbr.rel (%p237) target = $region24
        $region23: #{encoder_layer.7} parent=11 // pred_region
          %s241 = ssub.s32 2048, 2048
          %242 = vsyncadd [#allocation9], %s241
          %s243 = sshll.u32 [#allocation8], 4
          %s244 = int_to_ptr.vmem [resolvable:$true] %s243
          %249 = dma.hbm_to_vmem [thread:$0]  %s3, 2048, %s244, [#allocation9], 128, 128, 8
        $region24: #{encoder_layer.7} parent=11 // pred_fallthru
          _
        // Predicated region
        $region25: #{encoder_layer.7} parent=11 // pred_check
          %p250 = pneg %p132
        $region26: #{encoder_layer.7} parent=11 // pred_check_branch
          %252 = sbr.rel (%p250) target = $region28
        $region27: #{encoder_layer.7} parent=11 // pred_region
          %s254 = ssub.s32 32, 32
          %255 = vsyncadd [#allocation9], %s254
          %s257 = sshll.u32 [#allocation10], 4
          %s258 = int_to_ptr.vmem [resolvable:$true] %s257
          %260 = dma.hbm_to_vmem [thread:$0]  %s4, 32, %s258, [#allocation9]
        $region28: #{encoder_layer.7} parent=11 // pred_fallthru
          _
        // Predicated region
        $region29: #{encoder_layer.7} parent=11 // pred_check
          %p261 = pneg %p153
        $region30: #{encoder_layer.7} parent=11 // pred_check_branch
          %263 = sbr.rel (%p261) target = $region32
        $region31: #{encoder_layer.7} parent=11 // pred_region
          %s265 = ssub.s32 2048, 2048
          %266 = vsyncadd [#allocation12], %s265
          %s267 = sshll.u32 [#allocation11], 4
          %s268 = int_to_ptr.vmem [resolvable:$true] %s267
          %273 = dma.hbm_to_vmem [thread:$0]  %s5, 2048, %s268, [#allocation12], 64, 64, 4
        $region32: #{encoder_layer.7} parent=11 // pred_fallthru
          _
        // Predicated region
        $region33: #{encoder_layer.7} parent=11 // pred_check
          %p274 = pneg %p174
        $region34: #{encoder_layer.7} parent=11 // pred_check_branch
          %276 = sbr.rel (%p274) target = $region36
        $region35: #{encoder_layer.7} parent=11 // pred_region
          %s278 = ssub.s32 16, 16
          %279 = vsyncadd [#allocation12], %s278
          %s281 = sshll.u32 [#allocation13], 4
          %s282 = int_to_ptr.vmem [resolvable:$true] %s281
          %284 = dma.hbm_to_vmem [thread:$0]  %s6, 16, %s282, [#allocation12]
        $region36: #{encoder_layer.7} parent=11 // pred_fallthru
          _
      $region12: #{encoder_layer.7} parent=5 // pred_fallthru
        _
      %p285 = scmp.lt.s32.totalorder %s22, 4
      // Predicated region
      $region37: #{encoder_layer.7} parent=5 // pred_check
        %p286 = pneg %p285
      $region38: #{encoder_layer.7} parent=5 // pred_check_branch
        %288 = sbr.rel (%p286) target = $region40
      $region39: #{encoder_layer.7} parent=5 // pred_region
        // Predicated region
        $region41: #{encoder_layer.7} parent=39 // pred_check
          %p289 = pneg %p42
        $region42: #{encoder_layer.7} parent=39 // pred_check_branch
          %291 = sbr.rel (%p289) target = $region44
        $region43: #{encoder_layer.7} parent=39 // pred_region
          %s292 = sand.u32 %s32, 1
          %s293 = scalar_lea.sflag [#allocation3], %s292
          %s294 = sand.u32 %s32, 1
          %s295 = smul.addr %s294, 32
          %s296 = scalar_lea.vmem [#allocation2], %s295
          %s297 = smul.u32 4, %s22
          %s299 = ssub.s32 512, 512
          %300 = vsyncadd %s293, %s299
          %s301 = smul.addr %s297, 128
          %s302 = scalar_lea.hbm %s0, %s301
          %s303 = sshll.u32 %s296, 4
          %s304 = int_to_ptr.vmem [resolvable:$true] %s303
          %309 = dma.hbm_to_vmem [thread:$0]  %s302, 512, %s304, %s293, 128, 128, 8
        $region44: #{encoder_layer.7} parent=39 // pred_fallthru
          _
      $region40: #{encoder_layer.7} parent=5 // pred_fallthru
        _
      %p310 = scmp.le.s32.totalorder 1, %s22
      %p311 = scmp.lt.s32.totalorder %s22, 5
      %p312 = pnand %p310, %p311
      %p313 = pneg %p312
      // Predicated region
      $region45: #{encoder_layer.7} parent=5 // pred_check
        _
      $region46: #{encoder_layer.7} parent=5 // pred_check_branch
        %315 = sbr.rel (%p312) target = $region48
      $region47: #{encoder_layer.7} parent=5 // pred_region
        %s316 = ssub.s32 %s22, 1
        %s317 = sand.u32 %s35, 1
        %s318 = scalar_lea.sflag [#allocation3], %s317
        %s319 = sand.u32 %s35, 1
        %s320 = smul.addr %s319, 32
        %s321 = scalar_lea.vmem [#allocation2], %s320
        // Predicated region
        $region49: #{encoder_layer.7} parent=47 // pred_check
          %p322 = pneg %p48
        $region50: #{encoder_layer.7} parent=47 // pred_check_branch
          %324 = sbr.rel (%p322) target = $region52
        $region51: #{encoder_layer.7} parent=47 // pred_region
          %325 = dma.done %s318, 512
        $region52: #{encoder_layer.7} parent=47 // pred_fallthru
          _
        // Predicated region
        $region53: #{encoder_layer.7} parent=47 // pred_check
          %p326 = pneg %p69
        $region54: #{encoder_layer.7} parent=47 // pred_check_branch
          %328 = sbr.rel (%p326) target = $region56
        $region55: #{encoder_layer.7} parent=47 // pred_region
          %329 = dma.done [#allocation6], 16
        $region56: #{encoder_layer.7} parent=47 // pred_fallthru
          _
        // Predicated region
        $region57: #{encoder_layer.7} parent=47 // pred_check
          %p330 = pneg %p90
        $region58: #{encoder_layer.7} parent=47 // pred_check_branch
          %332 = sbr.rel (%p330) target = $region60
        $region59: #{encoder_layer.7} parent=47 // pred_region
          %333 = dma.done [#allocation6], 16
        $region60: #{encoder_layer.7} parent=47 // pred_fallthru
          _
        // Predicated region
        $region61: #{encoder_layer.7} parent=47 // pred_check
          %p334 = pneg %p111
        $region62: #{encoder_layer.7} parent=47 // pred_check_branch
          %336 = sbr.rel (%p334) target = $region64
        $region63: #{encoder_layer.7} parent=47 // pred_region
          %337 = dma.done [#allocation9], 2048
        $region64: #{encoder_layer.7} parent=47 // pred_fallthru
          _
        // Predicated region
        $region65: #{encoder_layer.7} parent=47 // pred_check
          %p338 = pneg %p132
        $region66: #{encoder_layer.7} parent=47 // pred_check_branch
          %340 = sbr.rel (%p338) target = $region68
        $region67: #{encoder_layer.7} parent=47 // pred_region
          %341 = dma.done [#allocation9], 32
        $region68: #{encoder_layer.7} parent=47 // pred_fallthru
          _
        // Predicated region
        $region69: #{encoder_layer.7} parent=47 // pred_check
          %p342 = pneg %p153
        $region70: #{encoder_layer.7} parent=47 // pred_check_branch
          %344 = sbr.rel (%p342) target = $region72
        $region71: #{encoder_layer.7} parent=47 // pred_region
          %345 = dma.done [#allocation12], 2048
        $region72: #{encoder_layer.7} parent=47 // pred_fallthru
          _
        // Predicated region
        $region73: #{encoder_layer.7} parent=47 // pred_check
          %p346 = pneg %p174
        $region74: #{encoder_layer.7} parent=47 // pred_check_branch
          %348 = sbr.rel (%p346) target = $region76
        $region75: #{encoder_layer.7} parent=47 // pred_region
          %349 = dma.done [#allocation12], 16
        $region76: #{encoder_layer.7} parent=47 // pred_fallthru
          _
        %s350 = sand.u32 %s35, 1
        %s351 = scalar_lea.sflag [#allocation3], %s350
        %s352 = sand.u32 %s35, 1
        %s353 = smul.addr %s352, 32
        %s354 = scalar_lea.vmem [#allocation2], %s353
        %p355 = pneg %p48
        %p356 = pneg %p45
        %p357 = pneg %p69
        %p358 = pneg %p66
        %p359 = pneg %p90
        %p360 = pneg %p87
        %p361 = pneg %p111
        %p362 = pneg %p108
        %p363 = pneg %p132
        %p364 = pneg %p129
        %p365 = pneg %p153
        %p366 = pneg %p150
        %p367 = pneg %p174
        %p368 = pneg %p171
        %p369 = pneg %p200
        %p370 = pneg %p197
        %s371 = sand.u32 %s187, 1
        %s372 = scalar_lea.sflag [#allocation4], %s371
        %s373 = sand.u32 %s187, 1
        %s374 = smul.addr %s373, 32
        %s375 = scalar_lea.vmem [#allocation14], %s374
        %s376 = smul.u32 4, %s27
        %s377 = smul.u32 4, %s27
        %v379 = vld [vmem:[%s321] sm:$0xff]
        %v380 = vld [vmem:[%s321 + $0x8] sm:$0xff]
        %v381 = vld [vmem:[%s321 + $0x10] sm:$0xff]
        %v382 = vld [vmem:[%s321 + $0x18] sm:$0xff]
        %v383 = vld [vmem:[#allocation5] sm:$0x1]
        %v385 = vlaneseq
        %v386 = vshrl.u32 %v385, 7
        %v387 = vsub.s32 0, %v386
        %v388 = vrot.slane %v383, %v387
        %v390 = vmul.f32 %v379, %v388
        %v391 = vmul.f32 %v380, %v388
        %v392 = vmul.f32 %v381, %v388
        %v393 = vmul.f32 %v382, %v388
        %v394 = vld [vmem:[#allocation7] sm:$0x1]
        %v396 = vlaneseq
        %v397 = vshrl.u32 %v396, 7
        %v398 = vsub.s32 0, %v397
        %v399 = vrot.slane %v394, %v398
        %v401 = vadd.f32 %v390, %v399
        %v402 = vadd.f32 %v391, %v399
        %v403 = vadd.f32 %v392, %v399
        %v404 = vadd.f32 %v393, %v399
        %v405 = vpack.c.bf16 %v402, %v401
        %v406 = vpack.c.bf16 %v404, %v403
        %v407 = vld [vmem:[#allocation13] sm:$0x1]
        %v409 = vlaneseq
        %v410 = vshrl.u32 %v409, 7
        %v411 = vsub.s32 0, %v410
        %v412 = vrot.slane %v407, %v411
        %v414 = vadd.f32 %v379, %v412
        %v415 = vadd.f32 %v380, %v412
        %v416 = vadd.f32 %v381, %v412
        %v417 = vadd.f32 %v382, %v412
        %v418 = vld [vmem:[#allocation8] sm:$0xf]
        %v419 = vld [vmem:[#allocation8 + $0x8] sm:$0xf]
        %v420 = vld [vmem:[#allocation8 + $0x10] sm:$0xf]
        %v421 = vld [vmem:[#allocation8 + $0x18] sm:$0xf]
        %v422 = vld [vmem:[#allocation8 + $0x20] sm:$0xf]
        %v423 = vld [vmem:[#allocation8 + $0x28] sm:$0xf]
        %v424 = vld [vmem:[#allocation8 + $0x30] sm:$0xf]
        %v425 = vld [vmem:[#allocation8 + $0x38] sm:$0xf]
        %v426 = vld [vmem:[#allocation8 + $0x40] sm:$0xf]
        %v427 = vld [vmem:[#allocation8 + $0x48] sm:$0xf]
        %v428 = vld [vmem:[#allocation8 + $0x50] sm:$0xf]
        %v429 = vld [vmem:[#allocation8 + $0x58] sm:$0xf]
        %v430 = vld [vmem:[#allocation8 + $0x60] sm:$0xf]
        %v431 = vld [vmem:[#allocation8 + $0x68] sm:$0xf]
        %v432 = vld [vmem:[#allocation8 + $0x70] sm:$0xf]
        %v433 = vld [vmem:[#allocation8 + $0x78] sm:$0xf]
        %v434 = vld [vmem:[#allocation10] sm:$0x1]
        %v436 = vlaneseq
        %v437 = vshrl.u32 %v436, 7
        %v438 = vsub.s32 0, %v437
        %v439 = vrot.slane %v434, %v438
        %v457 = vunpack.c.l.b16 %v418
        %v458 = vunpack.c.l.b16 %v419
        %v459 = vunpack.c.l.b16 %v420
        %v460 = vunpack.c.l.b16 %v421
        %v461 = vunpack.c.l.b16 %v422
        %v462 = vunpack.c.l.b16 %v423
        %v463 = vunpack.c.l.b16 %v424
        %v464 = vunpack.c.l.b16 %v425
        %v465 = vunpack.c.l.b16 %v426
        %v466 = vunpack.c.l.b16 %v427
        %v467 = vunpack.c.l.b16 %v428
        %v468 = vunpack.c.l.b16 %v429
        %v469 = vunpack.c.l.b16 %v430
        %v470 = vunpack.c.l.b16 %v431
        %v471 = vunpack.c.l.b16 %v432
        %v472 = vunpack.c.l.b16 %v433
        %v473 = vpack.c.b16 %v458, %v457
        %v474 = vpack.c.b16 %v460, %v459
        %v475 = vpack.c.b16 %v462, %v461
        %v476 = vpack.c.b16 %v464, %v463
        %v477 = vpack.c.b16 %v466, %v465
        %v478 = vpack.c.b16 %v468, %v467
        %v479 = vpack.c.b16 %v470, %v469
        %v480 = vpack.c.b16 %v472, %v471
        %489 = vmatprep.subr.bf16.mxu0 0
        %490 = vmatpush1.bf16.msra.mxu0 %v473
        %491 = vmatprep.subr.bf16.mxu0 0
        %492 = vmatpush1.bf16.msra.mxu0 %v474
        %493 = vmatprep.subr.bf16.mxu0 0
        %494 = vmatpush1.bf16.msra.mxu0 %v475
        %495 = vmatprep.subr.bf16.mxu0 0
        %496 = vmatpush1.bf16.msra.mxu0 %v476
        %497 = vmatprep.subr.bf16.mxu0 0
        %498 = vmatpush1.bf16.msra.mxu0 %v477
        %499 = vmatprep.subr.bf16.mxu0 0
        %500 = vmatpush1.bf16.msra.mxu0 %v478
        %501 = vmatprep.subr.bf16.mxu0 0
        %502 = vmatpush1.bf16.msra.mxu0 %v479
        %503 = vmatprep.subr.bf16.mxu0 0
        %504 = vmatpush1.bf16.msra.mxu0 %v480
        %505 = vmatprep.subr.bf16.mxu0 0
        %506 = vmatpush1.bf16.msra.mxu0 0
        %507 = vmatprep.subr.bf16.mxu0 0
        %508 = vmatpush1.bf16.msra.mxu0 0
        %509 = vmatprep.subr.bf16.mxu0 0
        %510 = vmatpush1.bf16.msra.mxu0 0
        %511 = vmatprep.subr.bf16.mxu0 0
        %512 = vmatpush1.bf16.msra.mxu0 0
        %513 = vmatprep.subr.bf16.mxu0 0
        %514 = vmatpush1.bf16.msra.mxu0 0
        %515 = vmatprep.subr.bf16.mxu0 0
        %516 = vmatpush1.bf16.msra.mxu0 0
        %517 = vmatprep.subr.bf16.mxu0 0
        %518 = vmatpush1.bf16.msra.mxu0 0
        %519 = vmatprep.subr.bf16.mxu0 0
        %520 = vmatpush1.bf16.msra.mxu0 0
        %521 = vmatprep.mubr.bf16.mxu0 0
        %522 = vmatmul.mubr.bf16.gmra.mrb[0].mxu0 %v405
        %v523 = vpop.f32.mrb[0].mxu0
        %v524 = vadd.f32 %v439, %v523
        %v525 = vpop.f32.mrb[0].mxu0
        %v526 = vpop.f32.mrb[0].mxu0
        %v527 = vadd.f32 %v439, %v526
        %v528 = vpop.f32.mrb[0].mxu0
        %529 = vmatprep.mubr.bf16.mxu0 0
        %530 = vmatmul.mubr.bf16.gmra.mrb[0].mxu0 %v406
        %v531 = vpop.f32.mrb[0].mxu0
        %v532 = vadd.f32 %v439, %v531
        %v533 = vpop.f32.mrb[0].mxu0
        %v534 = vpop.f32.mrb[0].mxu0
        %v535 = vadd.f32 %v439, %v534
        %v536 = vpop.f32.mrb[0].mxu0
        %537 = vdwg.mxu0
        %v538 = vmax.f32 %v524, 0.0
        %v539 = vmax.f32 %v527, 0.0
        %v540 = vmax.f32 %v532, 0.0
        %v541 = vmax.f32 %v535, 0.0
        %v542 = vpack.c.bf16 %v539, %v538
        %v543 = vpack.c.bf16 %v541, %v540
        %v544 = vld [vmem:[#allocation11] sm:$0xf]
        %v545 = vld [vmem:[#allocation11 + $0x4] sm:$0xf]
        %v546 = vld [vmem:[#allocation11 + $0x8] sm:$0xf]
        %v547 = vld [vmem:[#allocation11 + $0xc] sm:$0xf]
        %v548 = vld [vmem:[#allocation11 + $0x10] sm:$0xf]
        %v549 = vld [vmem:[#allocation11 + $0x14] sm:$0xf]
        %v550 = vld [vmem:[#allocation11 + $0x18] sm:$0xf]
        %v551 = vld [vmem:[#allocation11 + $0x1c] sm:$0xf]
        %v552 = vld [vmem:[#allocation11 + $0x20] sm:$0xf]
        %v553 = vld [vmem:[#allocation11 + $0x24] sm:$0xf]
        %v554 = vld [vmem:[#allocation11 + $0x28] sm:$0xf]
        %v555 = vld [vmem:[#allocation11 + $0x2c] sm:$0xf]
        %v556 = vld [vmem:[#allocation11 + $0x30] sm:$0xf]
        %v557 = vld [vmem:[#allocation11 + $0x34] sm:$0xf]
        %v558 = vld [vmem:[#allocation11 + $0x38] sm:$0xf]
        %v559 = vld [vmem:[#allocation11 + $0x3c] sm:$0xf]
        %v576 = vunpack.c.l.b16 %v544
        %v577 = vunpack.c.l.b16 %v545
        %v578 = vunpack.c.l.b16 %v546
        %v579 = vunpack.c.l.b16 %v547
        %v580 = vunpack.c.l.b16 %v548
        %v581 = vunpack.c.l.b16 %v549
        %v582 = vunpack.c.l.b16 %v550
        %v583 = vunpack.c.l.b16 %v551
        %v584 = vunpack.c.l.b16 %v552
        %v585 = vunpack.c.l.b16 %v553
        %v586 = vunpack.c.l.b16 %v554
        %v587 = vunpack.c.l.b16 %v555
        %v588 = vunpack.c.l.b16 %v556
        %v589 = vunpack.c.l.b16 %v557
        %v590 = vunpack.c.l.b16 %v558
        %v591 = vunpack.c.l.b16 %v559
        %v592 = vpack.c.b16 %v577, %v576
        %v593 = vpack.c.b16 %v579, %v578
        %v594 = vpack.c.b16 %v581, %v580
        %v595 = vpack.c.b16 %v583, %v582
        %v596 = vpack.c.b16 %v585, %v584
        %v597 = vpack.c.b16 %v587, %v586
        %v598 = vpack.c.b16 %v589, %v588
        %v599 = vpack.c.b16 %v591, %v590
        %608 = vmatprep.subr.bf16.mxu0 0
        %609 = vmatpush1.bf16.msra.mxu0 %v592
        %610 = vmatprep.subr.bf16.mxu0 0
        %611 = vmatpush1.bf16.msra.mxu0 %v593
        %612 = vmatprep.subr.bf16.mxu0 0
        %613 = vmatpush1.bf16.msra.mxu0 %v594
        %614 = vmatprep.subr.bf16.mxu0 0
        %615 = vmatpush1.bf16.msra.mxu0 %v595
        %616 = vmatprep.subr.bf16.mxu0 0
        %617 = vmatpush1.bf16.msra.mxu0 %v596
        %618 = vmatprep.subr.bf16.mxu0 0
        %619 = vmatpush1.bf16.msra.mxu0 %v597
        %620 = vmatprep.subr.bf16.mxu0 0
        %621 = vmatpush1.bf16.msra.mxu0 %v598
        %622 = vmatprep.subr.bf16.mxu0 0
        %623 = vmatpush1.bf16.msra.mxu0 %v599
        %624 = vmatprep.subr.bf16.mxu0 0
        %625 = vmatpush1.bf16.msra.mxu0 0
        %626 = vmatprep.subr.bf16.mxu0 0
        %627 = vmatpush1.bf16.msra.mxu0 0
        %628 = vmatprep.subr.bf16.mxu0 0
        %629 = vmatpush1.bf16.msra.mxu0 0
        %630 = vmatprep.subr.bf16.mxu0 0
        %631 = vmatpush1.bf16.msra.mxu0 0
        %632 = vmatprep.subr.bf16.mxu0 0
        %633 = vmatpush1.bf16.msra.mxu0 0
        %634 = vmatprep.subr.bf16.mxu0 0
        %635 = vmatpush1.bf16.msra.mxu0 0
        %636 = vmatprep.subr.bf16.mxu0 0
        %637 = vmatpush1.bf16.msra.mxu0 0
        %638 = vmatprep.subr.bf16.mxu0 0
        %639 = vmatpush1.bf16.msra.mxu0 0
        %640 = vmatprep.mubr.bf16.mxu0 0
        %641 = vmatmul.mubr.bf16.gmra.mrb[0].mxu0 %v542
        %v642 = vpop.f32.mrb[0].mxu0
        %v643 = vadd.f32 0.0, %v642
        %v644 = vpop.f32.mrb[0].mxu0
        %v645 = vpop.f32.mrb[0].mxu0
        %v646 = vadd.f32 0.0, %v645
        %v647 = vpop.f32.mrb[0].mxu0
        %648 = vmatprep.mubr.bf16.mxu0 0
        %649 = vmatmul.mubr.bf16.gmra.mrb[0].mxu0 %v543
        %v650 = vpop.f32.mrb[0].mxu0
        %v651 = vadd.f32 0.0, %v650
        %v652 = vpop.f32.mrb[0].mxu0
        %v653 = vpop.f32.mrb[0].mxu0
        %v654 = vadd.f32 0.0, %v653
        %v655 = vpop.f32.mrb[0].mxu0
        %656 = vdwg.mxu0
        %v657 = vadd.f32 %v414, %v643
        %v658 = vadd.f32 %v415, %v646
        %v659 = vadd.f32 %v416, %v651
        %v660 = vadd.f32 %v417, %v654
        %v661 = vld [vmem:[#allocation8 + $0x4] sm:$0xf]
        %v662 = vld [vmem:[#allocation8 + $0xc] sm:$0xf]
        %v663 = vld [vmem:[#allocation8 + $0x14] sm:$0xf]
        %v664 = vld [vmem:[#allocation8 + $0x1c] sm:$0xf]
        %v665 = vld [vmem:[#allocation8 + $0x24] sm:$0xf]
        %v666 = vld [vmem:[#allocation8 + $0x2c] sm:$0xf]
        %v667 = vld [vmem:[#allocation8 + $0x34] sm:$0xf]
        %v668 = vld [vmem:[#allocation8 + $0x3c] sm:$0xf]
        %v669 = vld [vmem:[#allocation8 + $0x44] sm:$0xf]
        %v670 = vld [vmem:[#allocation8 + $0x4c] sm:$0xf]
        %v671 = vld [vmem:[#allocation8 + $0x54] sm:$0xf]
        %v672 = vld [vmem:[#allocation8 + $0x5c] sm:$0xf]
        %v673 = vld [vmem:[#allocation8 + $0x64] sm:$0xf]
        %v674 = vld [vmem:[#allocation8 + $0x6c] sm:$0xf]
        %v675 = vld [vmem:[#allocation8 + $0x74] sm:$0xf]
        %v676 = vld [vmem:[#allocation8 + $0x7c] sm:$0xf]
        %v677 = vld [vmem:[#allocation10 + $0x1] sm:$0x1]
        %v679 = vlaneseq
        %v680 = vshrl.u32 %v679, 7
        %v681 = vsub.s32 0, %v680
        %v682 = vrot.slane %v677, %v681
        %v700 = vunpack.c.l.b16 %v661
        %v701 = vunpack.c.l.b16 %v662
        %v702 = vunpack.c.l.b16 %v663
        %v703 = vunpack.c.l.b16 %v664
        %v704 = vunpack.c.l.b16 %v665
        %v705 = vunpack.c.l.b16 %v666
        %v706 = vunpack.c.l.b16 %v667
        %v707 = vunpack.c.l.b16 %v668
        %v708 = vunpack.c.l.b16 %v669
        %v709 = vunpack.c.l.b16 %v670
        %v710 = vunpack.c.l.b16 %v671
        %v711 = vunpack.c.l.b16 %v672
        %v712 = vunpack.c.l.b16 %v673
        %v713 = vunpack.c.l.b16 %v674
        %v714 = vunpack.c.l.b16 %v675
        %v715 = vunpack.c.l.b16 %v676
        %v716 = vpack.c.b16 %v701, %v700
        %v717 = vpack.c.b16 %v703, %v702
        %v718 = vpack.c.b16 %v705, %v704
        %v719 = vpack.c.b16 %v707, %v706
        %v720 = vpack.c.b16 %v709, %v708
        %v721 = vpack.c.b16 %v711, %v710
        %v722 = vpack.c.b16 %v713, %v712
        %v723 = vpack.c.b16 %v715, %v714
        %732 = vmatprep.subr.bf16.mxu0 0
        %733 = vmatpush1.bf16.msra.mxu0 %v716
        %734 = vmatprep.subr.bf16.mxu0 0
        %735 = vmatpush1.bf16.msra.mxu0 %v717
        %736 = vmatprep.subr.bf16.mxu0 0
        %737 = vmatpush1.bf16.msra.mxu0 %v718
        %738 = vmatprep.subr.bf16.mxu0 0
        %739 = vmatpush1.bf16.msra.mxu0 %v719
        %740 = vmatprep.subr.bf16.mxu0 0
        %741 = vmatpush1.bf16.msra.mxu0 %v720
        %742 = vmatprep.subr.bf16.mxu0 0
        %743 = vmatpush1.bf16.msra.mxu0 %v721
        %744 = vmatprep.subr.bf16.mxu0 0
        %745 = vmatpush1.bf16.msra.mxu0 %v722
        %746 = vmatprep.subr.bf16.mxu0 0
        %747 = vmatpush1.bf16.msra.mxu0 %v723
        %748 = vmatprep.subr.bf16.mxu0 0
        %749 = vmatpush1.bf16.msra.mxu0 0
        %750 = vmatprep.subr.bf16.mxu0 0
        %751 = vmatpush1.bf16.msra.mxu0 0
        %752 = vmatprep.subr.bf16.mxu0 0
        %753 = vmatpush1.bf16.msra.mxu0 0
        %754 = vmatprep.subr.bf16.mxu0 0
        %755 = vmatpush1.bf16.msra.mxu0 0
        %756 = vmatprep.subr.bf16.mxu0 0
        %757 = vmatpush1.bf16.msra.mxu0 0
        %758 = vmatprep.subr.bf16.mxu0 0
        %759 = vmatpush1.bf16.msra.mxu0 0
        %760 = vmatprep.subr.bf16.mxu0 0
        %761 = vmatpush1.bf16.msra.mxu0 0
        %762 = vmatprep.subr.bf16.mxu0 0
        %763 = vmatpush1.bf16.msra.mxu0 0
        %764 = vmatprep.mubr.bf16.mxu0 0
        %765 = vmatmul.mubr.bf16.gmra.mrb[0].mxu0 %v405
        %v766 = vpop.f32.mrb[0].mxu0
        %v767 = vadd.f32 %v682, %v766
        %v768 = vpop.f32.mrb[0].mxu0
        %v769 = vpop.f32.mrb[0].mxu0
        %v770 = vadd.f32 %v682, %v769
        %v771 = vpop.f32.mrb[0].mxu0
        %772 = vmatprep.mubr.bf16.mxu0 0
        %773 = vmatmul.mubr.bf16.gmra.mrb[0].mxu0 %v406
        %v774 = vpop.f32.mrb[0].mxu0
        %v775 = vadd.f32 %v682, %v774
        %v776 = vpop.f32.mrb[0].mxu0
        %v777 = vpop.f32.mrb[0].mxu0
        %v778 = vadd.f32 %v682, %v777
        %v779 = vpop.f32.mrb[0].mxu0
        %780 = vdwg.mxu0
        %v781 = vmax.f32 %v767, 0.0
        %v782 = vmax.f32 %v770, 0.0
        %v783 = vmax.f32 %v775, 0.0
        %v784 = vmax.f32 %v778, 0.0
        %v785 = vpack.c.bf16 %v782, %v781
        %v786 = vpack.c.bf16 %v784, %v783
        %v787 = vld [vmem:[#allocation11 + $0x40] sm:$0xf]
        %v788 = vld [vmem:[#allocation11 + $0x44] sm:$0xf]
        %v789 = vld [vmem:[#allocation11 + $0x48] sm:$0xf]
        %v790 = vld [vmem:[#allocation11 + $0x4c] sm:$0xf]
        %v791 = vld [vmem:[#allocation11 + $0x50] sm:$0xf]
        %v792 = vld [vmem:[#allocation11 + $0x54] sm:$0xf]
        %v793 = vld [vmem:[#allocation11 + $0x58] sm:$0xf]
        %v794 = vld [vmem:[#allocation11 + $0x5c] sm:$0xf]
        %v795 = vld [vmem:[#allocation11 + $0x60] sm:$0xf]
        %v796 = vld [vmem:[#allocation11 + $0x64] sm:$0xf]
        %v797 = vld [vmem:[#allocation11 + $0x68] sm:$0xf]
        %v798 = vld [vmem:[#allocation11 + $0x6c] sm:$0xf]
        %v799 = vld [vmem:[#allocation11 + $0x70] sm:$0xf]
        %v800 = vld [vmem:[#allocation11 + $0x74] sm:$0xf]
        %v801 = vld [vmem:[#allocation11 + $0x78] sm:$0xf]
        %v802 = vld [vmem:[#allocation11 + $0x7c] sm:$0xf]
        %v819 = vunpack.c.l.b16 %v787
        %v820 = vunpack.c.l.b16 %v788
        %v821 = vunpack.c.l.b16 %v789
        %v822 = vunpack.c.l.b16 %v790
        %v823 = vunpack.c.l.b16 %v791
        %v824 = vunpack.c.l.b16 %v792
        %v825 = vunpack.c.l.b16 %v793
        %v826 = vunpack.c.l.b16 %v794
        %v827 = vunpack.c.l.b16 %v795
        %v828 = vunpack.c.l.b16 %v796
        %v829 = vunpack.c.l.b16 %v797
        %v830 = vunpack.c.l.b16 %v798
        %v831 = vunpack.c.l.b16 %v799
        %v832 = vunpack.c.l.b16 %v800
        %v833 = vunpack.c.l.b16 %v801
        %v834 = vunpack.c.l.b16 %v802
        %v835 = vpack.c.b16 %v820, %v819
        %v836 = vpack.c.b16 %v822, %v821
        %v837 = vpack.c.b16 %v824, %v823
        %v838 = vpack.c.b16 %v826, %v825
        %v839 = vpack.c.b16 %v828, %v827
        %v840 = vpack.c.b16 %v830, %v829
        %v841 = vpack.c.b16 %v832, %v831
        %v842 = vpack.c.b16 %v834, %v833
        %851 = vmatprep.subr.bf16.mxu0 0
        %852 = vmatpush1.bf16.msra.mxu0 %v835
        %853 = vmatprep.subr.bf16.mxu0 0
        %854 = vmatpush1.bf16.msra.mxu0 %v836
        %855 = vmatprep.subr.bf16.mxu0 0
        %856 = vmatpush1.bf16.msra.mxu0 %v837
        %857 = vmatprep.subr.bf16.mxu0 0
        %858 = vmatpush1.bf16.msra.mxu0 %v838
        %859 = vmatprep.subr.bf16.mxu0 0
        %860 = vmatpush1.bf16.msra.mxu0 %v839
        %861 = vmatprep.subr.bf16.mxu0 0
        %862 = vmatpush1.bf16.msra.mxu0 %v840
        %863 = vmatprep.subr.bf16.mxu0 0
        %864 = vmatpush1.bf16.msra.mxu0 %v841
        %865 = vmatprep.subr.bf16.mxu0 0
        %866 = vmatpush1.bf16.msra.mxu0 %v842
        %867 = vmatprep.subr.bf16.mxu0 0
        %868 = vmatpush1.bf16.msra.mxu0 0
        %869 = vmatprep.subr.bf16.mxu0 0
        %870 = vmatpush1.bf16.msra.mxu0 0
        %871 = vmatprep.subr.bf16.mxu0 0
        %872 = vmatpush1.bf16.msra.mxu0 0
        %873 = vmatprep.subr.bf16.mxu0 0
        %874 = vmatpush1.bf16.msra.mxu0 0
        %875 = vmatprep.subr.bf16.mxu0 0
        %876 = vmatpush1.bf16.msra.mxu0 0
        %877 = vmatprep.subr.bf16.mxu0 0
        %878 = vmatpush1.bf16.msra.mxu0 0
        %879 = vmatprep.subr.bf16.mxu0 0
        %880 = vmatpush1.bf16.msra.mxu0 0
        %881 = vmatprep.subr.bf16.mxu0 0
        %882 = vmatpush1.bf16.msra.mxu0 0
        %883 = vmatprep.mubr.bf16.mxu0 0
        %884 = vmatmul.mubr.bf16.gmra.mrb[0].mxu0 %v785
        %v885 = vpop.f32.mrb[0].mxu0
        %v886 = vadd.f32 0.0, %v885
        %v887 = vpop.f32.mrb[0].mxu0
        %v888 = vpop.f32.mrb[0].mxu0
        %v889 = vadd.f32 0.0, %v888
        %v890 = vpop.f32.mrb[0].mxu0
        %891 = vmatprep.mubr.bf16.mxu0 0
        %892 = vmatmul.mubr.bf16.gmra.mrb[0].mxu0 %v786
        %v893 = vpop.f32.mrb[0].mxu0
        %v894 = vadd.f32 0.0, %v893
        %v895 = vpop.f32.mrb[0].mxu0
        %v896 = vpop.f32.mrb[0].mxu0
        %v897 = vadd.f32 0.0, %v896
        %v898 = vpop.f32.mrb[0].mxu0
        %899 = vdwg.mxu0
        %v900 = vadd.f32 %v657, %v886
        %v901 = vadd.f32 %v658, %v889
        %v902 = vadd.f32 %v659, %v894
        %v903 = vadd.f32 %v660, %v897
        %904 = vst [vmem:[%s375] sm:$0xff] %v900
        %905 = vst [vmem:[%s375 + $0x8] sm:$0xff] %v901
        %906 = vst [vmem:[%s375 + $0x10] sm:$0xff] %v902
        %907 = vst [vmem:[%s375 + $0x18] sm:$0xff] %v903
        %s908 = sand.u32 %s187, 1
        %s909 = scalar_lea.sflag [#allocation4], %s908
        %s910 = sand.u32 %s187, 1
        %s911 = smul.addr %s910, 32
        %s912 = scalar_lea.vmem [#allocation14], %s911
        // Predicated region
        $region77: #{encoder_layer.7} parent=47 // pred_check
          %p913 = pneg %p197
        $region78: #{encoder_layer.7} parent=47 // pred_check_branch
          %915 = sbr.rel (%p913) target = $region80
        $region79: #{encoder_layer.7} parent=47 // pred_region
          %s916 = smul.u32 4, %s27
          %s918 = ssub.s32 512, 512
          %919 = vsyncadd %s909, %s918
          %s920 = smul.addr %s916, 128
          %s921 = scalar_lea.hbm %s7, %s920
          %s922 = sshll.u32 %s912, 4
          %s923 = int_to_ptr.vmem [resolvable:$true] %s922
          %928 = dma.vmem_to_hbm [thread:$0]  %s923, 512, %s921, %s909, 128, 128, 8
        $region80: #{encoder_layer.7} parent=47 // pred_fallthru
          _
      $region48: #{encoder_layer.7} parent=5 // pred_fallthru
        _
      %p929 = scmp.le.s32.totalorder 2, %s22
      // Predicated region
      $region81: #{encoder_layer.7} parent=5 // pred_check
        %p930 = pneg %p929
      $region82: #{encoder_layer.7} parent=5 // pred_check_branch
        %932 = sbr.rel (%p930) target = $region84
      $region83: #{encoder_layer.7} parent=5 // pred_region
        %s933 = ssub.s32 %s22, 2
        // Predicated region
        $region85: #{encoder_layer.7} parent=83 // pred_check
          %p934 = pneg %p203
        $region86: #{encoder_layer.7} parent=83 // pred_check_branch
          %936 = sbr.rel (%p934) target = $region88
        $region87: #{encoder_layer.7} parent=83 // pred_region
          %s937 = sand.u32 %s188, 1
          %s938 = scalar_lea.sflag [#allocation4], %s937
          %s939 = sand.u32 %s188, 1
          %s940 = smul.addr %s939, 32
          %s941 = scalar_lea.vmem [#allocation14], %s940
          %942 = dma.done %s938, 512
        $region88: #{encoder_layer.7} parent=83 // pred_fallthru
          _
      $region84: #{encoder_layer.7} parent=5 // pred_fallthru
        _
    $region6: #{encoder_layer.7} parent=1 // loop_footer
      %s26 = sadd.s32 1, %s22
    $region7: #{encoder_layer.7} parent=1 // loop_footer_branch
      %21 = sbr.rel target = $region3
    $region8: #{encoder_layer.7} parent=1 // loop_exit
      _
    %943 = vsyncpa [#allocation3], 1
    %s944 = scalar_lea.sflag [#allocation3], 1
    %945 = vsyncpa %s944, 1
    %946 = vsyncpa [#allocation6], 1
    %947 = vsyncpa [#allocation9], 1
    %948 = vsyncpa [#allocation12], 1
    %949 = vsyncpa [#allocation4], 1
    %s950 = scalar_lea.sflag [#allocation4], 1
    %951 = vsyncpa %s950, 1

</llo_original>
